<compile_context>
chip_gen: v5e
topology: v5e:2x2
jax: 0.10.0
libtpu: 0.0.40
codegen_flags: <defaults>
</compile_context>

<pallas_src>
import functools

import jax
import jax.numpy as jnp
from jax.experimental import pallas as pl
from jax.experimental.pallas import tpu as pltpu


VMEM_LIMIT = 32 * 1024 * 1024
VMEM_SPEC = pl.BlockSpec(memory_space=pltpu.MemorySpace.VMEM)


def _silu(x):
    return x * jax.nn.sigmoid(x)


def _row_tile(m, target=512):
    """Largest row tile <= target that divides m (multiple of 8 when tiled)."""
    if m <= target:
        return m
    for t in range(target, 7, -1):
        if t % 8 == 0 and m % t == 0:
            return t
    return m


# ----------------------------- Pallas kernels ------------------------------ #

def mm_bn_silu_kernel(a_ref, w_ref, scale_ref, bias_ref, o_ref):
    # (1x1 conv as matmul) -> fused BN -> SiLU   (expand conv, head conv)
    y = jnp.dot(a_ref[...], w_ref[...], preferred_element_type=jnp.float32)
    y = y * scale_ref[...] + bias_ref[...]
    o_ref[...] = _silu(y).astype(o_ref.dtype)


def mm_bn_kernel(a_ref, w_ref, scale_ref, bias_ref, o_ref):
    # (1x1 conv as matmul) -> fused BN (project conv, no residual)
    y = jnp.dot(a_ref[...], w_ref[...], preferred_element_type=jnp.float32)
    o_ref[...] = (y * scale_ref[...] + bias_ref[...]).astype(o_ref.dtype)


def mm_bn_res_kernel(a_ref, w_ref, scale_ref, bias_ref, res_ref, o_ref):
    # (1x1 conv as matmul) -> fused BN -> fused residual add
    y = jnp.dot(a_ref[...], w_ref[...], preferred_element_type=jnp.float32)
    y = y * scale_ref[...] + bias_ref[...] + res_ref[...].astype(jnp.float32)
    o_ref[...] = y.astype(o_ref.dtype)


def mm_bias_kernel(a_ref, w_ref, b_ref, o_ref):
    # final classifier linear
    y = jnp.dot(a_ref[...], w_ref[...], preferred_element_type=jnp.float32)
    o_ref[...] = (y + b_ref[...]).astype(o_ref.dtype)


def stem_kernel(ph_ref, w_ref, scale_ref, bias_ref, o_ref, *, ho, wo):
    # 3x3 stride-2 conv (3->32) on 2x2 phase-decomposed padded input, fused BN+SiLU.
    cout = o_ref.shape[-1]
    cin = ph_ref.shape[-1]
    xs = [ph_ref[p].astype(jnp.float32) for p in range(4)]   # (hh, wh, cin) each
    w4 = w_ref[...]                                          # (3, 3, cin, cout)
    acc = jnp.zeros((ho, wo, cout), jnp.float32)
    for dy in range(3):
        for dx in range(3):
            pi = (dy % 2) * 2 + (dx % 2)
            ay, ax = dy // 2, dx // 2
            xt = xs[pi][ay:ay + ho, ax:ax + wo, :]           # (ho, wo, cin)
            for ci in range(cin):
                acc = acc + xt[:, :, ci:ci + 1] * w4[dy, dx, ci:ci + 1, :]
    y = _silu(acc * scale_ref[...] + bias_ref[...])
    o_ref[0] = y.astype(o_ref.dtype)


def dw_se_kernel(ph_ref, wdw_ref, scale_ref, bias_ref,
                 w1_ref, b1_ref, w2_ref, b2_ref, o_ref, *, k, stride, ho, wo):
    # Depthwise conv (stride handled via phase decomposition) + BN + SiLU
    # + fused squeeze-and-excitation (GAP -> fc1 -> SiLU -> fc2 -> sigmoid scale).
    p_count = ph_ref.shape[0]
    c = o_ref.shape[-1]
    xs = [ph_ref[p].astype(jnp.float32) for p in range(p_count)]  # (hh, wh, c)
    w = wdw_ref[...]                                              # (k, k, c)
    acc = jnp.zeros((ho, wo, c), jnp.float32)
    for dy in range(k):
        for dx in range(k):
            if stride == 1:
                pi, ay, ax = 0, dy, dx
            else:
                pi = (dy % 2) * 2 + (dx % 2)
                ay, ax = dy // 2, dx // 2
            xt = xs[pi][ay:ay + ho, ax:ax + wo, :]
            acc = acc + xt * w[dy:dy + 1, dx:dx + 1, :]
    y = _silu(acc * scale_ref[...] + bias_ref[...])               # (ho, wo, c)

    # Squeeze-and-excitation (entirely in VMEM/registers, no HBM round trip).
    g = jnp.sum(jnp.sum(y, axis=0, keepdims=True), axis=1, keepdims=True)
    g = (g * (1.0 / float(ho * wo))).reshape(1, c)
    s = _silu(jnp.dot(g, w1_ref[...], preferred_element_type=jnp.float32)
              + b1_ref[...])
    s = jnp.dot(s, w2_ref[...], preferred_element_type=jnp.float32) + b2_ref[...]
    gate = jax.nn.sigmoid(s)                                      # (1, c)
    o_ref[0] = (y * gate).astype(o_ref.dtype)


def gap_kernel(x_ref, o_ref):
    # Global average pool over H, W (final feature pooling; spatial is tiny here).
    n, h, w, c = x_ref.shape
    x = x_ref[...].astype(jnp.float32)
    s = jnp.sum(jnp.sum(x, axis=1, keepdims=True), axis=2, keepdims=True)
    o_ref[...] = (s * (1.0 / float(h * w))).reshape(n, c)


# ------------------------------- call helpers ------------------------------ #

def _mm_call(kernel, a, w, extras, out_dtype, tm_target=512):
    """Row-tiled fused matmul: a (M, Cin) @ w (Cin, Cout) + epilogue operands."""
    m, cin = a.shape
    cout = w.shape[1]
    tm = _row_tile(m, tm_target)
    in_specs = [pl.BlockSpec((tm, cin), lambda i: (i, 0)),
                pl.BlockSpec((cin, cout), lambda i: (0, 0))]
    args = [a, w]
    for e in extras:
        if e.shape[0] == 1:   # broadcast row (BN scale / bias / fc bias)
            in_specs.append(pl.BlockSpec((1, e.shape[1]), lambda i: (0, 0)))
        else:                 # per-row operand (residual)
            in_specs.append(pl.BlockSpec((tm, e.shape[1]), lambda i: (i, 0)))
        args.append(e)
    return pl.pallas_call(
        kernel,
        out_shape=jax.ShapeDtypeStruct((m, cout), out_dtype),
        grid=(m // tm,),
        in_specs=in_specs,
        out_specs=pl.BlockSpec((tm, cout), lambda i: (i, 0)),
        compiler_params=pltpu.CompilerParams(
            dimension_semantics=("parallel",),
            vmem_limit_bytes=VMEM_LIMIT),
    )(*args)


def conv1x1_bn(x4d, w, scale, bias, act, residual=None):
    n, h, wd, c = x4d.shape
    cout = w.shape[1]
    a = x4d.reshape(n * h * wd, c)
    if residual is not None:
        r = residual.reshape(n * h * wd, cout)
        out = _mm_call(mm_bn_res_kernel, a, w, [scale, bias, r], jnp.bfloat16)
    else:
        kern = mm_bn_silu_kernel if act else mm_bn_kernel
        out = _mm_call(kern, a, w, [scale, bias], jnp.bfloat16)
    return out.reshape(n, h, wd, cout)


def _phases(xp, stride):
    """Phase-decompose a padded NHWC tensor for stride-2 convs (glue only)."""
    if stride == 1:
        return xp, 1
    n = xp.shape[0]
    ph = jnp.stack([xp[:, by::2, bx::2, :] for by in range(2) for bx in range(2)],
                   axis=1)                                  # (n, 4, hh, wh, c)
    _, p_count, hh, wh_, c = ph.shape
    return ph.reshape(n * p_count, hh, wh_, c), p_count


def stem_conv(x, w, scale, bias):
    n, h, wd, cin = x.shape
    cout = w.shape[-1]
    ho, wo = h // 2, wd // 2
    xp = jnp.pad(x, ((0, 0), (1, 1), (1, 1), (0, 0)))
    ph, p_count = _phases(xp, 2)
    hh, wh_ = ph.shape[1], ph.shape[2]
    kern = functools.partial(stem_kernel, ho=ho, wo=wo)
    return pl.pallas_call(
        kern,
        out_shape=jax.ShapeDtypeStruct((n, ho, wo, cout), jnp.bfloat16),
        grid=(n,),
        in_specs=[pl.BlockSpec((p_count, hh, wh_, cin), lambda i: (i, 0, 0, 0)),
                  pl.BlockSpec(w.shape, lambda i: (0, 0, 0, 0)),
                  pl.BlockSpec((1, cout), lambda i: (0, 0)),
                  pl.BlockSpec((1, cout), lambda i: (0, 0))],
        out_specs=pl.BlockSpec((1, ho, wo, cout), lambda i: (i, 0, 0, 0)),
        compiler_params=pltpu.CompilerParams(
            dimension_semantics=("parallel",),
            vmem_limit_bytes=VMEM_LIMIT),
    )(ph, w, scale, bias)


def dwconv_se(x4d, wdw, scale, bias, w1, b1, w2, b2, stride):
    n, h, wd, c = x4d.shape
    k = wdw.shape[0]
    p = k // 2
    ho, wo = h // stride, wd // stride
    xp = jnp.pad(x4d, ((0, 0), (p, p), (p, p), (0, 0)))
    ph, p_count = _phases(xp, stride)
    hh, wh_ = ph.shape[1], ph.shape[2]
    kern = functools.partial(dw_se_kernel, k=k, stride=stride, ho=ho, wo=wo)
    return pl.pallas_call(
        kern,
        out_shape=jax.ShapeDtypeStruct((n, ho, wo, c), jnp.bfloat16),
        grid=(n,),
        in_specs=[pl.BlockSpec((p_count, hh, wh_, c), lambda i: (i, 0, 0, 0)),
                  pl.BlockSpec(wdw.shape, lambda i: (0, 0, 0)),
                  pl.BlockSpec((1, c), lambda i: (0, 0)),
                  pl.BlockSpec((1, c), lambda i: (0, 0)),
                  pl.BlockSpec(w1.shape, lambda i: (0, 0)),
                  pl.BlockSpec((1, w1.shape[1]), lambda i: (0, 0)),
                  pl.BlockSpec(w2.shape, lambda i: (0, 0)),
                  pl.BlockSpec((1, c), lambda i: (0, 0))],
        out_specs=pl.BlockSpec((1, ho, wo, c), lambda i: (i, 0, 0, 0)),
        compiler_params=pltpu.CompilerParams(
            dimension_semantics=("parallel",),
            vmem_limit_bytes=VMEM_LIMIT),
    )(ph, wdw, scale, bias, w1, b1, w2, b2)


def gap(x4d):
    n, h, w, c = x4d.shape
    return pl.pallas_call(
        gap_kernel,
        out_shape=jax.ShapeDtypeStruct((n, c), jnp.float32),
        in_specs=[VMEM_SPEC],
        out_specs=VMEM_SPEC,
        compiler_params=pltpu.CompilerParams(vmem_limit_bytes=VMEM_LIMIT),
    )(x4d)


# ------------------------------ parameters --------------------------------- #

# EfficientNet-B0 stage config: (expand_ratio, kernel, stride, in_ch, out_ch, repeats)
B0_BLOCKS = [
    (1, 3, 1, 32, 16, 1),
    (6, 3, 2, 16, 24, 2),
    (6, 5, 2, 24, 40, 2),
    (6, 3, 2, 40, 80, 3),
    (6, 5, 1, 80, 112, 3),
    (6, 5, 2, 112, 192, 4),
    (6, 3, 1, 192, 320, 1),
]
HEAD_DIM = 1280  # k = model.classifier.fc.in_features


class ParamGen:
    def __init__(self, seed):
        self.key = jax.random.PRNGKey(seed)

    def normal(self, shape, scale, dtype=jnp.float32):
        self.key, sub = jax.random.split(self.key)
        return (scale * jax.random.normal(sub, shape)).astype(dtype)


def init_params(output_dim, seed=0):
    pg = ParamGen(seed)
    params = {}
    # stem: 3x3 stride-2 conv (3 -> 32), BN folded into (scale, bias)
    params['stem_w'] = pg.normal((3, 3, 3, 32), 1.0 / (27 ** 0.5))
    params['stem_bn'] = (pg.normal((1, 32), 0.05) + 1.0, pg.normal((1, 32), 0.05))

    blocks = []
    for (e, k, s, cin, cout, r) in B0_BLOCKS:
        for i in range(r):
            bc_in = cin if i == 0 else cout
            stride = s if i == 0 else 1
            cexp = bc_in * e
            se_dim = max(1, bc_in // 4)
            blk = {'expand': None}
            if e != 1:
                blk['expand'] = (
                    pg.normal((bc_in, cexp), 1.0 / (bc_in ** 0.5), jnp.bfloat16),
                    pg.normal((1, cexp), 0.05) + 1.0,
                    pg.normal((1, cexp), 0.05))
            blk['dw'] = (pg.normal((k, k, cexp), 1.0 / k),
                         pg.normal((1, cexp), 0.05) + 1.0,
                         pg.normal((1, cexp), 0.05))
            blk['se'] = (pg.normal((cexp, se_dim), 1.0 / (cexp ** 0.5)),
                         pg.normal((1, se_dim), 0.05),
                         pg.normal((se_dim, cexp), 1.0 / (se_dim ** 0.5)),
                         pg.normal((1, cexp), 0.05))
            blk['project'] = (
                pg.normal((cexp, cout), 1.0 / (cexp ** 0.5), jnp.bfloat16),
                pg.normal((1, cout), 0.05) + 1.0,
                pg.normal((1, cout), 0.05))
            blk['stride'] = stride
            blk['residual'] = (stride == 1 and bc_in == cout)
            blocks.append(blk)
    params['blocks'] = blocks

    # head: 1x1 conv 320 -> 1280, BN, SiLU
    params['head'] = (pg.normal((320, HEAD_DIM), 1.0 / (320 ** 0.5), jnp.bfloat16),
                      pg.normal((1, HEAD_DIM), 0.05) + 1.0,
                      pg.normal((1, HEAD_DIM), 0.05))
    # new trainable fc head: Linear(1280, output_dim)
    params['fc_w'] = pg.normal((HEAD_DIM, output_dim), 1.0 / (HEAD_DIM ** 0.5))
    params['fc_b'] = pg.normal((1, output_dim), 0.05)
    return params


# -------------------------------- forward ---------------------------------- #

def efficientnet_forward(params, x_nchw):
    x = jnp.transpose(x_nchw, (0, 2, 3, 1)).astype(jnp.float32)  # NCHW -> NHWC

    # stem conv + BN + SiLU (Pallas kernel, per-sample grid)
    sscale, sbias = params['stem_bn']
    x = stem_conv(x, params['stem_w'], sscale, sbias)            # bf16 activations

    # MBConv blocks: expand -> (depthwise + BN + SiLU + SE) -> project (+residual)
    for blk in params['blocks']:
        inp = x
        if blk['expand'] is not None:
            we, se_, be = blk['expand']
            x = conv1x1_bn(x, we, se_, be, act=True)
        wdw, sd_, bd_ = blk['dw']
        w1, b1, w2, b2 = blk['se']
        x = dwconv_se(x, wdw, sd_, bd_, w1, b1, w2, b2, blk['stride'])
        wp, sp, bp = blk['project']
        res = inp if blk['residual'] else None
        x = conv1x1_bn(x, wp, sp, bp, act=False, residual=res)

    # head conv + BN + SiLU, global average pool -> (N, 1280) features
    wh, sh, bh = params['head']
    x = conv1x1_bn(x, wh, sh, bh, act=True)
    feat = gap(x)                                                # (N, 1280) f32

    # classifier.fc is Identity; new fc: Linear(1280, output_dim)
    logits = _mm_call(mm_bias_kernel, feat, params['fc_w'],
                      [params['fc_b']], jnp.float32)
    return logits


def predict(params, x_nchw):
    return jnp.argmax(efficientnet_forward(params, x_nchw), axis=1)


if __name__ == "__main__":
    output_dim = 100  # CIFAR-100 fine-tuning head
    params = init_params(output_dim, seed=0)

    key = jax.random.PRNGKey(0)
    x = jax.random.normal(key, (2, 3, 32, 32), dtype=jnp.float32)  # NCHW like PyTorch

    out = jax.block_until_ready(efficientnet_forward(params, x))
    assert out.shape == (2, output_dim)
    assert bool(jnp.all(jnp.isfinite(out)))

    preds = jax.block_until_ready(predict(params, x))
    assert preds.shape == (2,)

    print("KERNEL_OK")
</pallas_src>

<mosaic_0001>
module attributes {stable_mosaic.version = 11 : i64} {
  func.func @stem_kernel(%arg0: i32, %arg1: memref<4x17x17x3xf32, #tpu.memory_space<vmem>>, %arg2: memref<3x3x3x32xf32, #tpu.memory_space<vmem>>, %arg3: memref<1x32xf32, #tpu.memory_space<vmem>>, %arg4: memref<1x32xf32, #tpu.memory_space<vmem>>, %arg5: memref<1x16x16x32xbf16, #tpu.memory_space<vmem>>) attributes {dimension_semantics = [#tpu.dimension_semantics<parallel>], iteration_bounds = array<i64: 2>, scalar_prefetch = 0 : i64, scratch_operands = 0 : i64, tpu.core_type = #tpu.core_type<tc>, window_params = [{transform_indices = @transform_0, window_bounds = array<i64: 4, 17, 17, 3>}, {pipeline_mode = #tpu.pipeline_mode<synchronous>, transform_indices = @transform_1, window_bounds = array<i64: 3, 3, 3, 32>}, {pipeline_mode = #tpu.pipeline_mode<synchronous>, transform_indices = @transform_2, window_bounds = array<i64: 1, 32>}, {pipeline_mode = #tpu.pipeline_mode<synchronous>, transform_indices = @transform_3, window_bounds = array<i64: 1, 32>}, {transform_indices = @transform_4, window_bounds = array<i64: 1, 16, 16, 32>}]} {
    %c0 = arith.constant 0 : index
    %c0_0 = arith.constant 0 : index
    %c0_1 = arith.constant 0 : index
    %c0_2 = arith.constant 0 : index
    %0 = vector.load %arg1[%c0, %c0_0, %c0_1, %c0_2] : memref<4x17x17x3xf32, #tpu.memory_space<vmem>>, vector<1x17x17x3xf32>
    %1 = vector.shape_cast %0 : vector<1x17x17x3xf32> to vector<17x17x3xf32>
    %c1 = arith.constant 1 : index
    %c0_3 = arith.constant 0 : index
    %c0_4 = arith.constant 0 : index
    %c0_5 = arith.constant 0 : index
    %2 = vector.load %arg1[%c1, %c0_3, %c0_4, %c0_5] : memref<4x17x17x3xf32, #tpu.memory_space<vmem>>, vector<1x17x17x3xf32>
    %3 = vector.shape_cast %2 : vector<1x17x17x3xf32> to vector<17x17x3xf32>
    %c2 = arith.constant 2 : index
    %c0_6 = arith.constant 0 : index
    %c0_7 = arith.constant 0 : index
    %c0_8 = arith.constant 0 : index
    %4 = vector.load %arg1[%c2, %c0_6, %c0_7, %c0_8] : memref<4x17x17x3xf32, #tpu.memory_space<vmem>>, vector<1x17x17x3xf32>
    %5 = vector.shape_cast %4 : vector<1x17x17x3xf32> to vector<17x17x3xf32>
    %c3 = arith.constant 3 : index
    %c0_9 = arith.constant 0 : index
    %c0_10 = arith.constant 0 : index
    %c0_11 = arith.constant 0 : index
    %6 = vector.load %arg1[%c3, %c0_9, %c0_10, %c0_11] : memref<4x17x17x3xf32, #tpu.memory_space<vmem>>, vector<1x17x17x3xf32>
    %7 = vector.shape_cast %6 : vector<1x17x17x3xf32> to vector<17x17x3xf32>
    %c0_12 = arith.constant 0 : index
    %c0_13 = arith.constant 0 : index
    %c0_14 = arith.constant 0 : index
    %c0_15 = arith.constant 0 : index
    %8 = vector.load %arg2[%c0_12, %c0_13, %c0_14, %c0_15] : memref<3x3x3x32xf32, #tpu.memory_space<vmem>>, vector<3x3x3x32xf32>
    %cst = arith.constant 0.000000e+00 : f32
    %9 = vector.broadcast %cst : f32 to vector<16x16x32xf32>
    %10 = vector.extract_strided_slice %1 {offsets = [0, 0, 0], sizes = [16, 16, 3], strides = [1, 1, 1]} : vector<17x17x3xf32> to vector<16x16x3xf32>
    %11 = vector.extract_strided_slice %10 {offsets = [0, 0, 0], sizes = [16, 16, 1], strides = [1, 1, 1]} : vector<16x16x3xf32> to vector<16x16x1xf32>
    %12 = vector.extract_strided_slice %8 {offsets = [0, 0, 0, 0], sizes = [1, 1, 1, 32], strides = [1, 1, 1, 1]} : vector<3x3x3x32xf32> to vector<1x1x1x32xf32>
    %13 = vector.shape_cast %12 : vector<1x1x1x32xf32> to vector<1x32xf32>
    %14 = vector.shape_cast %13 : vector<1x32xf32> to vector<1x1x32xf32>
    %15 = vector.broadcast %11 : vector<16x16x1xf32> to vector<16x16x32xf32>
    %16 = vector.broadcast %14 : vector<1x1x32xf32> to vector<16x16x32xf32>
    %17 = arith.mulf %15, %16 : vector<16x16x32xf32>
    %18 = arith.addf %9, %17 : vector<16x16x32xf32>
    %19 = vector.extract_strided_slice %10 {offsets = [0, 0, 1], sizes = [16, 16, 1], strides = [1, 1, 1]} : vector<16x16x3xf32> to vector<16x16x1xf32>
    %20 = vector.extract_strided_slice %8 {offsets = [0, 0, 1, 0], sizes = [1, 1, 1, 32], strides = [1, 1, 1, 1]} : vector<3x3x3x32xf32> to vector<1x1x1x32xf32>
    %21 = vector.shape_cast %20 : vector<1x1x1x32xf32> to vector<1x32xf32>
    %22 = vector.shape_cast %21 : vector<1x32xf32> to vector<1x1x32xf32>
    %23 = vector.broadcast %19 : vector<16x16x1xf32> to vector<16x16x32xf32>
    %24 = vector.broadcast %22 : vector<1x1x32xf32> to vector<16x16x32xf32>
    %25 = arith.mulf %23, %24 : vector<16x16x32xf32>
    %26 = arith.addf %18, %25 : vector<16x16x32xf32>
    %27 = vector.extract_strided_slice %10 {offsets = [0, 0, 2], sizes = [16, 16, 1], strides = [1, 1, 1]} : vector<16x16x3xf32> to vector<16x16x1xf32>
    %28 = vector.extract_strided_slice %8 {offsets = [0, 0, 2, 0], sizes = [1, 1, 1, 32], strides = [1, 1, 1, 1]} : vector<3x3x3x32xf32> to vector<1x1x1x32xf32>
    %29 = vector.shape_cast %28 : vector<1x1x1x32xf32> to vector<1x32xf32>
    %30 = vector.shape_cast %29 : vector<1x32xf32> to vector<1x1x32xf32>
    %31 = vector.broadcast %27 : vector<16x16x1xf32> to vector<16x16x32xf32>
    %32 = vector.broadcast %30 : vector<1x1x32xf32> to vector<16x16x32xf32>
    %33 = arith.mulf %31, %32 : vector<16x16x32xf32>
    %34 = arith.addf %26, %33 : vector<16x16x32xf32>
    %35 = vector.extract_strided_slice %3 {offsets = [0, 0, 0], sizes = [16, 16, 3], strides = [1, 1, 1]} : vector<17x17x3xf32> to vector<16x16x3xf32>
    %36 = vector.extract_strided_slice %35 {offsets = [0, 0, 0], sizes = [16, 16, 1], strides = [1, 1, 1]} : vector<16x16x3xf32> to vector<16x16x1xf32>
    %37 = vector.extract_strided_slice %8 {offsets = [0, 1, 0, 0], sizes = [1, 1, 1, 32], strides = [1, 1, 1, 1]} : vector<3x3x3x32xf32> to vector<1x1x1x32xf32>
    %38 = vector.shape_cast %37 : vector<1x1x1x32xf32> to vector<1x32xf32>
    %39 = vector.shape_cast %38 : vector<1x32xf32> to vector<1x1x32xf32>
    %40 = vector.broadcast %36 : vector<16x16x1xf32> to vector<16x16x32xf32>
    %41 = vector.broadcast %39 : vector<1x1x32xf32> to vector<16x16x32xf32>
    %42 = arith.mulf %40, %41 : vector<16x16x32xf32>
    %43 = arith.addf %34, %42 : vector<16x16x32xf32>
    %44 = vector.extract_strided_slice %35 {offsets = [0, 0, 1], sizes = [16, 16, 1], strides = [1, 1, 1]} : vector<16x16x3xf32> to vector<16x16x1xf32>
    %45 = vector.extract_strided_slice %8 {offsets = [0, 1, 1, 0], sizes = [1, 1, 1, 32], strides = [1, 1, 1, 1]} : vector<3x3x3x32xf32> to vector<1x1x1x32xf32>
    %46 = vector.shape_cast %45 : vector<1x1x1x32xf32> to vector<1x32xf32>
    %47 = vector.shape_cast %46 : vector<1x32xf32> to vector<1x1x32xf32>
    %48 = vector.broadcast %44 : vector<16x16x1xf32> to vector<16x16x32xf32>
    %49 = vector.broadcast %47 : vector<1x1x32xf32> to vector<16x16x32xf32>
    %50 = arith.mulf %48, %49 : vector<16x16x32xf32>
    %51 = arith.addf %43, %50 : vector<16x16x32xf32>
    %52 = vector.extract_strided_slice %35 {offsets = [0, 0, 2], sizes = [16, 16, 1], strides = [1, 1, 1]} : vector<16x16x3xf32> to vector<16x16x1xf32>
    %53 = vector.extract_strided_slice %8 {offsets = [0, 1, 2, 0], sizes = [1, 1, 1, 32], strides = [1, 1, 1, 1]} : vector<3x3x3x32xf32> to vector<1x1x1x32xf32>
    %54 = vector.shape_cast %53 : vector<1x1x1x32xf32> to vector<1x32xf32>
    %55 = vector.shape_cast %54 : vector<1x32xf32> to vector<1x1x32xf32>
    %56 = vector.broadcast %52 : vector<16x16x1xf32> to vector<16x16x32xf32>
    %57 = vector.broadcast %55 : vector<1x1x32xf32> to vector<16x16x32xf32>
    %58 = arith.mulf %56, %57 : vector<16x16x32xf32>
    %59 = arith.addf %51, %58 : vector<16x16x32xf32>
    %60 = vector.extract_strided_slice %1 {offsets = [0, 1, 0], sizes = [16, 16, 3], strides = [1, 1, 1]} : vector<17x17x3xf32> to vector<16x16x3xf32>
    %61 = vector.extract_strided_slice %60 {offsets = [0, 0, 0], sizes = [16, 16, 1], strides = [1, 1, 1]} : vector<16x16x3xf32> to vector<16x16x1xf32>
    %62 = vector.extract_strided_slice %8 {offsets = [0, 2, 0, 0], sizes = [1, 1, 1, 32], strides = [1, 1, 1, 1]} : vector<3x3x3x32xf32> to vector<1x1x1x32xf32>
    %63 = vector.shape_cast %62 : vector<1x1x1x32xf32> to vector<1x32xf32>
    %64 = vector.shape_cast %63 : vector<1x32xf32> to vector<1x1x32xf32>
    %65 = vector.broadcast %61 : vector<16x16x1xf32> to vector<16x16x32xf32>
    %66 = vector.broadcast %64 : vector<1x1x32xf32> to vector<16x16x32xf32>
    %67 = arith.mulf %65, %66 : vector<16x16x32xf32>
    %68 = arith.addf %59, %67 : vector<16x16x32xf32>
    %69 = vector.extract_strided_slice %60 {offsets = [0, 0, 1], sizes = [16, 16, 1], strides = [1, 1, 1]} : vector<16x16x3xf32> to vector<16x16x1xf32>
    %70 = vector.extract_strided_slice %8 {offsets = [0, 2, 1, 0], sizes = [1, 1, 1, 32], strides = [1, 1, 1, 1]} : vector<3x3x3x32xf32> to vector<1x1x1x32xf32>
    %71 = vector.shape_cast %70 : vector<1x1x1x32xf32> to vector<1x32xf32>
    %72 = vector.shape_cast %71 : vector<1x32xf32> to vector<1x1x32xf32>
    %73 = vector.broadcast %69 : vector<16x16x1xf32> to vector<16x16x32xf32>
    %74 = vector.broadcast %72 : vector<1x1x32xf32> to vector<16x16x32xf32>
    %75 = arith.mulf %73, %74 : vector<16x16x32xf32>
    %76 = arith.addf %68, %75 : vector<16x16x32xf32>
    %77 = vector.extract_strided_slice %60 {offsets = [0, 0, 2], sizes = [16, 16, 1], strides = [1, 1, 1]} : vector<16x16x3xf32> to vector<16x16x1xf32>
    %78 = vector.extract_strided_slice %8 {offsets = [0, 2, 2, 0], sizes = [1, 1, 1, 32], strides = [1, 1, 1, 1]} : vector<3x3x3x32xf32> to vector<1x1x1x32xf32>
    %79 = vector.shape_cast %78 : vector<1x1x1x32xf32> to vector<1x32xf32>
    %80 = vector.shape_cast %79 : vector<1x32xf32> to vector<1x1x32xf32>
    %81 = vector.broadcast %77 : vector<16x16x1xf32> to vector<16x16x32xf32>
    %82 = vector.broadcast %80 : vector<1x1x32xf32> to vector<16x16x32xf32>
    %83 = arith.mulf %81, %82 : vector<16x16x32xf32>
    %84 = arith.addf %76, %83 : vector<16x16x32xf32>
    %85 = vector.extract_strided_slice %5 {offsets = [0, 0, 0], sizes = [16, 16, 3], strides = [1, 1, 1]} : vector<17x17x3xf32> to vector<16x16x3xf32>
    %86 = vector.extract_strided_slice %85 {offsets = [0, 0, 0], sizes = [16, 16, 1], strides = [1, 1, 1]} : vector<16x16x3xf32> to vector<16x16x1xf32>
    %87 = vector.extract_strided_slice %8 {offsets = [1, 0, 0, 0], sizes = [1, 1, 1, 32], strides = [1, 1, 1, 1]} : vector<3x3x3x32xf32> to vector<1x1x1x32xf32>
    %88 = vector.shape_cast %87 : vector<1x1x1x32xf32> to vector<1x32xf32>
    %89 = vector.shape_cast %88 : vector<1x32xf32> to vector<1x1x32xf32>
    %90 = vector.broadcast %86 : vector<16x16x1xf32> to vector<16x16x32xf32>
    %91 = vector.broadcast %89 : vector<1x1x32xf32> to vector<16x16x32xf32>
    %92 = arith.mulf %90, %91 : vector<16x16x32xf32>
    %93 = arith.addf %84, %92 : vector<16x16x32xf32>
    %94 = vector.extract_strided_slice %85 {offsets = [0, 0, 1], sizes = [16, 16, 1], strides = [1, 1, 1]} : vector<16x16x3xf32> to vector<16x16x1xf32>
    %95 = vector.extract_strided_slice %8 {offsets = [1, 0, 1, 0], sizes = [1, 1, 1, 32], strides = [1, 1, 1, 1]} : vector<3x3x3x32xf32> to vector<1x1x1x32xf32>
    %96 = vector.shape_cast %95 : vector<1x1x1x32xf32> to vector<1x32xf32>
    %97 = vector.shape_cast %96 : vector<1x32xf32> to vector<1x1x32xf32>
    %98 = vector.broadcast %94 : vector<16x16x1xf32> to vector<16x16x32xf32>
    %99 = vector.broadcast %97 : vector<1x1x32xf32> to vector<16x16x32xf32>
    %100 = arith.mulf %98, %99 : vector<16x16x32xf32>
    %101 = arith.addf %93, %100 : vector<16x16x32xf32>
    %102 = vector.extract_strided_slice %85 {offsets = [0, 0, 2], sizes = [16, 16, 1], strides = [1, 1, 1]} : vector<16x16x3xf32> to vector<16x16x1xf32>
    %103 = vector.extract_strided_slice %8 {offsets = [1, 0, 2, 0], sizes = [1, 1, 1, 32], strides = [1, 1, 1, 1]} : vector<3x3x3x32xf32> to vector<1x1x1x32xf32>
    %104 = vector.shape_cast %103 : vector<1x1x1x32xf32> to vector<1x32xf32>
    %105 = vector.shape_cast %104 : vector<1x32xf32> to vector<1x1x32xf32>
    %106 = vector.broadcast %102 : vector<16x16x1xf32> to vector<16x16x32xf32>
    %107 = vector.broadcast %105 : vector<1x1x32xf32> to vector<16x16x32xf32>
    %108 = arith.mulf %106, %107 : vector<16x16x32xf32>
    %109 = arith.addf %101, %108 : vector<16x16x32xf32>
    %110 = vector.extract_strided_slice %7 {offsets = [0, 0, 0], sizes = [16, 16, 3], strides = [1, 1, 1]} : vector<17x17x3xf32> to vector<16x16x3xf32>
    %111 = vector.extract_strided_slice %110 {offsets = [0, 0, 0], sizes = [16, 16, 1], strides = [1, 1, 1]} : vector<16x16x3xf32> to vector<16x16x1xf32>
    %112 = vector.extract_strided_slice %8 {offsets = [1, 1, 0, 0], sizes = [1, 1, 1, 32], strides = [1, 1, 1, 1]} : vector<3x3x3x32xf32> to vector<1x1x1x32xf32>
    %113 = vector.shape_cast %112 : vector<1x1x1x32xf32> to vector<1x32xf32>
    %114 = vector.shape_cast %113 : vector<1x32xf32> to vector<1x1x32xf32>
    %115 = vector.broadcast %111 : vector<16x16x1xf32> to vector<16x16x32xf32>
    %116 = vector.broadcast %114 : vector<1x1x32xf32> to vector<16x16x32xf32>
    %117 = arith.mulf %115, %116 : vector<16x16x32xf32>
    %118 = arith.addf %109, %117 : vector<16x16x32xf32>
    %119 = vector.extract_strided_slice %110 {offsets = [0, 0, 1], sizes = [16, 16, 1], strides = [1, 1, 1]} : vector<16x16x3xf32> to vector<16x16x1xf32>
    %120 = vector.extract_strided_slice %8 {offsets = [1, 1, 1, 0], sizes = [1, 1, 1, 32], strides = [1, 1, 1, 1]} : vector<3x3x3x32xf32> to vector<1x1x1x32xf32>
    %121 = vector.shape_cast %120 : vector<1x1x1x32xf32> to vector<1x32xf32>
    %122 = vector.shape_cast %121 : vector<1x32xf32> to vector<1x1x32xf32>
    %123 = vector.broadcast %119 : vector<16x16x1xf32> to vector<16x16x32xf32>
    %124 = vector.broadcast %122 : vector<1x1x32xf32> to vector<16x16x32xf32>
    %125 = arith.mulf %123, %124 : vector<16x16x32xf32>
    %126 = arith.addf %118, %125 : vector<16x16x32xf32>
    %127 = vector.extract_strided_slice %110 {offsets = [0, 0, 2], sizes = [16, 16, 1], strides = [1, 1, 1]} : vector<16x16x3xf32> to vector<16x16x1xf32>
    %128 = vector.extract_strided_slice %8 {offsets = [1, 1, 2, 0], sizes = [1, 1, 1, 32], strides = [1, 1, 1, 1]} : vector<3x3x3x32xf32> to vector<1x1x1x32xf32>
    %129 = vector.shape_cast %128 : vector<1x1x1x32xf32> to vector<1x32xf32>
    %130 = vector.shape_cast %129 : vector<1x32xf32> to vector<1x1x32xf32>
    %131 = vector.broadcast %127 : vector<16x16x1xf32> to vector<16x16x32xf32>
    %132 = vector.broadcast %130 : vector<1x1x32xf32> to vector<16x16x32xf32>
    %133 = arith.mulf %131, %132 : vector<16x16x32xf32>
    %134 = arith.addf %126, %133 : vector<16x16x32xf32>
    %135 = vector.extract_strided_slice %5 {offsets = [0, 1, 0], sizes = [16, 16, 3], strides = [1, 1, 1]} : vector<17x17x3xf32> to vector<16x16x3xf32>
    %136 = vector.extract_strided_slice %135 {offsets = [0, 0, 0], sizes = [16, 16, 1], strides = [1, 1, 1]} : vector<16x16x3xf32> to vector<16x16x1xf32>
    %137 = vector.extract_strided_slice %8 {offsets = [1, 2, 0, 0], sizes = [1, 1, 1, 32], strides = [1, 1, 1, 1]} : vector<3x3x3x32xf32> to vector<1x1x1x32xf32>
    %138 = vector.shape_cast %137 : vector<1x1x1x32xf32> to vector<1x32xf32>
    %139 = vector.shape_cast %138 : vector<1x32xf32> to vector<1x1x32xf32>
    %140 = vector.broadcast %136 : vector<16x16x1xf32> to vector<16x16x32xf32>
    %141 = vector.broadcast %139 : vector<1x1x32xf32> to vector<16x16x32xf32>
    %142 = arith.mulf %140, %141 : vector<16x16x32xf32>
    %143 = arith.addf %134, %142 : vector<16x16x32xf32>
    %144 = vector.extract_strided_slice %135 {offsets = [0, 0, 1], sizes = [16, 16, 1], strides = [1, 1, 1]} : vector<16x16x3xf32> to vector<16x16x1xf32>
    %145 = vector.extract_strided_slice %8 {offsets = [1, 2, 1, 0], sizes = [1, 1, 1, 32], strides = [1, 1, 1, 1]} : vector<3x3x3x32xf32> to vector<1x1x1x32xf32>
    %146 = vector.shape_cast %145 : vector<1x1x1x32xf32> to vector<1x32xf32>
    %147 = vector.shape_cast %146 : vector<1x32xf32> to vector<1x1x32xf32>
    %148 = vector.broadcast %144 : vector<16x16x1xf32> to vector<16x16x32xf32>
    %149 = vector.broadcast %147 : vector<1x1x32xf32> to vector<16x16x32xf32>
    %150 = arith.mulf %148, %149 : vector<16x16x32xf32>
    %151 = arith.addf %143, %150 : vector<16x16x32xf32>
    %152 = vector.extract_strided_slice %135 {offsets = [0, 0, 2], sizes = [16, 16, 1], strides = [1, 1, 1]} : vector<16x16x3xf32> to vector<16x16x1xf32>
    %153 = vector.extract_strided_slice %8 {offsets = [1, 2, 2, 0], sizes = [1, 1, 1, 32], strides = [1, 1, 1, 1]} : vector<3x3x3x32xf32> to vector<1x1x1x32xf32>
    %154 = vector.shape_cast %153 : vector<1x1x1x32xf32> to vector<1x32xf32>
    %155 = vector.shape_cast %154 : vector<1x32xf32> to vector<1x1x32xf32>
    %156 = vector.broadcast %152 : vector<16x16x1xf32> to vector<16x16x32xf32>
    %157 = vector.broadcast %155 : vector<1x1x32xf32> to vector<16x16x32xf32>
    %158 = arith.mulf %156, %157 : vector<16x16x32xf32>
    %159 = arith.addf %151, %158 : vector<16x16x32xf32>
    %160 = vector.extract_strided_slice %1 {offsets = [1, 0, 0], sizes = [16, 16, 3], strides = [1, 1, 1]} : vector<17x17x3xf32> to vector<16x16x3xf32>
    %161 = vector.extract_strided_slice %160 {offsets = [0, 0, 0], sizes = [16, 16, 1], strides = [1, 1, 1]} : vector<16x16x3xf32> to vector<16x16x1xf32>
    %162 = vector.extract_strided_slice %8 {offsets = [2, 0, 0, 0], sizes = [1, 1, 1, 32], strides = [1, 1, 1, 1]} : vector<3x3x3x32xf32> to vector<1x1x1x32xf32>
    %163 = vector.shape_cast %162 : vector<1x1x1x32xf32> to vector<1x32xf32>
    %164 = vector.shape_cast %163 : vector<1x32xf32> to vector<1x1x32xf32>
    %165 = vector.broadcast %161 : vector<16x16x1xf32> to vector<16x16x32xf32>
    %166 = vector.broadcast %164 : vector<1x1x32xf32> to vector<16x16x32xf32>
    %167 = arith.mulf %165, %166 : vector<16x16x32xf32>
    %168 = arith.addf %159, %167 : vector<16x16x32xf32>
    %169 = vector.extract_strided_slice %160 {offsets = [0, 0, 1], sizes = [16, 16, 1], strides = [1, 1, 1]} : vector<16x16x3xf32> to vector<16x16x1xf32>
    %170 = vector.extract_strided_slice %8 {offsets = [2, 0, 1, 0], sizes = [1, 1, 1, 32], strides = [1, 1, 1, 1]} : vector<3x3x3x32xf32> to vector<1x1x1x32xf32>
    %171 = vector.shape_cast %170 : vector<1x1x1x32xf32> to vector<1x32xf32>
    %172 = vector.shape_cast %171 : vector<1x32xf32> to vector<1x1x32xf32>
    %173 = vector.broadcast %169 : vector<16x16x1xf32> to vector<16x16x32xf32>
    %174 = vector.broadcast %172 : vector<1x1x32xf32> to vector<16x16x32xf32>
    %175 = arith.mulf %173, %174 : vector<16x16x32xf32>
    %176 = arith.addf %168, %175 : vector<16x16x32xf32>
    %177 = vector.extract_strided_slice %160 {offsets = [0, 0, 2], sizes = [16, 16, 1], strides = [1, 1, 1]} : vector<16x16x3xf32> to vector<16x16x1xf32>
    %178 = vector.extract_strided_slice %8 {offsets = [2, 0, 2, 0], sizes = [1, 1, 1, 32], strides = [1, 1, 1, 1]} : vector<3x3x3x32xf32> to vector<1x1x1x32xf32>
    %179 = vector.shape_cast %178 : vector<1x1x1x32xf32> to vector<1x32xf32>
    %180 = vector.shape_cast %179 : vector<1x32xf32> to vector<1x1x32xf32>
    %181 = vector.broadcast %177 : vector<16x16x1xf32> to vector<16x16x32xf32>
    %182 = vector.broadcast %180 : vector<1x1x32xf32> to vector<16x16x32xf32>
    %183 = arith.mulf %181, %182 : vector<16x16x32xf32>
    %184 = arith.addf %176, %183 : vector<16x16x32xf32>
    %185 = vector.extract_strided_slice %3 {offsets = [1, 0, 0], sizes = [16, 16, 3], strides = [1, 1, 1]} : vector<17x17x3xf32> to vector<16x16x3xf32>
    %186 = vector.extract_strided_slice %185 {offsets = [0, 0, 0], sizes = [16, 16, 1], strides = [1, 1, 1]} : vector<16x16x3xf32> to vector<16x16x1xf32>
    %187 = vector.extract_strided_slice %8 {offsets = [2, 1, 0, 0], sizes = [1, 1, 1, 32], strides = [1, 1, 1, 1]} : vector<3x3x3x32xf32> to vector<1x1x1x32xf32>
    %188 = vector.shape_cast %187 : vector<1x1x1x32xf32> to vector<1x32xf32>
    %189 = vector.shape_cast %188 : vector<1x32xf32> to vector<1x1x32xf32>
    %190 = vector.broadcast %186 : vector<16x16x1xf32> to vector<16x16x32xf32>
    %191 = vector.broadcast %189 : vector<1x1x32xf32> to vector<16x16x32xf32>
    %192 = arith.mulf %190, %191 : vector<16x16x32xf32>
    %193 = arith.addf %184, %192 : vector<16x16x32xf32>
    %194 = vector.extract_strided_slice %185 {offsets = [0, 0, 1], sizes = [16, 16, 1], strides = [1, 1, 1]} : vector<16x16x3xf32> to vector<16x16x1xf32>
    %195 = vector.extract_strided_slice %8 {offsets = [2, 1, 1, 0], sizes = [1, 1, 1, 32], strides = [1, 1, 1, 1]} : vector<3x3x3x32xf32> to vector<1x1x1x32xf32>
    %196 = vector.shape_cast %195 : vector<1x1x1x32xf32> to vector<1x32xf32>
    %197 = vector.shape_cast %196 : vector<1x32xf32> to vector<1x1x32xf32>
    %198 = vector.broadcast %194 : vector<16x16x1xf32> to vector<16x16x32xf32>
    %199 = vector.broadcast %197 : vector<1x1x32xf32> to vector<16x16x32xf32>
    %200 = arith.mulf %198, %199 : vector<16x16x32xf32>
    %201 = arith.addf %193, %200 : vector<16x16x32xf32>
    %202 = vector.extract_strided_slice %185 {offsets = [0, 0, 2], sizes = [16, 16, 1], strides = [1, 1, 1]} : vector<16x16x3xf32> to vector<16x16x1xf32>
    %203 = vector.extract_strided_slice %8 {offsets = [2, 1, 2, 0], sizes = [1, 1, 1, 32], strides = [1, 1, 1, 1]} : vector<3x3x3x32xf32> to vector<1x1x1x32xf32>
    %204 = vector.shape_cast %203 : vector<1x1x1x32xf32> to vector<1x32xf32>
    %205 = vector.shape_cast %204 : vector<1x32xf32> to vector<1x1x32xf32>
    %206 = vector.broadcast %202 : vector<16x16x1xf32> to vector<16x16x32xf32>
    %207 = vector.broadcast %205 : vector<1x1x32xf32> to vector<16x16x32xf32>
    %208 = arith.mulf %206, %207 : vector<16x16x32xf32>
    %209 = arith.addf %201, %208 : vector<16x16x32xf32>
    %210 = vector.extract_strided_slice %1 {offsets = [1, 1, 0], sizes = [16, 16, 3], strides = [1, 1, 1]} : vector<17x17x3xf32> to vector<16x16x3xf32>
    %211 = vector.extract_strided_slice %210 {offsets = [0, 0, 0], sizes = [16, 16, 1], strides = [1, 1, 1]} : vector<16x16x3xf32> to vector<16x16x1xf32>
    %212 = vector.extract_strided_slice %8 {offsets = [2, 2, 0, 0], sizes = [1, 1, 1, 32], strides = [1, 1, 1, 1]} : vector<3x3x3x32xf32> to vector<1x1x1x32xf32>
    %213 = vector.shape_cast %212 : vector<1x1x1x32xf32> to vector<1x32xf32>
    %214 = vector.shape_cast %213 : vector<1x32xf32> to vector<1x1x32xf32>
    %215 = vector.broadcast %211 : vector<16x16x1xf32> to vector<16x16x32xf32>
    %216 = vector.broadcast %214 : vector<1x1x32xf32> to vector<16x16x32xf32>
    %217 = arith.mulf %215, %216 : vector<16x16x32xf32>
    %218 = arith.addf %209, %217 : vector<16x16x32xf32>
    %219 = vector.extract_strided_slice %210 {offsets = [0, 0, 1], sizes = [16, 16, 1], strides = [1, 1, 1]} : vector<16x16x3xf32> to vector<16x16x1xf32>
    %220 = vector.extract_strided_slice %8 {offsets = [2, 2, 1, 0], sizes = [1, 1, 1, 32], strides = [1, 1, 1, 1]} : vector<3x3x3x32xf32> to vector<1x1x1x32xf32>
    %221 = vector.shape_cast %220 : vector<1x1x1x32xf32> to vector<1x32xf32>
    %222 = vector.shape_cast %221 : vector<1x32xf32> to vector<1x1x32xf32>
    %223 = vector.broadcast %219 : vector<16x16x1xf32> to vector<16x16x32xf32>
    %224 = vector.broadcast %222 : vector<1x1x32xf32> to vector<16x16x32xf32>
    %225 = arith.mulf %223, %224 : vector<16x16x32xf32>
    %226 = arith.addf %218, %225 : vector<16x16x32xf32>
    %227 = vector.extract_strided_slice %210 {offsets = [0, 0, 2], sizes = [16, 16, 1], strides = [1, 1, 1]} : vector<16x16x3xf32> to vector<16x16x1xf32>
    %228 = vector.extract_strided_slice %8 {offsets = [2, 2, 2, 0], sizes = [1, 1, 1, 32], strides = [1, 1, 1, 1]} : vector<3x3x3x32xf32> to vector<1x1x1x32xf32>
    %229 = vector.shape_cast %228 : vector<1x1x1x32xf32> to vector<1x32xf32>
    %230 = vector.shape_cast %229 : vector<1x32xf32> to vector<1x1x32xf32>
    %231 = vector.broadcast %227 : vector<16x16x1xf32> to vector<16x16x32xf32>
    %232 = vector.broadcast %230 : vector<1x1x32xf32> to vector<16x16x32xf32>
    %233 = arith.mulf %231, %232 : vector<16x16x32xf32>
    %234 = arith.addf %226, %233 : vector<16x16x32xf32>
    %c0_16 = arith.constant 0 : index
    %c0_17 = arith.constant 0 : index
    %235 = vector.load %arg3[%c0_16, %c0_17] : memref<1x32xf32, #tpu.memory_space<vmem>>, vector<1x32xf32>
    %236 = vector.shape_cast %235 : vector<1x32xf32> to vector<1x1x32xf32>
    %237 = vector.broadcast %236 : vector<1x1x32xf32> to vector<16x16x32xf32>
    %238 = arith.mulf %234, %237 : vector<16x16x32xf32>
    %c0_18 = arith.constant 0 : index
    %c0_19 = arith.constant 0 : index
    %239 = vector.load %arg4[%c0_18, %c0_19] : memref<1x32xf32, #tpu.memory_space<vmem>>, vector<1x32xf32>
    %240 = vector.shape_cast %239 : vector<1x32xf32> to vector<1x1x32xf32>
    %241 = vector.broadcast %240 : vector<1x1x32xf32> to vector<16x16x32xf32>
    %242 = arith.addf %238, %241 : vector<16x16x32xf32>
    %243 = arith.negf %242 : vector<16x16x32xf32>
    %244 = math.exp %243 : vector<16x16x32xf32>
    %cst_20 = arith.constant 1.000000e+00 : f32
    %245 = vector.broadcast %cst_20 : f32 to vector<16x16x32xf32>
    %246 = arith.addf %245, %244 : vector<16x16x32xf32>
    %247 = arith.divf %245, %246 : vector<16x16x32xf32>
    %248 = arith.mulf %242, %247 : vector<16x16x32xf32>
    %249 = arith.truncf %248 : vector<16x16x32xf32> to vector<16x16x32xbf16>
    %c0_21 = arith.constant 0 : index
    %c0_22 = arith.constant 0 : index
    %c0_23 = arith.constant 0 : index
    %c0_24 = arith.constant 0 : index
    %250 = vector.load %arg5[%c0_21, %c0_22, %c0_23, %c0_24] : memref<1x16x16x32xbf16, #tpu.memory_space<vmem>>, vector<1x16x16x32xbf16>
    %251 = vector.shape_cast %250 : vector<1x16x16x32xbf16> to vector<16x16x32xbf16>
    %252 = vector.shape_cast %249 : vector<16x16x32xbf16> to vector<1x16x16x32xbf16>
    tpu.vector_store %arg5[%c0_21, %c0_22, %c0_23, %c0_24], %252 {strides = array<i32>} : memref<1x16x16x32xbf16, #tpu.memory_space<vmem>>, vector<1x16x16x32xbf16>,
    return
  }
  func.func @transform_0(%arg0: i32) -> (i32, i32, i32, i32) {
    %c0_i32 = arith.constant 0 : i32
    %c0_i32_0 = arith.constant 0 : i32
    %c0_i32_1 = arith.constant 0 : i32
    %c0_i32_2 = arith.constant 0 : i32
    return %arg0, %c0_i32, %c0_i32_0, %c0_i32_1 : i32, i32, i32, i32
  }
  func.func @transform_1(%arg0: i32) -> (i32, i32, i32, i32) {
    %c0_i32 = arith.constant 0 : i32
    %c0_i32_0 = arith.constant 0 : i32
    %c0_i32_1 = arith.constant 0 : i32
    %c0_i32_2 = arith.constant 0 : i32
    %c0_i32_3 = arith.constant 0 : i32
    return %c0_i32, %c0_i32_0, %c0_i32_1, %c0_i32_2 : i32, i32, i32, i32
  }
  func.func @transform_2(%arg0: i32) -> (i32, i32) {
    %c0_i32 = arith.constant 0 : i32
    %c0_i32_0 = arith.constant 0 : i32
    %c0_i32_1 = arith.constant 0 : i32
    return %c0_i32, %c0_i32_0 : i32, i32
  }
  func.func @transform_3(%arg0: i32) -> (i32, i32) {
    %c0_i32 = arith.constant 0 : i32
    %c0_i32_0 = arith.constant 0 : i32
    %c0_i32_1 = arith.constant 0 : i32
    return %c0_i32, %c0_i32_0 : i32, i32
  }
  func.func @transform_4(%arg0: i32) -> (i32, i32, i32, i32) {
    %c0_i32 = arith.constant 0 : i32
    %c0_i32_0 = arith.constant 0 : i32
    %c0_i32_1 = arith.constant 0 : i32
    %c0_i32_2 = arith.constant 0 : i32
    return %arg0, %c0_i32, %c0_i32_0, %c0_i32_1 : i32, i32, i32, i32
  }
}

</mosaic_0001>

<llo_original>
// kernel: tpu_custom_call.1
$region0: #{tpu_custom_call.1}
  #allocation0 [shape = 'u32[]', space=smem, size = 0x4, offset = 0x4, fixed_abs, tag = 'smem constant byte address 0x4 - core index']
  #allocation1 [shape = 'u32[72,128]{1,0:T(1,128)}', space=vmem, size = 0x9000, scoped, tag = 'internal scratch']
  %s0 = inlined_call_operand.vmem [shape: f32[8,17,17,3], index: 0, kind: input, shape index: {}]
  %s1 = inlined_call_operand.vmem [shape: f32[3,3,3,32], index: 1, kind: input, shape index: {}]
  %s2 = inlined_call_operand.vmem [shape: f32[1,32], index: 2, kind: input, shape index: {}]
  %s3 = inlined_call_operand.vmem [shape: f32[1,32], index: 3, kind: input, shape index: {}]
  %s4 = inlined_call_operand.hbm [shape: bf16[2,16,16,32], index: 4, kind: output, shape index: {}]
  %s5 = sld [smem:[#allocation0]]
  $region49: #{tpu_custom_call.1} parent=0
    _
  %s7 = ssub.s32 1, %s5
  %s8 = scalar_select 0, %s7, %s5
  $region1: #{tpu_custom_call.1} parent=0
    #allocation2 [shape = 'u8[131072]{0}', space=vmem, size = 0x20000, scoped, tag = 'output window, operand 0']
    #allocation3 [shape = 's32[2]{0}', space=sflag, size = 0x8, scoped, tag = 'scoped memory for tpu_custom_call.1']
    %9 = vsyncpa [#allocation3], 0
    %s10 = scalar_lea.sflag [#allocation3], 1
    %11 = vsyncpa %s10, 0
    loop: start=0, step=1, limit=4
    $region2: #{tpu_custom_call.1} parent=1 // loop_pre_header
      _
    $region3: #{tpu_custom_call.1} parent=1 // loop_header
      %s13 = sphi 0, %s17
      %p14 = scmp.ge.s32.totalorder %s13, 4
      %s23 = sphi 0, %s25
      %s26 = sphi 0, %s23
      %s27 = sphi 0, %s26
      %s43 = sphi 0, %s27
      %s47 = sphi 0, %s47
      %s49 = sphi 0, %s47
      %s50 = sphi 0, %s49
      %s64 = sphi 0, %s50
      %s68 = sphi 0, %s68
      %s70 = sphi 0, %s68
      %s71 = sphi 0, %s70
      %s85 = sphi 0, %s71
      %s89 = sphi 0, %s89
      %s91 = sphi 0, %s89
      %s92 = sphi 0, %s91
      %s106 = sphi 0, %s92
      %s112 = sphi 0, %s114
      %s115 = sphi 0, %s112
      %s116 = sphi 0, %s115
      %s132 = sphi 0, %s116
    $region4: #{tpu_custom_call.1} parent=1 // loop_header_branch
      %16 = sbr.rel (%p14) target = $region8
    $region5: #{tpu_custom_call.1} parent=1 // loop_body
      %s18 = ssub.s32 %s13, 1
      %s19 = ssub.s32 %s13, 2
      %s20 = sadd.s32 %s13, 1
      %s21 = ssub.s32 %s13, %s20
      %p22 = scmp.eq.s32.totalorder %s21, 0
      %s24 = sadd.s32 %s23, 1
      %s25 = scalar_select %p22, %s23, %s24
      %p28 = pneg %p22
      %p29 = scmp.eq.s32.totalorder %s13, 1
      %p30 = por %p28, %p29
      %p31 = scmp.ne.s32.totalorder %s23, %s26
      %p32 = scmp.eq.s32.totalorder %s13, 0
      %p33 = por %p31, %p32
      %p34 = scmp.ne.s32.totalorder %s23, %s26
      %p35 = scmp.eq.s32.totalorder %s18, 1
      %p36 = por %p34, %p35
      %p37 = scmp.ne.s32.totalorder %s26, %s27
      %p38 = scmp.eq.s32.totalorder %s18, 0
      %p39 = por %p37, %p38
      %p40 = scmp.ne.s32.totalorder %s26, %s27
      %p41 = scmp.eq.s32.totalorder %s19, 1
      %p42 = por %p40, %p41
      %p44 = scmp.ne.s32.totalorder %s27, %s43
      %p45 = scmp.eq.s32.totalorder %s19, 0
      %p46 = por %p44, %p45
      %s48 = sadd.s32 %s47, 1
      %p51 = scmp.eq.s32.totalorder %s13, 1
      %p52 = scmp.ne.s32.totalorder %s47, %s49
      %p53 = scmp.eq.s32.totalorder %s13, 0
      %p54 = por %p52, %p53
      %p55 = scmp.ne.s32.totalorder %s47, %s49
      %p56 = scmp.eq.s32.totalorder %s18, 1
      %p57 = por %p55, %p56
      %p58 = scmp.ne.s32.totalorder %s49, %s50
      %p59 = scmp.eq.s32.totalorder %s18, 0
      %p60 = por %p58, %p59
      %p61 = scmp.ne.s32.totalorder %s49, %s50
      %p62 = scmp.eq.s32.totalorder %s19, 1
      %p63 = por %p61, %p62
      %p65 = scmp.ne.s32.totalorder %s50, %s64
      %p66 = scmp.eq.s32.totalorder %s19, 0
      %p67 = por %p65, %p66
      %s69 = sadd.s32 %s68, 1
      %p72 = scmp.eq.s32.totalorder %s13, 1
      %p73 = scmp.ne.s32.totalorder %s68, %s70
      %p74 = scmp.eq.s32.totalorder %s13, 0
      %p75 = por %p73, %p74
      %p76 = scmp.ne.s32.totalorder %s68, %s70
      %p77 = scmp.eq.s32.totalorder %s18, 1
      %p78 = por %p76, %p77
      %p79 = scmp.ne.s32.totalorder %s70, %s71
      %p80 = scmp.eq.s32.totalorder %s18, 0
      %p81 = por %p79, %p80
      %p82 = scmp.ne.s32.totalorder %s70, %s71
      %p83 = scmp.eq.s32.totalorder %s19, 1
      %p84 = por %p82, %p83
      %p86 = scmp.ne.s32.totalorder %s71, %s85
      %p87 = scmp.eq.s32.totalorder %s19, 0
      %p88 = por %p86, %p87
      %s90 = sadd.s32 %s89, 1
      %p93 = scmp.eq.s32.totalorder %s13, 1
      %p94 = scmp.ne.s32.totalorder %s89, %s91
      %p95 = scmp.eq.s32.totalorder %s13, 0
      %p96 = por %p94, %p95
      %p97 = scmp.ne.s32.totalorder %s89, %s91
      %p98 = scmp.eq.s32.totalorder %s18, 1
      %p99 = por %p97, %p98
      %p100 = scmp.ne.s32.totalorder %s91, %s92
      %p101 = scmp.eq.s32.totalorder %s18, 0
      %p102 = por %p100, %p101
      %p103 = scmp.ne.s32.totalorder %s91, %s92
      %p104 = scmp.eq.s32.totalorder %s19, 1
      %p105 = por %p103, %p104
      %p107 = scmp.ne.s32.totalorder %s92, %s106
      %p108 = scmp.eq.s32.totalorder %s19, 0
      %p109 = por %p107, %p108
      %s110 = ssub.s32 %s13, %s20
      %p111 = scmp.eq.s32.totalorder %s110, 0
      %s113 = sadd.s32 %s112, 1
      %s114 = scalar_select %p111, %s112, %s113
      %p117 = pneg %p111
      %p118 = scmp.eq.s32.totalorder %s13, 1
      %p119 = por %p117, %p118
      %p120 = scmp.ne.s32.totalorder %s112, %s115
      %p121 = scmp.eq.s32.totalorder %s13, 0
      %p122 = por %p120, %p121
      %p123 = scmp.ne.s32.totalorder %s112, %s115
      %p124 = scmp.eq.s32.totalorder %s18, 1
      %p125 = por %p123, %p124
      %p126 = scmp.ne.s32.totalorder %s115, %s116
      %p127 = scmp.eq.s32.totalorder %s18, 0
      %p128 = por %p126, %p127
      %p129 = scmp.ne.s32.totalorder %s115, %s116
      %p130 = scmp.eq.s32.totalorder %s19, 1
      %p131 = por %p129, %p130
      %p133 = scmp.ne.s32.totalorder %s116, %s132
      %p134 = scmp.eq.s32.totalorder %s19, 0
      %p135 = por %p133, %p134
      %p136 = scmp.le.s32.totalorder 1, %s13
      %p137 = scmp.lt.s32.totalorder %s13, 3
      %p138 = pnand %p136, %p137
      %p139 = pneg %p138
      // Predicated region
      $region9: #{tpu_custom_call.1} parent=5 // pred_check
        _
      $region10: #{tpu_custom_call.1} parent=5 // pred_check_branch
        %141 = sbr.rel (%p138) target = $region12
      $region11: #{tpu_custom_call.1} parent=5 // pred_region
        %s142 = ssub.s32 %s13, 1
        // Predicated region
        $region13: #{tpu_custom_call.1} parent=11 // pred_check
          %p143 = pneg %p60
        $region14: #{tpu_custom_call.1} parent=11 // pred_check_branch
          %145 = sbr.rel (%p143) target = $region16
        $region15: #{tpu_custom_call.1} parent=11 // pred_region
          _
        $region16: #{tpu_custom_call.1} parent=11 // pred_fallthru
          _
        // Predicated region
        $region17: #{tpu_custom_call.1} parent=11 // pred_check
          %p146 = pneg %p81
        $region18: #{tpu_custom_call.1} parent=11 // pred_check_branch
          %148 = sbr.rel (%p146) target = $region20
        $region19: #{tpu_custom_call.1} parent=11 // pred_region
          _
        $region20: #{tpu_custom_call.1} parent=11 // pred_fallthru
          _
        // Predicated region
        $region21: #{tpu_custom_call.1} parent=11 // pred_check
          %p149 = pneg %p102
        $region22: #{tpu_custom_call.1} parent=11 // pred_check_branch
          %151 = sbr.rel (%p149) target = $region24
        $region23: #{tpu_custom_call.1} parent=11 // pred_region
          _
        $region24: #{tpu_custom_call.1} parent=11 // pred_fallthru
          _
      $region12: #{tpu_custom_call.1} parent=5 // pred_fallthru
        _
      %p152 = scmp.lt.s32.totalorder %s13, 2
      // Predicated region
      $region25: #{tpu_custom_call.1} parent=5 // pred_check
        %p153 = pneg %p152
      $region26: #{tpu_custom_call.1} parent=5 // pred_check_branch
        %155 = sbr.rel (%p153) target = $region28
      $region27: #{tpu_custom_call.1} parent=5 // pred_region
        // Predicated region
        $region29: #{tpu_custom_call.1} parent=27 // pred_check
          %p156 = pneg %p33
        $region30: #{tpu_custom_call.1} parent=27 // pred_check_branch
          %158 = sbr.rel (%p156) target = $region32
        $region31: #{tpu_custom_call.1} parent=27 // pred_region
          %s159 = smul.u32 4, %s13
          %p160 = scmp.lt.s32.totalorder %s159, 7
          %s161 = scalar_select %p160, %s159, 7
          %s162 = smul.addr %s161, 51
          %s163 = smul.addr %s162, 8
          %s164 = scalar_lea.vmem %s0, %s163
          %s165 = smul.u32 4, %s13
        $region32: #{tpu_custom_call.1} parent=27 // pred_fallthru
          _
      $region28: #{tpu_custom_call.1} parent=5 // pred_fallthru
        _
      %p166 = scmp.le.s32.totalorder 1, %s13
      %p167 = scmp.lt.s32.totalorder %s13, 3
      %p168 = pnand %p166, %p167
      %p169 = pneg %p168
      // Predicated region
      $region33: #{tpu_custom_call.1} parent=5 // pred_check
        _
      $region34: #{tpu_custom_call.1} parent=5 // pred_check_branch
        %171 = sbr.rel (%p168) target = $region36
      $region35: #{tpu_custom_call.1} parent=5 // pred_region
        %s172 = ssub.s32 %s13, 1
        %s173 = smul.u32 4, %s18
        %p174 = scmp.lt.s32.totalorder %s173, 7
        %s175 = scalar_select %p174, %s173, 7
        %s176 = smul.addr %s175, 51
        %s177 = smul.addr %s176, 8
        %s178 = scalar_lea.vmem %s0, %s177
        %p179 = pneg %p39
        %p180 = pneg %p36
        %p181 = pneg %p60
        %p182 = pneg %p57
        %p183 = pneg %p81
        %p184 = pneg %p78
        %p185 = pneg %p102
        %p186 = pneg %p99
        %p187 = pneg %p128
        %p188 = pneg %p125
        %s189 = sand.u32 %s115, 1
        %s190 = scalar_lea.sflag [#allocation3], %s189
        %s191 = sand.u32 %s115, 1
        %s192 = smul.addr %s191, 128
        %s193 = scalar_lea.vmem [#allocation2], %s192
        %s194 = smul.u32 4, %s18
        %p195 = scmp.lt.s32.totalorder %s194, 7
        %s196 = scalar_select %p195, %s194, 7
        %s197 = smul.addr %s196, 51
        %s198 = smul.addr %s197, 8
        %s199 = scalar_lea.vmem %s0, %s198
        %s200 = smul.u32 4, %s18
        %v201 = vld [vmem:[%s199] sm:$0xff]
        %v202 = vld [vmem:[%s199 + $0x8] sm:$0xff]
        %v203 = vld [vmem:[%s199 + $0x10] sm:$0x1]
        %v204 = vld [vmem:[%s199 + $0x18] sm:$0xff]
        %v205 = vld [vmem:[%s199 + $0x20] sm:$0xff]
        %v206 = vld [vmem:[%s199 + $0x28] sm:$0x1]
        %v207 = vld [vmem:[%s199 + $0x30] sm:$0xff]
        %v208 = vld [vmem:[%s199 + $0x38] sm:$0xff]
        %v209 = vld [vmem:[%s199 + $0x40] sm:$0x1]
        %v210 = vld [vmem:[%s199 + $0x48] sm:$0xff]
        %v211 = vld [vmem:[%s199 + $0x50] sm:$0xff]
        %v212 = vld [vmem:[%s199 + $0x58] sm:$0x1]
        %v213 = vld [vmem:[%s199 + $0x60] sm:$0xff]
        %v214 = vld [vmem:[%s199 + $0x68] sm:$0xff]
        %v215 = vld [vmem:[%s199 + $0x70] sm:$0x1]
        %v216 = vld [vmem:[%s199 + $0x78] sm:$0xff]
        %v217 = vld [vmem:[%s199 + $0x80] sm:$0xff]
        %v218 = vld [vmem:[%s199 + $0x88] sm:$0x1]
        %v219 = vld [vmem:[%s199 + $0x90] sm:$0xff]
        %v220 = vld [vmem:[%s199 + $0x98] sm:$0xff]
        %v221 = vld [vmem:[%s199 + $0xa0] sm:$0x1]
        %v222 = vld [vmem:[%s199 + $0xa8] sm:$0xff]
        %v223 = vld [vmem:[%s199 + $0xb0] sm:$0xff]
        %v224 = vld [vmem:[%s199 + $0xb8] sm:$0x1]
        %v225 = vld [vmem:[%s199 + $0xc0] sm:$0xff]
        %v226 = vld [vmem:[%s199 + $0xc8] sm:$0xff]
        %v227 = vld [vmem:[%s199 + $0xd0] sm:$0x1]
        %v228 = vld [vmem:[%s199 + $0xd8] sm:$0xff]
        %v229 = vld [vmem:[%s199 + $0xe0] sm:$0xff]
        %v230 = vld [vmem:[%s199 + $0xe8] sm:$0x1]
        %v231 = vld [vmem:[%s199 + $0xf0] sm:$0xff]
        %v232 = vld [vmem:[%s199 + $0xf8] sm:$0xff]
        %v233 = vld [vmem:[%s199 + $0x100] sm:$0x1]
        %v234 = vld [vmem:[%s199 + $0x108] sm:$0xff]
        %v235 = vld [vmem:[%s199 + $0x110] sm:$0xff]
        %v236 = vld [vmem:[%s199 + $0x118] sm:$0x1]
        %v237 = vld [vmem:[%s199 + $0x120] sm:$0xff]
        %v238 = vld [vmem:[%s199 + $0x128] sm:$0xff]
        %v239 = vld [vmem:[%s199 + $0x130] sm:$0x1]
        %v240 = vld [vmem:[%s199 + $0x138] sm:$0xff]
        %v241 = vld [vmem:[%s199 + $0x140] sm:$0xff]
        %v242 = vld [vmem:[%s199 + $0x148] sm:$0x1]
        %v243 = vld [vmem:[%s199 + $0x150] sm:$0xff]
        %v244 = vld [vmem:[%s199 + $0x158] sm:$0xff]
        %v245 = vld [vmem:[%s199 + $0x160] sm:$0x1]
        %v246 = vld [vmem:[%s199 + $0x168] sm:$0xff]
        %v247 = vld [vmem:[%s199 + $0x170] sm:$0xff]
        %v248 = vld [vmem:[%s199 + $0x178] sm:$0x1]
        %v249 = vld [vmem:[%s199 + $0x180] sm:$0xff]
        %v250 = vld [vmem:[%s199 + $0x188] sm:$0xff]
        %v251 = vld [vmem:[%s199 + $0x190] sm:$0x1]
        %s252 = scalar_lea.vmem %s199, 408
        %v253 = vld [vmem:[%s252] sm:$0xff]
        %v254 = vld [vmem:[%s252 + $0x8] sm:$0xff]
        %v255 = vld [vmem:[%s252 + $0x18] sm:$0xff]
        %v256 = vld [vmem:[%s252 + $0x20] sm:$0xff]
        %v257 = vld [vmem:[%s252 + $0x30] sm:$0xff]
        %v258 = vld [vmem:[%s252 + $0x38] sm:$0xff]
        %v259 = vld [vmem:[%s252 + $0x48] sm:$0xff]
        %v260 = vld [vmem:[%s252 + $0x50] sm:$0xff]
        %v261 = vld [vmem:[%s252 + $0x60] sm:$0xff]
        %v262 = vld [vmem:[%s252 + $0x68] sm:$0xff]
        %v263 = vld [vmem:[%s252 + $0x78] sm:$0xff]
        %v264 = vld [vmem:[%s252 + $0x80] sm:$0xff]
        %v265 = vld [vmem:[%s252 + $0x90] sm:$0xff]
        %v266 = vld [vmem:[%s252 + $0x98] sm:$0xff]
        %v267 = vld [vmem:[%s252 + $0xa8] sm:$0xff]
        %v268 = vld [vmem:[%s252 + $0xb0] sm:$0xff]
        %v269 = vld [vmem:[%s252 + $0xc0] sm:$0xff]
        %v270 = vld [vmem:[%s252 + $0xc8] sm:$0xff]
        %v271 = vld [vmem:[%s252 + $0xd8] sm:$0xff]
        %v272 = vld [vmem:[%s252 + $0xe0] sm:$0xff]
        %v273 = vld [vmem:[%s252 + $0xf0] sm:$0xff]
        %v274 = vld [vmem:[%s252 + $0xf8] sm:$0xff]
        %v275 = vld [vmem:[%s252 + $0x108] sm:$0xff]
        %v276 = vld [vmem:[%s252 + $0x110] sm:$0xff]
        %v277 = vld [vmem:[%s252 + $0x120] sm:$0xff]
        %v278 = vld [vmem:[%s252 + $0x128] sm:$0xff]
        %v279 = vld [vmem:[%s252 + $0x138] sm:$0xff]
        %v280 = vld [vmem:[%s252 + $0x140] sm:$0xff]
        %v281 = vld [vmem:[%s252 + $0x150] sm:$0xff]
        %v282 = vld [vmem:[%s252 + $0x158] sm:$0xff]
        %v283 = vld [vmem:[%s252 + $0x168] sm:$0xff]
        %v284 = vld [vmem:[%s252 + $0x170] sm:$0xff]
        %v285 = vld [vmem:[%s252 + $0x180] sm:$0xff]
        %v286 = vld [vmem:[%s252 + $0x188] sm:$0xff]
        %s287 = scalar_lea.vmem %s199, 816
        %v288 = vld [vmem:[%s287] sm:$0xff]
        %v289 = vld [vmem:[%s287 + $0x8] sm:$0xff]
        %v290 = vld [vmem:[%s287 + $0x10] sm:$0x1]
        %v291 = vld [vmem:[%s287 + $0x18] sm:$0xff]
        %v292 = vld [vmem:[%s287 + $0x20] sm:$0xff]
        %v293 = vld [vmem:[%s287 + $0x28] sm:$0x1]
        %v294 = vld [vmem:[%s287 + $0x30] sm:$0xff]
        %v295 = vld [vmem:[%s287 + $0x38] sm:$0xff]
        %v296 = vld [vmem:[%s287 + $0x40] sm:$0x1]
        %v297 = vld [vmem:[%s287 + $0x48] sm:$0xff]
        %v298 = vld [vmem:[%s287 + $0x50] sm:$0xff]
        %v299 = vld [vmem:[%s287 + $0x58] sm:$0x1]
        %v300 = vld [vmem:[%s287 + $0x60] sm:$0xff]
        %v301 = vld [vmem:[%s287 + $0x68] sm:$0xff]
        %v302 = vld [vmem:[%s287 + $0x70] sm:$0x1]
        %v303 = vld [vmem:[%s287 + $0x78] sm:$0xff]
        %v304 = vld [vmem:[%s287 + $0x80] sm:$0xff]
        %v305 = vld [vmem:[%s287 + $0x88] sm:$0x1]
        %v306 = vld [vmem:[%s287 + $0x90] sm:$0xff]
        %v307 = vld [vmem:[%s287 + $0x98] sm:$0xff]
        %v308 = vld [vmem:[%s287 + $0xa0] sm:$0x1]
        %v309 = vld [vmem:[%s287 + $0xa8] sm:$0xff]
        %v310 = vld [vmem:[%s287 + $0xb0] sm:$0xff]
        %v311 = vld [vmem:[%s287 + $0xb8] sm:$0x1]
        %v312 = vld [vmem:[%s287 + $0xc0] sm:$0xff]
        %v313 = vld [vmem:[%s287 + $0xc8] sm:$0xff]
        %v314 = vld [vmem:[%s287 + $0xd0] sm:$0x1]
        %v315 = vld [vmem:[%s287 + $0xd8] sm:$0xff]
        %v316 = vld [vmem:[%s287 + $0xe0] sm:$0xff]
        %v317 = vld [vmem:[%s287 + $0xe8] sm:$0x1]
        %v318 = vld [vmem:[%s287 + $0xf0] sm:$0xff]
        %v319 = vld [vmem:[%s287 + $0xf8] sm:$0xff]
        %v320 = vld [vmem:[%s287 + $0x100] sm:$0x1]
        %v321 = vld [vmem:[%s287 + $0x108] sm:$0xff]
        %v322 = vld [vmem:[%s287 + $0x110] sm:$0xff]
        %v323 = vld [vmem:[%s287 + $0x118] sm:$0x1]
        %v324 = vld [vmem:[%s287 + $0x120] sm:$0xff]
        %v325 = vld [vmem:[%s287 + $0x128] sm:$0xff]
        %v326 = vld [vmem:[%s287 + $0x130] sm:$0x1]
        %v327 = vld [vmem:[%s287 + $0x138] sm:$0xff]
        %v328 = vld [vmem:[%s287 + $0x140] sm:$0xff]
        %v329 = vld [vmem:[%s287 + $0x148] sm:$0x1]
        %v330 = vld [vmem:[%s287 + $0x150] sm:$0xff]
        %v331 = vld [vmem:[%s287 + $0x158] sm:$0xff]
        %v332 = vld [vmem:[%s287 + $0x160] sm:$0x1]
        %v333 = vld [vmem:[%s287 + $0x168] sm:$0xff]
        %v334 = vld [vmem:[%s287 + $0x170] sm:$0xff]
        %v335 = vld [vmem:[%s287 + $0x178] sm:$0x1]
        %s336 = scalar_lea.vmem %s199, 1224
        %v337 = vld [vmem:[%s336] sm:$0xff]
        %v338 = vld [vmem:[%s336 + $0x8] sm:$0xff]
        %v339 = vld [vmem:[%s336 + $0x18] sm:$0xff]
        %v340 = vld [vmem:[%s336 + $0x20] sm:$0xff]
        %v341 = vld [vmem:[%s336 + $0x30] sm:$0xff]
        %v342 = vld [vmem:[%s336 + $0x38] sm:$0xff]
        %v343 = vld [vmem:[%s336 + $0x48] sm:$0xff]
        %v344 = vld [vmem:[%s336 + $0x50] sm:$0xff]
        %v345 = vld [vmem:[%s336 + $0x60] sm:$0xff]
        %v346 = vld [vmem:[%s336 + $0x68] sm:$0xff]
        %v347 = vld [vmem:[%s336 + $0x78] sm:$0xff]
        %v348 = vld [vmem:[%s336 + $0x80] sm:$0xff]
        %v349 = vld [vmem:[%s336 + $0x90] sm:$0xff]
        %v350 = vld [vmem:[%s336 + $0x98] sm:$0xff]
        %v351 = vld [vmem:[%s336 + $0xa8] sm:$0xff]
        %v352 = vld [vmem:[%s336 + $0xb0] sm:$0xff]
        %v353 = vld [vmem:[%s336 + $0xc0] sm:$0xff]
        %v354 = vld [vmem:[%s336 + $0xc8] sm:$0xff]
        %v355 = vld [vmem:[%s336 + $0xd8] sm:$0xff]
        %v356 = vld [vmem:[%s336 + $0xe0] sm:$0xff]
        %v357 = vld [vmem:[%s336 + $0xf0] sm:$0xff]
        %v358 = vld [vmem:[%s336 + $0xf8] sm:$0xff]
        %v359 = vld [vmem:[%s336 + $0x108] sm:$0xff]
        %v360 = vld [vmem:[%s336 + $0x110] sm:$0xff]
        %v361 = vld [vmem:[%s336 + $0x120] sm:$0xff]
        %v362 = vld [vmem:[%s336 + $0x128] sm:$0xff]
        %v363 = vld [vmem:[%s336 + $0x138] sm:$0xff]
        %v364 = vld [vmem:[%s336 + $0x140] sm:$0xff]
        %v365 = vld [vmem:[%s336 + $0x150] sm:$0xff]
        %v366 = vld [vmem:[%s336 + $0x158] sm:$0xff]
        %v367 = vld [vmem:[%s336 + $0x168] sm:$0xff]
        %v368 = vld [vmem:[%s336 + $0x170] sm:$0xff]
        %v369 = vld [vmem:[%s1] sm:$0x7]
        %v370 = vld [vmem:[%s1 + $0x4] sm:$0x7]
        %v371 = vld [vmem:[%s1 + $0x8] sm:$0x7]
        %v372 = vld [vmem:[%s1 + $0xc] sm:$0x7]
        %v373 = vld [vmem:[%s1 + $0x10] sm:$0x7]
        %v374 = vld [vmem:[%s1 + $0x14] sm:$0x7]
        %v375 = vld [vmem:[%s1 + $0x18] sm:$0x7]
        %v376 = vld [vmem:[%s1 + $0x1c] sm:$0x7]
        %v377 = vld [vmem:[%s1 + $0x20] sm:$0x7]
        %379 = vset.pattern.permute.xlu0 0
        %380 = vperm.xlu0 %379, %v201
        %v381 = vpop.permute.xlu0 %380
        %384 = vset.pattern.permute.xlu0 0
        %385 = vperm.xlu0 %384, %v202
        %v386 = vpop.permute.xlu0 %385
        %389 = vset.pattern.permute.xlu0 0
        %390 = vperm.xlu0 %389, %v204
        %v391 = vpop.permute.xlu0 %390
        %394 = vset.pattern.permute.xlu0 0
        %395 = vperm.xlu0 %394, %v205
        %v396 = vpop.permute.xlu0 %395
        %399 = vset.pattern.permute.xlu0 0
        %400 = vperm.xlu0 %399, %v207
        %v401 = vpop.permute.xlu0 %400
        %404 = vset.pattern.permute.xlu0 0
        %405 = vperm.xlu0 %404, %v208
        %v406 = vpop.permute.xlu0 %405
        %409 = vset.pattern.permute.xlu0 0
        %410 = vperm.xlu0 %409, %v210
        %v411 = vpop.permute.xlu0 %410
        %414 = vset.pattern.permute.xlu0 0
        %415 = vperm.xlu0 %414, %v211
        %v416 = vpop.permute.xlu0 %415
        %419 = vset.pattern.permute.xlu0 0
        %420 = vperm.xlu0 %419, %v213
        %v421 = vpop.permute.xlu0 %420
        %424 = vset.pattern.permute.xlu0 0
        %425 = vperm.xlu0 %424, %v214
        %v426 = vpop.permute.xlu0 %425
        %429 = vset.pattern.permute.xlu0 0
        %430 = vperm.xlu0 %429, %v216
        %v431 = vpop.permute.xlu0 %430
        %434 = vset.pattern.permute.xlu0 0
        %435 = vperm.xlu0 %434, %v217
        %v436 = vpop.permute.xlu0 %435
        %439 = vset.pattern.permute.xlu0 0
        %440 = vperm.xlu0 %439, %v219
        %v441 = vpop.permute.xlu0 %440
        %444 = vset.pattern.permute.xlu0 0
        %445 = vperm.xlu0 %444, %v220
        %v446 = vpop.permute.xlu0 %445
        %449 = vset.pattern.permute.xlu0 0
        %450 = vperm.xlu0 %449, %v222
        %v451 = vpop.permute.xlu0 %450
        %454 = vset.pattern.permute.xlu0 0
        %455 = vperm.xlu0 %454, %v223
        %v456 = vpop.permute.xlu0 %455
        %459 = vset.pattern.permute.xlu0 0
        %460 = vperm.xlu0 %459, %v225
        %v461 = vpop.permute.xlu0 %460
        %464 = vset.pattern.permute.xlu0 0
        %465 = vperm.xlu0 %464, %v226
        %v466 = vpop.permute.xlu0 %465
        %469 = vset.pattern.permute.xlu0 0
        %470 = vperm.xlu0 %469, %v228
        %v471 = vpop.permute.xlu0 %470
        %474 = vset.pattern.permute.xlu0 0
        %475 = vperm.xlu0 %474, %v229
        %v476 = vpop.permute.xlu0 %475
        %479 = vset.pattern.permute.xlu0 0
        %480 = vperm.xlu0 %479, %v231
        %v481 = vpop.permute.xlu0 %480
        %484 = vset.pattern.permute.xlu0 0
        %485 = vperm.xlu0 %484, %v232
        %v486 = vpop.permute.xlu0 %485
        %489 = vset.pattern.permute.xlu0 0
        %490 = vperm.xlu0 %489, %v234
        %v491 = vpop.permute.xlu0 %490
        %494 = vset.pattern.permute.xlu0 0
        %495 = vperm.xlu0 %494, %v235
        %v496 = vpop.permute.xlu0 %495
        %499 = vset.pattern.permute.xlu0 0
        %500 = vperm.xlu0 %499, %v237
        %v501 = vpop.permute.xlu0 %500
        %504 = vset.pattern.permute.xlu0 0
        %505 = vperm.xlu0 %504, %v238
        %v506 = vpop.permute.xlu0 %505
        %509 = vset.pattern.permute.xlu0 0
        %510 = vperm.xlu0 %509, %v240
        %v511 = vpop.permute.xlu0 %510
        %514 = vset.pattern.permute.xlu0 0
        %515 = vperm.xlu0 %514, %v241
        %v516 = vpop.permute.xlu0 %515
        %519 = vset.pattern.permute.xlu0 0
        %520 = vperm.xlu0 %519, %v243
        %v521 = vpop.permute.xlu0 %520
        %524 = vset.pattern.permute.xlu0 0
        %525 = vperm.xlu0 %524, %v244
        %v526 = vpop.permute.xlu0 %525
        %529 = vset.pattern.permute.xlu0 0
        %530 = vperm.xlu0 %529, %v246
        %v531 = vpop.permute.xlu0 %530
        %534 = vset.pattern.permute.xlu0 0
        %535 = vperm.xlu0 %534, %v247
        %v536 = vpop.permute.xlu0 %535
        %v538 = vperm.slane %v369, 0
        %v539 = vmul.f32 %v381, %v538
        %v540 = vmul.f32 %v386, %v538
        %v541 = vmul.f32 %v391, %v538
        %v542 = vmul.f32 %v396, %v538
        %v543 = vmul.f32 %v401, %v538
        %v544 = vmul.f32 %v406, %v538
        %v545 = vmul.f32 %v411, %v538
        %v546 = vmul.f32 %v416, %v538
        %v547 = vmul.f32 %v421, %v538
        %v548 = vmul.f32 %v426, %v538
        %v549 = vmul.f32 %v431, %v538
        %v550 = vmul.f32 %v436, %v538
        %v551 = vmul.f32 %v441, %v538
        %v552 = vmul.f32 %v446, %v538
        %v553 = vmul.f32 %v451, %v538
        %v554 = vmul.f32 %v456, %v538
        %v555 = vmul.f32 %v461, %v538
        %v556 = vmul.f32 %v466, %v538
        %v557 = vmul.f32 %v471, %v538
        %v558 = vmul.f32 %v476, %v538
        %v559 = vmul.f32 %v481, %v538
        %v560 = vmul.f32 %v486, %v538
        %v561 = vmul.f32 %v491, %v538
        %v562 = vmul.f32 %v496, %v538
        %v563 = vmul.f32 %v501, %v538
        %v564 = vmul.f32 %v506, %v538
        %v565 = vmul.f32 %v511, %v538
        %v566 = vmul.f32 %v516, %v538
        %v567 = vmul.f32 %v521, %v538
        %v568 = vmul.f32 %v526, %v538
        %v569 = vmul.f32 %v531, %v538
        %v570 = vmul.f32 %v536, %v538
        %v571 = vadd.f32 %v539, 0.0
        %v572 = vadd.f32 %v540, 0.0
        %v573 = vadd.f32 %v541, 0.0
        %v574 = vadd.f32 %v542, 0.0
        %v575 = vadd.f32 %v543, 0.0
        %v576 = vadd.f32 %v544, 0.0
        %v577 = vadd.f32 %v545, 0.0
        %v578 = vadd.f32 %v546, 0.0
        %v579 = vadd.f32 %v547, 0.0
        %v580 = vadd.f32 %v548, 0.0
        %v581 = vadd.f32 %v549, 0.0
        %v582 = vadd.f32 %v550, 0.0
        %v583 = vadd.f32 %v551, 0.0
        %v584 = vadd.f32 %v552, 0.0
        %v585 = vadd.f32 %v553, 0.0
        %v586 = vadd.f32 %v554, 0.0
        %v587 = vadd.f32 %v555, 0.0
        %v588 = vadd.f32 %v556, 0.0
        %v589 = vadd.f32 %v557, 0.0
        %v590 = vadd.f32 %v558, 0.0
        %v591 = vadd.f32 %v559, 0.0
        %v592 = vadd.f32 %v560, 0.0
        %v593 = vadd.f32 %v561, 0.0
        %v594 = vadd.f32 %v562, 0.0
        %v595 = vadd.f32 %v563, 0.0
        %v596 = vadd.f32 %v564, 0.0
        %v597 = vadd.f32 %v565, 0.0
        %v598 = vadd.f32 %v566, 0.0
        %v599 = vadd.f32 %v567, 0.0
        %v600 = vadd.f32 %v568, 0.0
        %v601 = vadd.f32 %v569, 0.0
        %v602 = vadd.f32 %v570, 0.0
        %603 = vset.pattern.permute.xlu0 1
        %604 = vperm.xlu0 %603, %v201
        %v605 = vpop.permute.xlu0 %604
        %607 = vset.pattern.permute.xlu0 1
        %608 = vperm.xlu0 %607, %v202
        %v609 = vpop.permute.xlu0 %608
        %611 = vset.pattern.permute.xlu0 1
        %612 = vperm.xlu0 %611, %v204
        %v613 = vpop.permute.xlu0 %612
        %615 = vset.pattern.permute.xlu0 1
        %616 = vperm.xlu0 %615, %v205
        %v617 = vpop.permute.xlu0 %616
        %619 = vset.pattern.permute.xlu0 1
        %620 = vperm.xlu0 %619, %v207
        %v621 = vpop.permute.xlu0 %620
        %623 = vset.pattern.permute.xlu0 1
        %624 = vperm.xlu0 %623, %v208
        %v625 = vpop.permute.xlu0 %624
        %627 = vset.pattern.permute.xlu0 1
        %628 = vperm.xlu0 %627, %v210
        %v629 = vpop.permute.xlu0 %628
        %631 = vset.pattern.permute.xlu0 1
        %632 = vperm.xlu0 %631, %v211
        %v633 = vpop.permute.xlu0 %632
        %635 = vset.pattern.permute.xlu0 1
        %636 = vperm.xlu0 %635, %v213
        %v637 = vpop.permute.xlu0 %636
        %639 = vset.pattern.permute.xlu0 1
        %640 = vperm.xlu0 %639, %v214
        %v641 = vpop.permute.xlu0 %640
        %643 = vset.pattern.permute.xlu0 1
        %644 = vperm.xlu0 %643, %v216
        %v645 = vpop.permute.xlu0 %644
        %647 = vset.pattern.permute.xlu0 1
        %648 = vperm.xlu0 %647, %v217
        %v649 = vpop.permute.xlu0 %648
        %651 = vset.pattern.permute.xlu0 1
        %652 = vperm.xlu0 %651, %v219
        %v653 = vpop.permute.xlu0 %652
        %655 = vset.pattern.permute.xlu0 1
        %656 = vperm.xlu0 %655, %v220
        %v657 = vpop.permute.xlu0 %656
        %659 = vset.pattern.permute.xlu0 1
        %660 = vperm.xlu0 %659, %v222
        %v661 = vpop.permute.xlu0 %660
        %663 = vset.pattern.permute.xlu0 1
        %664 = vperm.xlu0 %663, %v223
        %v665 = vpop.permute.xlu0 %664
        %667 = vset.pattern.permute.xlu0 1
        %668 = vperm.xlu0 %667, %v225
        %v669 = vpop.permute.xlu0 %668
        %671 = vset.pattern.permute.xlu0 1
        %672 = vperm.xlu0 %671, %v226
        %v673 = vpop.permute.xlu0 %672
        %675 = vset.pattern.permute.xlu0 1
        %676 = vperm.xlu0 %675, %v228
        %v677 = vpop.permute.xlu0 %676
        %679 = vset.pattern.permute.xlu0 1
        %680 = vperm.xlu0 %679, %v229
        %v681 = vpop.permute.xlu0 %680
        %683 = vset.pattern.permute.xlu0 1
        %684 = vperm.xlu0 %683, %v231
        %v685 = vpop.permute.xlu0 %684
        %687 = vset.pattern.permute.xlu0 1
        %688 = vperm.xlu0 %687, %v232
        %v689 = vpop.permute.xlu0 %688
        %691 = vset.pattern.permute.xlu0 1
        %692 = vperm.xlu0 %691, %v234
        %v693 = vpop.permute.xlu0 %692
        %695 = vset.pattern.permute.xlu0 1
        %696 = vperm.xlu0 %695, %v235
        %v697 = vpop.permute.xlu0 %696
        %699 = vset.pattern.permute.xlu0 1
        %700 = vperm.xlu0 %699, %v237
        %v701 = vpop.permute.xlu0 %700
        %703 = vset.pattern.permute.xlu0 1
        %704 = vperm.xlu0 %703, %v238
        %v705 = vpop.permute.xlu0 %704
        %707 = vset.pattern.permute.xlu0 1
        %708 = vperm.xlu0 %707, %v240
        %v709 = vpop.permute.xlu0 %708
        %711 = vset.pattern.permute.xlu0 1
        %712 = vperm.xlu0 %711, %v241
        %v713 = vpop.permute.xlu0 %712
        %715 = vset.pattern.permute.xlu0 1
        %716 = vperm.xlu0 %715, %v243
        %v717 = vpop.permute.xlu0 %716
        %719 = vset.pattern.permute.xlu0 1
        %720 = vperm.xlu0 %719, %v244
        %v721 = vpop.permute.xlu0 %720
        %723 = vset.pattern.permute.xlu0 1
        %724 = vperm.xlu0 %723, %v246
        %v725 = vpop.permute.xlu0 %724
        %727 = vset.pattern.permute.xlu0 1
        %728 = vperm.xlu0 %727, %v247
        %v729 = vpop.permute.xlu0 %728
        %v731 = vperm.slane %v369, 1
        %v732 = vmul.f32 %v605, %v731
        %v733 = vmul.f32 %v609, %v731
        %v734 = vmul.f32 %v613, %v731
        %v735 = vmul.f32 %v617, %v731
        %v736 = vmul.f32 %v621, %v731
        %v737 = vmul.f32 %v625, %v731
        %v738 = vmul.f32 %v629, %v731
        %v739 = vmul.f32 %v633, %v731
        %v740 = vmul.f32 %v637, %v731
        %v741 = vmul.f32 %v641, %v731
        %v742 = vmul.f32 %v645, %v731
        %v743 = vmul.f32 %v649, %v731
        %v744 = vmul.f32 %v653, %v731
        %v745 = vmul.f32 %v657, %v731
        %v746 = vmul.f32 %v661, %v731
        %v747 = vmul.f32 %v665, %v731
        %v748 = vmul.f32 %v669, %v731
        %v749 = vmul.f32 %v673, %v731
        %v750 = vmul.f32 %v677, %v731
        %v751 = vmul.f32 %v681, %v731
        %v752 = vmul.f32 %v685, %v731
        %v753 = vmul.f32 %v689, %v731
        %v754 = vmul.f32 %v693, %v731
        %v755 = vmul.f32 %v697, %v731
        %v756 = vmul.f32 %v701, %v731
        %v757 = vmul.f32 %v705, %v731
        %v758 = vmul.f32 %v709, %v731
        %v759 = vmul.f32 %v713, %v731
        %v760 = vmul.f32 %v717, %v731
        %v761 = vmul.f32 %v721, %v731
        %v762 = vmul.f32 %v725, %v731
        %v763 = vmul.f32 %v729, %v731
        %v764 = vadd.f32 %v571, %v732
        %v765 = vadd.f32 %v572, %v733
        %v766 = vadd.f32 %v573, %v734
        %v767 = vadd.f32 %v574, %v735
        %v768 = vadd.f32 %v575, %v736
        %v769 = vadd.f32 %v576, %v737
        %v770 = vadd.f32 %v577, %v738
        %v771 = vadd.f32 %v578, %v739
        %v772 = vadd.f32 %v579, %v740
        %v773 = vadd.f32 %v580, %v741
        %v774 = vadd.f32 %v581, %v742
        %v775 = vadd.f32 %v582, %v743
        %v776 = vadd.f32 %v583, %v744
        %v777 = vadd.f32 %v584, %v745
        %v778 = vadd.f32 %v585, %v746
        %v779 = vadd.f32 %v586, %v747
        %v780 = vadd.f32 %v587, %v748
        %v781 = vadd.f32 %v588, %v749
        %v782 = vadd.f32 %v589, %v750
        %v783 = vadd.f32 %v590, %v751
        %v784 = vadd.f32 %v591, %v752
        %v785 = vadd.f32 %v592, %v753
        %v786 = vadd.f32 %v593, %v754
        %v787 = vadd.f32 %v594, %v755
        %v788 = vadd.f32 %v595, %v756
        %v789 = vadd.f32 %v596, %v757
        %v790 = vadd.f32 %v597, %v758
        %v791 = vadd.f32 %v598, %v759
        %v792 = vadd.f32 %v599, %v760
        %v793 = vadd.f32 %v600, %v761
        %v794 = vadd.f32 %v601, %v762
        %v795 = vadd.f32 %v602, %v763
        %796 = vset.pattern.permute.xlu0 2
        %797 = vperm.xlu0 %796, %v201
        %v798 = vpop.permute.xlu0 %797
        %800 = vset.pattern.permute.xlu0 2
        %801 = vperm.xlu0 %800, %v202
        %v802 = vpop.permute.xlu0 %801
        %804 = vset.pattern.permute.xlu0 2
        %805 = vperm.xlu0 %804, %v204
        %v806 = vpop.permute.xlu0 %805
        %808 = vset.pattern.permute.xlu0 2
        %809 = vperm.xlu0 %808, %v205
        %v810 = vpop.permute.xlu0 %809
        %812 = vset.pattern.permute.xlu0 2
        %813 = vperm.xlu0 %812, %v207
        %v814 = vpop.permute.xlu0 %813
        %816 = vset.pattern.permute.xlu0 2
        %817 = vperm.xlu0 %816, %v208
        %v818 = vpop.permute.xlu0 %817
        %820 = vset.pattern.permute.xlu0 2
        %821 = vperm.xlu0 %820, %v210
        %v822 = vpop.permute.xlu0 %821
        %824 = vset.pattern.permute.xlu0 2
        %825 = vperm.xlu0 %824, %v211
        %v826 = vpop.permute.xlu0 %825
        %828 = vset.pattern.permute.xlu0 2
        %829 = vperm.xlu0 %828, %v213
        %v830 = vpop.permute.xlu0 %829
        %832 = vset.pattern.permute.xlu0 2
        %833 = vperm.xlu0 %832, %v214
        %v834 = vpop.permute.xlu0 %833
        %836 = vset.pattern.permute.xlu0 2
        %837 = vperm.xlu0 %836, %v216
        %v838 = vpop.permute.xlu0 %837
        %840 = vset.pattern.permute.xlu0 2
        %841 = vperm.xlu0 %840, %v217
        %v842 = vpop.permute.xlu0 %841
        %844 = vset.pattern.permute.xlu0 2
        %845 = vperm.xlu0 %844, %v219
        %v846 = vpop.permute.xlu0 %845
        %848 = vset.pattern.permute.xlu0 2
        %849 = vperm.xlu0 %848, %v220
        %v850 = vpop.permute.xlu0 %849
        %852 = vset.pattern.permute.xlu0 2
        %853 = vperm.xlu0 %852, %v222
        %v854 = vpop.permute.xlu0 %853
        %856 = vset.pattern.permute.xlu0 2
        %857 = vperm.xlu0 %856, %v223
        %v858 = vpop.permute.xlu0 %857
        %860 = vset.pattern.permute.xlu0 2
        %861 = vperm.xlu0 %860, %v225
        %v862 = vpop.permute.xlu0 %861
        %864 = vset.pattern.permute.xlu0 2
        %865 = vperm.xlu0 %864, %v226
        %v866 = vpop.permute.xlu0 %865
        %868 = vset.pattern.permute.xlu0 2
        %869 = vperm.xlu0 %868, %v228
        %v870 = vpop.permute.xlu0 %869
        %872 = vset.pattern.permute.xlu0 2
        %873 = vperm.xlu0 %872, %v229
        %v874 = vpop.permute.xlu0 %873
        %876 = vset.pattern.permute.xlu0 2
        %877 = vperm.xlu0 %876, %v231
        %v878 = vpop.permute.xlu0 %877
        %880 = vset.pattern.permute.xlu0 2
        %881 = vperm.xlu0 %880, %v232
        %v882 = vpop.permute.xlu0 %881
        %884 = vset.pattern.permute.xlu0 2
        %885 = vperm.xlu0 %884, %v234
        %v886 = vpop.permute.xlu0 %885
        %888 = vset.pattern.permute.xlu0 2
        %889 = vperm.xlu0 %888, %v235
        %v890 = vpop.permute.xlu0 %889
        %892 = vset.pattern.permute.xlu0 2
        %893 = vperm.xlu0 %892, %v237
        %v894 = vpop.permute.xlu0 %893
        %896 = vset.pattern.permute.xlu0 2
        %897 = vperm.xlu0 %896, %v238
        %v898 = vpop.permute.xlu0 %897
        %900 = vset.pattern.permute.xlu0 2
        %901 = vperm.xlu0 %900, %v240
        %v902 = vpop.permute.xlu0 %901
        %904 = vset.pattern.permute.xlu0 2
        %905 = vperm.xlu0 %904, %v241
        %v906 = vpop.permute.xlu0 %905
        %908 = vset.pattern.permute.xlu0 2
        %909 = vperm.xlu0 %908, %v243
        %v910 = vpop.permute.xlu0 %909
        %912 = vset.pattern.permute.xlu0 2
        %913 = vperm.xlu0 %912, %v244
        %v914 = vpop.permute.xlu0 %913
        %916 = vset.pattern.permute.xlu0 2
        %917 = vperm.xlu0 %916, %v246
        %v918 = vpop.permute.xlu0 %917
        %920 = vset.pattern.permute.xlu0 2
        %921 = vperm.xlu0 %920, %v247
        %v922 = vpop.permute.xlu0 %921
        %v924 = vperm.slane %v369, 2
        %v925 = vmul.f32 %v798, %v924
        %v926 = vmul.f32 %v802, %v924
        %v927 = vmul.f32 %v806, %v924
        %v928 = vmul.f32 %v810, %v924
        %v929 = vmul.f32 %v814, %v924
        %v930 = vmul.f32 %v818, %v924
        %v931 = vmul.f32 %v822, %v924
        %v932 = vmul.f32 %v826, %v924
        %v933 = vmul.f32 %v830, %v924
        %v934 = vmul.f32 %v834, %v924
        %v935 = vmul.f32 %v838, %v924
        %v936 = vmul.f32 %v842, %v924
        %v937 = vmul.f32 %v846, %v924
        %v938 = vmul.f32 %v850, %v924
        %v939 = vmul.f32 %v854, %v924
        %v940 = vmul.f32 %v858, %v924
        %v941 = vmul.f32 %v862, %v924
        %v942 = vmul.f32 %v866, %v924
        %v943 = vmul.f32 %v870, %v924
        %v944 = vmul.f32 %v874, %v924
        %v945 = vmul.f32 %v878, %v924
        %v946 = vmul.f32 %v882, %v924
        %v947 = vmul.f32 %v886, %v924
        %v948 = vmul.f32 %v890, %v924
        %v949 = vmul.f32 %v894, %v924
        %v950 = vmul.f32 %v898, %v924
        %v951 = vmul.f32 %v902, %v924
        %v952 = vmul.f32 %v906, %v924
        %v953 = vmul.f32 %v910, %v924
        %v954 = vmul.f32 %v914, %v924
        %v955 = vmul.f32 %v918, %v924
        %v956 = vmul.f32 %v922, %v924
        %v957 = vadd.f32 %v764, %v925
        %v958 = vadd.f32 %v765, %v926
        %v959 = vadd.f32 %v766, %v927
        %v960 = vadd.f32 %v767, %v928
        %v961 = vadd.f32 %v768, %v929
        %v962 = vadd.f32 %v769, %v930
        %v963 = vadd.f32 %v770, %v931
        %v964 = vadd.f32 %v771, %v932
        %v965 = vadd.f32 %v772, %v933
        %v966 = vadd.f32 %v773, %v934
        %v967 = vadd.f32 %v774, %v935
        %v968 = vadd.f32 %v775, %v936
        %v969 = vadd.f32 %v776, %v937
        %v970 = vadd.f32 %v777, %v938
        %v971 = vadd.f32 %v778, %v939
        %v972 = vadd.f32 %v779, %v940
        %v973 = vadd.f32 %v780, %v941
        %v974 = vadd.f32 %v781, %v942
        %v975 = vadd.f32 %v782, %v943
        %v976 = vadd.f32 %v783, %v944
        %v977 = vadd.f32 %v784, %v945
        %v978 = vadd.f32 %v785, %v946
        %v979 = vadd.f32 %v786, %v947
        %v980 = vadd.f32 %v787, %v948
        %v981 = vadd.f32 %v788, %v949
        %v982 = vadd.f32 %v789, %v950
        %v983 = vadd.f32 %v790, %v951
        %v984 = vadd.f32 %v791, %v952
        %v985 = vadd.f32 %v792, %v953
        %v986 = vadd.f32 %v793, %v954
        %v987 = vadd.f32 %v794, %v955
        %v988 = vadd.f32 %v795, %v956
        %990 = vset.pattern.permute.xlu0 0
        %991 = vperm.xlu0 %990, %v253
        %v992 = vpop.permute.xlu0 %991
        %995 = vset.pattern.permute.xlu0 0
        %996 = vperm.xlu0 %995, %v254
        %v997 = vpop.permute.xlu0 %996
        %1000 = vset.pattern.permute.xlu0 0
        %1001 = vperm.xlu0 %1000, %v255
        %v1002 = vpop.permute.xlu0 %1001
        %1005 = vset.pattern.permute.xlu0 0
        %1006 = vperm.xlu0 %1005, %v256
        %v1007 = vpop.permute.xlu0 %1006
        %1010 = vset.pattern.permute.xlu0 0
        %1011 = vperm.xlu0 %1010, %v257
        %v1012 = vpop.permute.xlu0 %1011
        %1015 = vset.pattern.permute.xlu0 0
        %1016 = vperm.xlu0 %1015, %v258
        %v1017 = vpop.permute.xlu0 %1016
        %1020 = vset.pattern.permute.xlu0 0
        %1021 = vperm.xlu0 %1020, %v259
        %v1022 = vpop.permute.xlu0 %1021
        %1025 = vset.pattern.permute.xlu0 0
        %1026 = vperm.xlu0 %1025, %v260
        %v1027 = vpop.permute.xlu0 %1026
        %1030 = vset.pattern.permute.xlu0 0
        %1031 = vperm.xlu0 %1030, %v261
        %v1032 = vpop.permute.xlu0 %1031
        %1035 = vset.pattern.permute.xlu0 0
        %1036 = vperm.xlu0 %1035, %v262
        %v1037 = vpop.permute.xlu0 %1036
        %1040 = vset.pattern.permute.xlu0 0
        %1041 = vperm.xlu0 %1040, %v263
        %v1042 = vpop.permute.xlu0 %1041
        %1045 = vset.pattern.permute.xlu0 0
        %1046 = vperm.xlu0 %1045, %v264
        %v1047 = vpop.permute.xlu0 %1046
        %1050 = vset.pattern.permute.xlu0 0
        %1051 = vperm.xlu0 %1050, %v265
        %v1052 = vpop.permute.xlu0 %1051
        %1055 = vset.pattern.permute.xlu0 0
        %1056 = vperm.xlu0 %1055, %v266
        %v1057 = vpop.permute.xlu0 %1056
        %1060 = vset.pattern.permute.xlu0 0
        %1061 = vperm.xlu0 %1060, %v267
        %v1062 = vpop.permute.xlu0 %1061
        %1065 = vset.pattern.permute.xlu0 0
        %1066 = vperm.xlu0 %1065, %v268
        %v1067 = vpop.permute.xlu0 %1066
        %1070 = vset.pattern.permute.xlu0 0
        %1071 = vperm.xlu0 %1070, %v269
        %v1072 = vpop.permute.xlu0 %1071
        %1075 = vset.pattern.permute.xlu0 0
        %1076 = vperm.xlu0 %1075, %v270
        %v1077 = vpop.permute.xlu0 %1076
        %1080 = vset.pattern.permute.xlu0 0
        %1081 = vperm.xlu0 %1080, %v271
        %v1082 = vpop.permute.xlu0 %1081
        %1085 = vset.pattern.permute.xlu0 0
        %1086 = vperm.xlu0 %1085, %v272
        %v1087 = vpop.permute.xlu0 %1086
        %1090 = vset.pattern.permute.xlu0 0
        %1091 = vperm.xlu0 %1090, %v273
        %v1092 = vpop.permute.xlu0 %1091
        %1095 = vset.pattern.permute.xlu0 0
        %1096 = vperm.xlu0 %1095, %v274
        %v1097 = vpop.permute.xlu0 %1096
        %1100 = vset.pattern.permute.xlu0 0
        %1101 = vperm.xlu0 %1100, %v275
        %v1102 = vpop.permute.xlu0 %1101
        %1105 = vset.pattern.permute.xlu0 0
        %1106 = vperm.xlu0 %1105, %v276
        %v1107 = vpop.permute.xlu0 %1106
        %1110 = vset.pattern.permute.xlu0 0
        %1111 = vperm.xlu0 %1110, %v277
        %v1112 = vpop.permute.xlu0 %1111
        %1115 = vset.pattern.permute.xlu0 0
        %1116 = vperm.xlu0 %1115, %v278
        %v1117 = vpop.permute.xlu0 %1116
        %1120 = vset.pattern.permute.xlu0 0
        %1121 = vperm.xlu0 %1120, %v279
        %v1122 = vpop.permute.xlu0 %1121
        %1125 = vset.pattern.permute.xlu0 0
        %1126 = vperm.xlu0 %1125, %v280
        %v1127 = vpop.permute.xlu0 %1126
        %1130 = vset.pattern.permute.xlu0 0
        %1131 = vperm.xlu0 %1130, %v281
        %v1132 = vpop.permute.xlu0 %1131
        %1135 = vset.pattern.permute.xlu0 0
        %1136 = vperm.xlu0 %1135, %v282
        %v1137 = vpop.permute.xlu0 %1136
        %1140 = vset.pattern.permute.xlu0 0
        %1141 = vperm.xlu0 %1140, %v283
        %v1142 = vpop.permute.xlu0 %1141
        %1145 = vset.pattern.permute.xlu0 0
        %1146 = vperm.xlu0 %1145, %v284
        %v1147 = vpop.permute.xlu0 %1146
        %v1149 = vperm.slane %v370, 0
        %v1150 = vmul.f32 %v992, %v1149
        %v1151 = vmul.f32 %v997, %v1149
        %v1152 = vmul.f32 %v1002, %v1149
        %v1153 = vmul.f32 %v1007, %v1149
        %v1154 = vmul.f32 %v1012, %v1149
        %v1155 = vmul.f32 %v1017, %v1149
        %v1156 = vmul.f32 %v1022, %v1149
        %v1157 = vmul.f32 %v1027, %v1149
        %v1158 = vmul.f32 %v1032, %v1149
        %v1159 = vmul.f32 %v1037, %v1149
        %v1160 = vmul.f32 %v1042, %v1149
        %v1161 = vmul.f32 %v1047, %v1149
        %v1162 = vmul.f32 %v1052, %v1149
        %v1163 = vmul.f32 %v1057, %v1149
        %v1164 = vmul.f32 %v1062, %v1149
        %v1165 = vmul.f32 %v1067, %v1149
        %v1166 = vmul.f32 %v1072, %v1149
        %v1167 = vmul.f32 %v1077, %v1149
        %v1168 = vmul.f32 %v1082, %v1149
        %v1169 = vmul.f32 %v1087, %v1149
        %v1170 = vmul.f32 %v1092, %v1149
        %v1171 = vmul.f32 %v1097, %v1149
        %v1172 = vmul.f32 %v1102, %v1149
        %v1173 = vmul.f32 %v1107, %v1149
        %v1174 = vmul.f32 %v1112, %v1149
        %v1175 = vmul.f32 %v1117, %v1149
        %v1176 = vmul.f32 %v1122, %v1149
        %v1177 = vmul.f32 %v1127, %v1149
        %v1178 = vmul.f32 %v1132, %v1149
        %v1179 = vmul.f32 %v1137, %v1149
        %v1180 = vmul.f32 %v1142, %v1149
        %v1181 = vmul.f32 %v1147, %v1149
        %v1182 = vadd.f32 %v957, %v1150
        %v1183 = vadd.f32 %v958, %v1151
        %v1184 = vadd.f32 %v959, %v1152
        %v1185 = vadd.f32 %v960, %v1153
        %v1186 = vadd.f32 %v961, %v1154
        %v1187 = vadd.f32 %v962, %v1155
        %v1188 = vadd.f32 %v963, %v1156
        %v1189 = vadd.f32 %v964, %v1157
        %v1190 = vadd.f32 %v965, %v1158
        %v1191 = vadd.f32 %v966, %v1159
        %v1192 = vadd.f32 %v967, %v1160
        %v1193 = vadd.f32 %v968, %v1161
        %v1194 = vadd.f32 %v969, %v1162
        %v1195 = vadd.f32 %v970, %v1163
        %v1196 = vadd.f32 %v971, %v1164
        %v1197 = vadd.f32 %v972, %v1165
        %v1198 = vadd.f32 %v973, %v1166
        %v1199 = vadd.f32 %v974, %v1167
        %v1200 = vadd.f32 %v975, %v1168
        %v1201 = vadd.f32 %v976, %v1169
        %v1202 = vadd.f32 %v977, %v1170
        %v1203 = vadd.f32 %v978, %v1171
        %v1204 = vadd.f32 %v979, %v1172
        %v1205 = vadd.f32 %v980, %v1173
        %v1206 = vadd.f32 %v981, %v1174
        %v1207 = vadd.f32 %v982, %v1175
        %v1208 = vadd.f32 %v983, %v1176
        %v1209 = vadd.f32 %v984, %v1177
        %v1210 = vadd.f32 %v985, %v1178
        %v1211 = vadd.f32 %v986, %v1179
        %v1212 = vadd.f32 %v987, %v1180
        %v1213 = vadd.f32 %v988, %v1181
        %1214 = vset.pattern.permute.xlu0 1
        %1215 = vperm.xlu0 %1214, %v253
        %v1216 = vpop.permute.xlu0 %1215
        %1218 = vset.pattern.permute.xlu0 1
        %1219 = vperm.xlu0 %1218, %v254
        %v1220 = vpop.permute.xlu0 %1219
        %1222 = vset.pattern.permute.xlu0 1
        %1223 = vperm.xlu0 %1222, %v255
        %v1224 = vpop.permute.xlu0 %1223
        %1226 = vset.pattern.permute.xlu0 1
        %1227 = vperm.xlu0 %1226, %v256
        %v1228 = vpop.permute.xlu0 %1227
        %1230 = vset.pattern.permute.xlu0 1
        %1231 = vperm.xlu0 %1230, %v257
        %v1232 = vpop.permute.xlu0 %1231
        %1234 = vset.pattern.permute.xlu0 1
        %1235 = vperm.xlu0 %1234, %v258
        %v1236 = vpop.permute.xlu0 %1235
        %1238 = vset.pattern.permute.xlu0 1
        %1239 = vperm.xlu0 %1238, %v259
        %v1240 = vpop.permute.xlu0 %1239
        %1242 = vset.pattern.permute.xlu0 1
        %1243 = vperm.xlu0 %1242, %v260
        %v1244 = vpop.permute.xlu0 %1243
        %1246 = vset.pattern.permute.xlu0 1
        %1247 = vperm.xlu0 %1246, %v261
        %v1248 = vpop.permute.xlu0 %1247
        %1250 = vset.pattern.permute.xlu0 1
        %1251 = vperm.xlu0 %1250, %v262
        %v1252 = vpop.permute.xlu0 %1251
        %1254 = vset.pattern.permute.xlu0 1
        %1255 = vperm.xlu0 %1254, %v263
        %v1256 = vpop.permute.xlu0 %1255
        %1258 = vset.pattern.permute.xlu0 1
        %1259 = vperm.xlu0 %1258, %v264
        %v1260 = vpop.permute.xlu0 %1259
        %1262 = vset.pattern.permute.xlu0 1
        %1263 = vperm.xlu0 %1262, %v265
        %v1264 = vpop.permute.xlu0 %1263
        %1266 = vset.pattern.permute.xlu0 1
        %1267 = vperm.xlu0 %1266, %v266
        %v1268 = vpop.permute.xlu0 %1267
        %1270 = vset.pattern.permute.xlu0 1
        %1271 = vperm.xlu0 %1270, %v267
        %v1272 = vpop.permute.xlu0 %1271
        %1274 = vset.pattern.permute.xlu0 1
        %1275 = vperm.xlu0 %1274, %v268
        %v1276 = vpop.permute.xlu0 %1275
        %1278 = vset.pattern.permute.xlu0 1
        %1279 = vperm.xlu0 %1278, %v269
        %v1280 = vpop.permute.xlu0 %1279
        %1282 = vset.pattern.permute.xlu0 1
        %1283 = vperm.xlu0 %1282, %v270
        %v1284 = vpop.permute.xlu0 %1283
        %1286 = vset.pattern.permute.xlu0 1
        %1287 = vperm.xlu0 %1286, %v271
        %v1288 = vpop.permute.xlu0 %1287
        %1290 = vset.pattern.permute.xlu0 1
        %1291 = vperm.xlu0 %1290, %v272
        %v1292 = vpop.permute.xlu0 %1291
        %1294 = vset.pattern.permute.xlu0 1
        %1295 = vperm.xlu0 %1294, %v273
        %v1296 = vpop.permute.xlu0 %1295
        %1298 = vset.pattern.permute.xlu0 1
        %1299 = vperm.xlu0 %1298, %v274
        %v1300 = vpop.permute.xlu0 %1299
        %1302 = vset.pattern.permute.xlu0 1
        %1303 = vperm.xlu0 %1302, %v275
        %v1304 = vpop.permute.xlu0 %1303
        %1306 = vset.pattern.permute.xlu0 1
        %1307 = vperm.xlu0 %1306, %v276
        %v1308 = vpop.permute.xlu0 %1307
        %1310 = vset.pattern.permute.xlu0 1
        %1311 = vperm.xlu0 %1310, %v277
        %v1312 = vpop.permute.xlu0 %1311
        %1314 = vset.pattern.permute.xlu0 1
        %1315 = vperm.xlu0 %1314, %v278
        %v1316 = vpop.permute.xlu0 %1315
        %1318 = vset.pattern.permute.xlu0 1
        %1319 = vperm.xlu0 %1318, %v279
        %v1320 = vpop.permute.xlu0 %1319
        %1322 = vset.pattern.permute.xlu0 1
        %1323 = vperm.xlu0 %1322, %v280
        %v1324 = vpop.permute.xlu0 %1323
        %1326 = vset.pattern.permute.xlu0 1
        %1327 = vperm.xlu0 %1326, %v281
        %v1328 = vpop.permute.xlu0 %1327
        %1330 = vset.pattern.permute.xlu0 1
        %1331 = vperm.xlu0 %1330, %v282
        %v1332 = vpop.permute.xlu0 %1331
        %1334 = vset.pattern.permute.xlu0 1
        %1335 = vperm.xlu0 %1334, %v283
        %v1336 = vpop.permute.xlu0 %1335
        %1338 = vset.pattern.permute.xlu0 1
        %1339 = vperm.xlu0 %1338, %v284
        %v1340 = vpop.permute.xlu0 %1339
        %v1342 = vperm.slane %v370, 1
        %v1343 = vmul.f32 %v1216, %v1342
        %v1344 = vmul.f32 %v1220, %v1342
        %v1345 = vmul.f32 %v1224, %v1342
        %v1346 = vmul.f32 %v1228, %v1342
        %v1347 = vmul.f32 %v1232, %v1342
        %v1348 = vmul.f32 %v1236, %v1342
        %v1349 = vmul.f32 %v1240, %v1342
        %v1350 = vmul.f32 %v1244, %v1342
        %v1351 = vmul.f32 %v1248, %v1342
        %v1352 = vmul.f32 %v1252, %v1342
        %v1353 = vmul.f32 %v1256, %v1342
        %v1354 = vmul.f32 %v1260, %v1342
        %v1355 = vmul.f32 %v1264, %v1342
        %v1356 = vmul.f32 %v1268, %v1342
        %v1357 = vmul.f32 %v1272, %v1342
        %v1358 = vmul.f32 %v1276, %v1342
        %v1359 = vmul.f32 %v1280, %v1342
        %v1360 = vmul.f32 %v1284, %v1342
        %v1361 = vmul.f32 %v1288, %v1342
        %v1362 = vmul.f32 %v1292, %v1342
        %v1363 = vmul.f32 %v1296, %v1342
        %v1364 = vmul.f32 %v1300, %v1342
        %v1365 = vmul.f32 %v1304, %v1342
        %v1366 = vmul.f32 %v1308, %v1342
        %v1367 = vmul.f32 %v1312, %v1342
        %v1368 = vmul.f32 %v1316, %v1342
        %v1369 = vmul.f32 %v1320, %v1342
        %v1370 = vmul.f32 %v1324, %v1342
        %v1371 = vmul.f32 %v1328, %v1342
        %v1372 = vmul.f32 %v1332, %v1342
        %v1373 = vmul.f32 %v1336, %v1342
        %v1374 = vmul.f32 %v1340, %v1342
        %v1375 = vadd.f32 %v1182, %v1343
        %v1376 = vadd.f32 %v1183, %v1344
        %v1377 = vadd.f32 %v1184, %v1345
        %v1378 = vadd.f32 %v1185, %v1346
        %v1379 = vadd.f32 %v1186, %v1347
        %v1380 = vadd.f32 %v1187, %v1348
        %v1381 = vadd.f32 %v1188, %v1349
        %v1382 = vadd.f32 %v1189, %v1350
        %v1383 = vadd.f32 %v1190, %v1351
        %v1384 = vadd.f32 %v1191, %v1352
        %v1385 = vadd.f32 %v1192, %v1353
        %v1386 = vadd.f32 %v1193, %v1354
        %v1387 = vadd.f32 %v1194, %v1355
        %v1388 = vadd.f32 %v1195, %v1356
        %v1389 = vadd.f32 %v1196, %v1357
        %v1390 = vadd.f32 %v1197, %v1358
        %v1391 = vadd.f32 %v1198, %v1359
        %v1392 = vadd.f32 %v1199, %v1360
        %v1393 = vadd.f32 %v1200, %v1361
        %v1394 = vadd.f32 %v1201, %v1362
        %v1395 = vadd.f32 %v1202, %v1363
        %v1396 = vadd.f32 %v1203, %v1364
        %v1397 = vadd.f32 %v1204, %v1365
        %v1398 = vadd.f32 %v1205, %v1366
        %v1399 = vadd.f32 %v1206, %v1367
        %v1400 = vadd.f32 %v1207, %v1368
        %v1401 = vadd.f32 %v1208, %v1369
        %v1402 = vadd.f32 %v1209, %v1370
        %v1403 = vadd.f32 %v1210, %v1371
        %v1404 = vadd.f32 %v1211, %v1372
        %v1405 = vadd.f32 %v1212, %v1373
        %v1406 = vadd.f32 %v1213, %v1374
        %1407 = vset.pattern.permute.xlu0 2
        %1408 = vperm.xlu0 %1407, %v253
        %v1409 = vpop.permute.xlu0 %1408
        %1411 = vset.pattern.permute.xlu0 2
        %1412 = vperm.xlu0 %1411, %v254
        %v1413 = vpop.permute.xlu0 %1412
        %1415 = vset.pattern.permute.xlu0 2
        %1416 = vperm.xlu0 %1415, %v255
        %v1417 = vpop.permute.xlu0 %1416
        %1419 = vset.pattern.permute.xlu0 2
        %1420 = vperm.xlu0 %1419, %v256
        %v1421 = vpop.permute.xlu0 %1420
        %1423 = vset.pattern.permute.xlu0 2
        %1424 = vperm.xlu0 %1423, %v257
        %v1425 = vpop.permute.xlu0 %1424
        %1427 = vset.pattern.permute.xlu0 2
        %1428 = vperm.xlu0 %1427, %v258
        %v1429 = vpop.permute.xlu0 %1428
        %1431 = vset.pattern.permute.xlu0 2
        %1432 = vperm.xlu0 %1431, %v259
        %v1433 = vpop.permute.xlu0 %1432
        %1435 = vset.pattern.permute.xlu0 2
        %1436 = vperm.xlu0 %1435, %v260
        %v1437 = vpop.permute.xlu0 %1436
        %1439 = vset.pattern.permute.xlu0 2
        %1440 = vperm.xlu0 %1439, %v261
        %v1441 = vpop.permute.xlu0 %1440
        %1443 = vset.pattern.permute.xlu0 2
        %1444 = vperm.xlu0 %1443, %v262
        %v1445 = vpop.permute.xlu0 %1444
        %1447 = vset.pattern.permute.xlu0 2
        %1448 = vperm.xlu0 %1447, %v263
        %v1449 = vpop.permute.xlu0 %1448
        %1451 = vset.pattern.permute.xlu0 2
        %1452 = vperm.xlu0 %1451, %v264
        %v1453 = vpop.permute.xlu0 %1452
        %1455 = vset.pattern.permute.xlu0 2
        %1456 = vperm.xlu0 %1455, %v265
        %v1457 = vpop.permute.xlu0 %1456
        %1459 = vset.pattern.permute.xlu0 2
        %1460 = vperm.xlu0 %1459, %v266
        %v1461 = vpop.permute.xlu0 %1460
        %1463 = vset.pattern.permute.xlu0 2
        %1464 = vperm.xlu0 %1463, %v267
        %v1465 = vpop.permute.xlu0 %1464
        %1467 = vset.pattern.permute.xlu0 2
        %1468 = vperm.xlu0 %1467, %v268
        %v1469 = vpop.permute.xlu0 %1468
        %1471 = vset.pattern.permute.xlu0 2
        %1472 = vperm.xlu0 %1471, %v269
        %v1473 = vpop.permute.xlu0 %1472
        %1475 = vset.pattern.permute.xlu0 2
        %1476 = vperm.xlu0 %1475, %v270
        %v1477 = vpop.permute.xlu0 %1476
        %1479 = vset.pattern.permute.xlu0 2
        %1480 = vperm.xlu0 %1479, %v271
        %v1481 = vpop.permute.xlu0 %1480
        %1483 = vset.pattern.permute.xlu0 2
        %1484 = vperm.xlu0 %1483, %v272
        %v1485 = vpop.permute.xlu0 %1484
        %1487 = vset.pattern.permute.xlu0 2
        %1488 = vperm.xlu0 %1487, %v273
        %v1489 = vpop.permute.xlu0 %1488
        %1491 = vset.pattern.permute.xlu0 2
        %1492 = vperm.xlu0 %1491, %v274
        %v1493 = vpop.permute.xlu0 %1492
        %1495 = vset.pattern.permute.xlu0 2
        %1496 = vperm.xlu0 %1495, %v275
        %v1497 = vpop.permute.xlu0 %1496
        %1499 = vset.pattern.permute.xlu0 2
        %1500 = vperm.xlu0 %1499, %v276
        %v1501 = vpop.permute.xlu0 %1500
        %1503 = vset.pattern.permute.xlu0 2
        %1504 = vperm.xlu0 %1503, %v277
        %v1505 = vpop.permute.xlu0 %1504
        %1507 = vset.pattern.permute.xlu0 2
        %1508 = vperm.xlu0 %1507, %v278
        %v1509 = vpop.permute.xlu0 %1508
        %1511 = vset.pattern.permute.xlu0 2
        %1512 = vperm.xlu0 %1511, %v279
        %v1513 = vpop.permute.xlu0 %1512
        %1515 = vset.pattern.permute.xlu0 2
        %1516 = vperm.xlu0 %1515, %v280
        %v1517 = vpop.permute.xlu0 %1516
        %1519 = vset.pattern.permute.xlu0 2
        %1520 = vperm.xlu0 %1519, %v281
        %v1521 = vpop.permute.xlu0 %1520
        %1523 = vset.pattern.permute.xlu0 2
        %1524 = vperm.xlu0 %1523, %v282
        %v1525 = vpop.permute.xlu0 %1524
        %1527 = vset.pattern.permute.xlu0 2
        %1528 = vperm.xlu0 %1527, %v283
        %v1529 = vpop.permute.xlu0 %1528
        %1531 = vset.pattern.permute.xlu0 2
        %1532 = vperm.xlu0 %1531, %v284
        %v1533 = vpop.permute.xlu0 %1532
        %v1535 = vperm.slane %v370, 2
        %v1536 = vmul.f32 %v1409, %v1535
        %v1537 = vmul.f32 %v1413, %v1535
        %v1538 = vmul.f32 %v1417, %v1535
        %v1539 = vmul.f32 %v1421, %v1535
        %v1540 = vmul.f32 %v1425, %v1535
        %v1541 = vmul.f32 %v1429, %v1535
        %v1542 = vmul.f32 %v1433, %v1535
        %v1543 = vmul.f32 %v1437, %v1535
        %v1544 = vmul.f32 %v1441, %v1535
        %v1545 = vmul.f32 %v1445, %v1535
        %v1546 = vmul.f32 %v1449, %v1535
        %v1547 = vmul.f32 %v1453, %v1535
        %v1548 = vmul.f32 %v1457, %v1535
        %v1549 = vmul.f32 %v1461, %v1535
        %v1550 = vmul.f32 %v1465, %v1535
        %v1551 = vmul.f32 %v1469, %v1535
        %v1552 = vmul.f32 %v1473, %v1535
        %v1553 = vmul.f32 %v1477, %v1535
        %v1554 = vmul.f32 %v1481, %v1535
        %v1555 = vmul.f32 %v1485, %v1535
        %v1556 = vmul.f32 %v1489, %v1535
        %v1557 = vmul.f32 %v1493, %v1535
        %v1558 = vmul.f32 %v1497, %v1535
        %v1559 = vmul.f32 %v1501, %v1535
        %v1560 = vmul.f32 %v1505, %v1535
        %v1561 = vmul.f32 %v1509, %v1535
        %v1562 = vmul.f32 %v1513, %v1535
        %v1563 = vmul.f32 %v1517, %v1535
        %v1564 = vmul.f32 %v1521, %v1535
        %v1565 = vmul.f32 %v1525, %v1535
        %v1566 = vmul.f32 %v1529, %v1535
        %v1567 = vmul.f32 %v1533, %v1535
        %v1568 = vadd.f32 %v1375, %v1536
        %v1569 = vadd.f32 %v1376, %v1537
        %v1570 = vadd.f32 %v1377, %v1538
        %v1571 = vadd.f32 %v1378, %v1539
        %v1572 = vadd.f32 %v1379, %v1540
        %v1573 = vadd.f32 %v1380, %v1541
        %v1574 = vadd.f32 %v1381, %v1542
        %v1575 = vadd.f32 %v1382, %v1543
        %v1576 = vadd.f32 %v1383, %v1544
        %v1577 = vadd.f32 %v1384, %v1545
        %v1578 = vadd.f32 %v1385, %v1546
        %v1579 = vadd.f32 %v1386, %v1547
        %v1580 = vadd.f32 %v1387, %v1548
        %v1581 = vadd.f32 %v1388, %v1549
        %v1582 = vadd.f32 %v1389, %v1550
        %v1583 = vadd.f32 %v1390, %v1551
        %v1584 = vadd.f32 %v1391, %v1552
        %v1585 = vadd.f32 %v1392, %v1553
        %v1586 = vadd.f32 %v1393, %v1554
        %v1587 = vadd.f32 %v1394, %v1555
        %v1588 = vadd.f32 %v1395, %v1556
        %v1589 = vadd.f32 %v1396, %v1557
        %v1590 = vadd.f32 %v1397, %v1558
        %v1591 = vadd.f32 %v1398, %v1559
        %v1592 = vadd.f32 %v1399, %v1560
        %v1593 = vadd.f32 %v1400, %v1561
        %v1594 = vadd.f32 %v1401, %v1562
        %v1595 = vadd.f32 %v1402, %v1563
        %v1596 = vadd.f32 %v1403, %v1564
        %v1597 = vadd.f32 %v1404, %v1565
        %v1598 = vadd.f32 %v1405, %v1566
        %v1599 = vadd.f32 %v1406, %v1567
        %1601 = vset.pattern.permute.xlu0 0
        %1602 = vperm.xlu0 %1601, %v203
        %v1603 = vpop.permute.xlu0 %1602
        %1606 = vset.pattern.permute.xlu0 0
        %1607 = vperm.xlu0 %1606, %v206
        %v1608 = vpop.permute.xlu0 %1607
        %1611 = vset.pattern.permute.xlu0 0
        %1612 = vperm.xlu0 %1611, %v209
        %v1613 = vpop.permute.xlu0 %1612
        %1616 = vset.pattern.permute.xlu0 0
        %1617 = vperm.xlu0 %1616, %v212
        %v1618 = vpop.permute.xlu0 %1617
        %1621 = vset.pattern.permute.xlu0 0
        %1622 = vperm.xlu0 %1621, %v215
        %v1623 = vpop.permute.xlu0 %1622
        %1626 = vset.pattern.permute.xlu0 0
        %1627 = vperm.xlu0 %1626, %v218
        %v1628 = vpop.permute.xlu0 %1627
        %1631 = vset.pattern.permute.xlu0 0
        %1632 = vperm.xlu0 %1631, %v221
        %v1633 = vpop.permute.xlu0 %1632
        %1636 = vset.pattern.permute.xlu0 0
        %1637 = vperm.xlu0 %1636, %v224
        %v1638 = vpop.permute.xlu0 %1637
        %1641 = vset.pattern.permute.xlu0 0
        %1642 = vperm.xlu0 %1641, %v227
        %v1643 = vpop.permute.xlu0 %1642
        %1646 = vset.pattern.permute.xlu0 0
        %1647 = vperm.xlu0 %1646, %v230
        %v1648 = vpop.permute.xlu0 %1647
        %1651 = vset.pattern.permute.xlu0 0
        %1652 = vperm.xlu0 %1651, %v233
        %v1653 = vpop.permute.xlu0 %1652
        %1656 = vset.pattern.permute.xlu0 0
        %1657 = vperm.xlu0 %1656, %v236
        %v1658 = vpop.permute.xlu0 %1657
        %1661 = vset.pattern.permute.xlu0 0
        %1662 = vperm.xlu0 %1661, %v239
        %v1663 = vpop.permute.xlu0 %1662
        %1666 = vset.pattern.permute.xlu0 0
        %1667 = vperm.xlu0 %1666, %v242
        %v1668 = vpop.permute.xlu0 %1667
        %1671 = vset.pattern.permute.xlu0 0
        %1672 = vperm.xlu0 %1671, %v245
        %v1673 = vpop.permute.xlu0 %1672
        %1676 = vset.pattern.permute.xlu0 0
        %1677 = vperm.xlu0 %1676, %v248
        %v1678 = vpop.permute.xlu0 %1677
        %v1680 = vperm.slane %v371, 0
        %v1681 = vmul.f32 %v381, %v1680
        %v1682 = vmul.f32 %v386, %v1680
        %v1683 = vmul.f32 %v1603, %v1680
        %v1684 = vmul.f32 %v391, %v1680
        %v1685 = vmul.f32 %v396, %v1680
        %v1686 = vmul.f32 %v1608, %v1680
        %v1687 = vmul.f32 %v401, %v1680
        %v1688 = vmul.f32 %v406, %v1680
        %v1689 = vmul.f32 %v1613, %v1680
        %v1690 = vmul.f32 %v411, %v1680
        %v1691 = vmul.f32 %v416, %v1680
        %v1692 = vmul.f32 %v1618, %v1680
        %v1693 = vmul.f32 %v421, %v1680
        %v1694 = vmul.f32 %v426, %v1680
        %v1695 = vmul.f32 %v1623, %v1680
        %v1696 = vmul.f32 %v431, %v1680
        %v1697 = vmul.f32 %v436, %v1680
        %v1698 = vmul.f32 %v1628, %v1680
        %v1699 = vmul.f32 %v441, %v1680
        %v1700 = vmul.f32 %v446, %v1680
        %v1701 = vmul.f32 %v1633, %v1680
        %v1702 = vmul.f32 %v451, %v1680
        %v1703 = vmul.f32 %v456, %v1680
        %v1704 = vmul.f32 %v1638, %v1680
        %v1705 = vmul.f32 %v461, %v1680
        %v1706 = vmul.f32 %v466, %v1680
        %v1707 = vmul.f32 %v1643, %v1680
        %v1708 = vmul.f32 %v471, %v1680
        %v1709 = vmul.f32 %v476, %v1680
        %v1710 = vmul.f32 %v1648, %v1680
        %v1711 = vmul.f32 %v481, %v1680
        %v1712 = vmul.f32 %v486, %v1680
        %v1713 = vmul.f32 %v1653, %v1680
        %v1714 = vmul.f32 %v491, %v1680
        %v1715 = vmul.f32 %v496, %v1680
        %v1716 = vmul.f32 %v1658, %v1680
        %v1717 = vmul.f32 %v501, %v1680
        %v1718 = vmul.f32 %v506, %v1680
        %v1719 = vmul.f32 %v1663, %v1680
        %v1720 = vmul.f32 %v511, %v1680
        %v1721 = vmul.f32 %v516, %v1680
        %v1722 = vmul.f32 %v1668, %v1680
        %v1723 = vmul.f32 %v521, %v1680
        %v1724 = vmul.f32 %v526, %v1680
        %v1725 = vmul.f32 %v1673, %v1680
        %v1726 = vmul.f32 %v531, %v1680
        %v1727 = vmul.f32 %v536, %v1680
        %v1728 = vmul.f32 %v1678, %v1680
        %vm1777 = vcmask 1046528
        %v1778 = vrot.slane %v1681, 1
        %v1779 = vrot.slane %v1682, 1
        %v1780 = vsel %vm1777, %v1778, %v1779
        %v1781 = vrot.slane %v1683, 1
        %v1782 = vsel %vm1777, %v1779, %v1781
        %v1783 = vrot.slane %v1684, 1
        %v1784 = vrot.slane %v1685, 1
        %v1785 = vsel %vm1777, %v1783, %v1784
        %v1786 = vrot.slane %v1686, 1
        %v1787 = vsel %vm1777, %v1784, %v1786
        %v1788 = vrot.slane %v1687, 1
        %v1789 = vrot.slane %v1688, 1
        %v1790 = vsel %vm1777, %v1788, %v1789
        %v1791 = vrot.slane %v1689, 1
        %v1792 = vsel %vm1777, %v1789, %v1791
        %v1793 = vrot.slane %v1690, 1
        %v1794 = vrot.slane %v1691, 1
        %v1795 = vsel %vm1777, %v1793, %v1794
        %v1796 = vrot.slane %v1692, 1
        %v1797 = vsel %vm1777, %v1794, %v1796
        %v1798 = vrot.slane %v1693, 1
        %v1799 = vrot.slane %v1694, 1
        %v1800 = vsel %vm1777, %v1798, %v1799
        %v1801 = vrot.slane %v1695, 1
        %v1802 = vsel %vm1777, %v1799, %v1801
        %v1803 = vrot.slane %v1696, 1
        %v1804 = vrot.slane %v1697, 1
        %v1805 = vsel %vm1777, %v1803, %v1804
        %v1806 = vrot.slane %v1698, 1
        %v1807 = vsel %vm1777, %v1804, %v1806
        %v1808 = vrot.slane %v1699, 1
        %v1809 = vrot.slane %v1700, 1
        %v1810 = vsel %vm1777, %v1808, %v1809
        %v1811 = vrot.slane %v1701, 1
        %v1812 = vsel %vm1777, %v1809, %v1811
        %v1813 = vrot.slane %v1702, 1
        %v1814 = vrot.slane %v1703, 1
        %v1815 = vsel %vm1777, %v1813, %v1814
        %v1816 = vrot.slane %v1704, 1
        %v1817 = vsel %vm1777, %v1814, %v1816
        %v1818 = vrot.slane %v1705, 1
        %v1819 = vrot.slane %v1706, 1
        %v1820 = vsel %vm1777, %v1818, %v1819
        %v1821 = vrot.slane %v1707, 1
        %v1822 = vsel %vm1777, %v1819, %v1821
        %v1823 = vrot.slane %v1708, 1
        %v1824 = vrot.slane %v1709, 1
        %v1825 = vsel %vm1777, %v1823, %v1824
        %v1826 = vrot.slane %v1710, 1
        %v1827 = vsel %vm1777, %v1824, %v1826
        %v1828 = vrot.slane %v1711, 1
        %v1829 = vrot.slane %v1712, 1
        %v1830 = vsel %vm1777, %v1828, %v1829
        %v1831 = vrot.slane %v1713, 1
        %v1832 = vsel %vm1777, %v1829, %v1831
        %v1833 = vrot.slane %v1714, 1
        %v1834 = vrot.slane %v1715, 1
        %v1835 = vsel %vm1777, %v1833, %v1834
        %v1836 = vrot.slane %v1716, 1
        %v1837 = vsel %vm1777, %v1834, %v1836
        %v1838 = vrot.slane %v1717, 1
        %v1839 = vrot.slane %v1718, 1
        %v1840 = vsel %vm1777, %v1838, %v1839
        %v1841 = vrot.slane %v1719, 1
        %v1842 = vsel %vm1777, %v1839, %v1841
        %v1843 = vrot.slane %v1720, 1
        %v1844 = vrot.slane %v1721, 1
        %v1845 = vsel %vm1777, %v1843, %v1844
        %v1846 = vrot.slane %v1722, 1
        %v1847 = vsel %vm1777, %v1844, %v1846
        %v1848 = vrot.slane %v1723, 1
        %v1849 = vrot.slane %v1724, 1
        %v1850 = vsel %vm1777, %v1848, %v1849
        %v1851 = vrot.slane %v1725, 1
        %v1852 = vsel %vm1777, %v1849, %v1851
        %v1853 = vrot.slane %v1726, 1
        %v1854 = vrot.slane %v1727, 1
        %v1855 = vsel %vm1777, %v1853, %v1854
        %v1856 = vrot.slane %v1728, 1
        %v1857 = vsel %vm1777, %v1854, %v1856
        %v1890 = vadd.f32 %v1568, %v1780
        %v1891 = vadd.f32 %v1569, %v1782
        %v1892 = vadd.f32 %v1570, %v1785
        %v1893 = vadd.f32 %v1571, %v1787
        %v1894 = vadd.f32 %v1572, %v1790
        %v1895 = vadd.f32 %v1573, %v1792
        %v1896 = vadd.f32 %v1574, %v1795
        %v1897 = vadd.f32 %v1575, %v1797
        %v1898 = vadd.f32 %v1576, %v1800
        %v1899 = vadd.f32 %v1577, %v1802
        %v1900 = vadd.f32 %v1578, %v1805
        %v1901 = vadd.f32 %v1579, %v1807
        %v1902 = vadd.f32 %v1580, %v1810
        %v1903 = vadd.f32 %v1581, %v1812
        %v1904 = vadd.f32 %v1582, %v1815
        %v1905 = vadd.f32 %v1583, %v1817
        %v1906 = vadd.f32 %v1584, %v1820
        %v1907 = vadd.f32 %v1585, %v1822
        %v1908 = vadd.f32 %v1586, %v1825
        %v1909 = vadd.f32 %v1587, %v1827
        %v1910 = vadd.f32 %v1588, %v1830
        %v1911 = vadd.f32 %v1589, %v1832
        %v1912 = vadd.f32 %v1590, %v1835
        %v1913 = vadd.f32 %v1591, %v1837
        %v1914 = vadd.f32 %v1592, %v1840
        %v1915 = vadd.f32 %v1593, %v1842
        %v1916 = vadd.f32 %v1594, %v1845
        %v1917 = vadd.f32 %v1595, %v1847
        %v1918 = vadd.f32 %v1596, %v1850
        %v1919 = vadd.f32 %v1597, %v1852
        %v1920 = vadd.f32 %v1598, %v1855
        %v1921 = vadd.f32 %v1599, %v1857
        %1922 = vset.pattern.permute.xlu0 1
        %1923 = vperm.xlu0 %1922, %v203
        %v1924 = vpop.permute.xlu0 %1923
        %1926 = vset.pattern.permute.xlu0 1
        %1927 = vperm.xlu0 %1926, %v206
        %v1928 = vpop.permute.xlu0 %1927
        %1930 = vset.pattern.permute.xlu0 1
        %1931 = vperm.xlu0 %1930, %v209
        %v1932 = vpop.permute.xlu0 %1931
        %1934 = vset.pattern.permute.xlu0 1
        %1935 = vperm.xlu0 %1934, %v212
        %v1936 = vpop.permute.xlu0 %1935
        %1938 = vset.pattern.permute.xlu0 1
        %1939 = vperm.xlu0 %1938, %v215
        %v1940 = vpop.permute.xlu0 %1939
        %1942 = vset.pattern.permute.xlu0 1
        %1943 = vperm.xlu0 %1942, %v218
        %v1944 = vpop.permute.xlu0 %1943
        %1946 = vset.pattern.permute.xlu0 1
        %1947 = vperm.xlu0 %1946, %v221
        %v1948 = vpop.permute.xlu0 %1947
        %1950 = vset.pattern.permute.xlu0 1
        %1951 = vperm.xlu0 %1950, %v224
        %v1952 = vpop.permute.xlu0 %1951
        %1954 = vset.pattern.permute.xlu0 1
        %1955 = vperm.xlu0 %1954, %v227
        %v1956 = vpop.permute.xlu0 %1955
        %1958 = vset.pattern.permute.xlu0 1
        %1959 = vperm.xlu0 %1958, %v230
        %v1960 = vpop.permute.xlu0 %1959
        %1962 = vset.pattern.permute.xlu0 1
        %1963 = vperm.xlu0 %1962, %v233
        %v1964 = vpop.permute.xlu0 %1963
        %1966 = vset.pattern.permute.xlu0 1
        %1967 = vperm.xlu0 %1966, %v236
        %v1968 = vpop.permute.xlu0 %1967
        %1970 = vset.pattern.permute.xlu0 1
        %1971 = vperm.xlu0 %1970, %v239
        %v1972 = vpop.permute.xlu0 %1971
        %1974 = vset.pattern.permute.xlu0 1
        %1975 = vperm.xlu0 %1974, %v242
        %v1976 = vpop.permute.xlu0 %1975
        %1978 = vset.pattern.permute.xlu0 1
        %1979 = vperm.xlu0 %1978, %v245
        %v1980 = vpop.permute.xlu0 %1979
        %1982 = vset.pattern.permute.xlu0 1
        %1983 = vperm.xlu0 %1982, %v248
        %v1984 = vpop.permute.xlu0 %1983
        %v1986 = vperm.slane %v371, 1
        %v1987 = vmul.f32 %v605, %v1986
        %v1988 = vmul.f32 %v609, %v1986
        %v1989 = vmul.f32 %v1924, %v1986
        %v1990 = vmul.f32 %v613, %v1986
        %v1991 = vmul.f32 %v617, %v1986
        %v1992 = vmul.f32 %v1928, %v1986
        %v1993 = vmul.f32 %v621, %v1986
        %v1994 = vmul.f32 %v625, %v1986
        %v1995 = vmul.f32 %v1932, %v1986
        %v1996 = vmul.f32 %v629, %v1986
        %v1997 = vmul.f32 %v633, %v1986
        %v1998 = vmul.f32 %v1936, %v1986
        %v1999 = vmul.f32 %v637, %v1986
        %v2000 = vmul.f32 %v641, %v1986
        %v2001 = vmul.f32 %v1940, %v1986
        %v2002 = vmul.f32 %v645, %v1986
        %v2003 = vmul.f32 %v649, %v1986
        %v2004 = vmul.f32 %v1944, %v1986
        %v2005 = vmul.f32 %v653, %v1986
        %v2006 = vmul.f32 %v657, %v1986
        %v2007 = vmul.f32 %v1948, %v1986
        %v2008 = vmul.f32 %v661, %v1986
        %v2009 = vmul.f32 %v665, %v1986
        %v2010 = vmul.f32 %v1952, %v1986
        %v2011 = vmul.f32 %v669, %v1986
        %v2012 = vmul.f32 %v673, %v1986
        %v2013 = vmul.f32 %v1956, %v1986
        %v2014 = vmul.f32 %v677, %v1986
        %v2015 = vmul.f32 %v681, %v1986
        %v2016 = vmul.f32 %v1960, %v1986
        %v2017 = vmul.f32 %v685, %v1986
        %v2018 = vmul.f32 %v689, %v1986
        %v2019 = vmul.f32 %v1964, %v1986
        %v2020 = vmul.f32 %v693, %v1986
        %v2021 = vmul.f32 %v697, %v1986
        %v2022 = vmul.f32 %v1968, %v1986
        %v2023 = vmul.f32 %v701, %v1986
        %v2024 = vmul.f32 %v705, %v1986
        %v2025 = vmul.f32 %v1972, %v1986
        %v2026 = vmul.f32 %v709, %v1986
        %v2027 = vmul.f32 %v713, %v1986
        %v2028 = vmul.f32 %v1976, %v1986
        %v2029 = vmul.f32 %v717, %v1986
        %v2030 = vmul.f32 %v721, %v1986
        %v2031 = vmul.f32 %v1980, %v1986
        %v2032 = vmul.f32 %v725, %v1986
        %v2033 = vmul.f32 %v729, %v1986
        %v2034 = vmul.f32 %v1984, %v1986
        %v2083 = vrot.slane %v1987, 1
        %v2084 = vrot.slane %v1988, 1
        %v2085 = vsel %vm1777, %v2083, %v2084
        %v2086 = vrot.slane %v1989, 1
        %v2087 = vsel %vm1777, %v2084, %v2086
        %v2088 = vrot.slane %v1990, 1
        %v2089 = vrot.slane %v1991, 1
        %v2090 = vsel %vm1777, %v2088, %v2089
        %v2091 = vrot.slane %v1992, 1
        %v2092 = vsel %vm1777, %v2089, %v2091
        %v2093 = vrot.slane %v1993, 1
        %v2094 = vrot.slane %v1994, 1
        %v2095 = vsel %vm1777, %v2093, %v2094
        %v2096 = vrot.slane %v1995, 1
        %v2097 = vsel %vm1777, %v2094, %v2096
        %v2098 = vrot.slane %v1996, 1
        %v2099 = vrot.slane %v1997, 1
        %v2100 = vsel %vm1777, %v2098, %v2099
        %v2101 = vrot.slane %v1998, 1
        %v2102 = vsel %vm1777, %v2099, %v2101
        %v2103 = vrot.slane %v1999, 1
        %v2104 = vrot.slane %v2000, 1
        %v2105 = vsel %vm1777, %v2103, %v2104
        %v2106 = vrot.slane %v2001, 1
        %v2107 = vsel %vm1777, %v2104, %v2106
        %v2108 = vrot.slane %v2002, 1
        %v2109 = vrot.slane %v2003, 1
        %v2110 = vsel %vm1777, %v2108, %v2109
        %v2111 = vrot.slane %v2004, 1
        %v2112 = vsel %vm1777, %v2109, %v2111
        %v2113 = vrot.slane %v2005, 1
        %v2114 = vrot.slane %v2006, 1
        %v2115 = vsel %vm1777, %v2113, %v2114
        %v2116 = vrot.slane %v2007, 1
        %v2117 = vsel %vm1777, %v2114, %v2116
        %v2118 = vrot.slane %v2008, 1
        %v2119 = vrot.slane %v2009, 1
        %v2120 = vsel %vm1777, %v2118, %v2119
        %v2121 = vrot.slane %v2010, 1
        %v2122 = vsel %vm1777, %v2119, %v2121
        %v2123 = vrot.slane %v2011, 1
        %v2124 = vrot.slane %v2012, 1
        %v2125 = vsel %vm1777, %v2123, %v2124
        %v2126 = vrot.slane %v2013, 1
        %v2127 = vsel %vm1777, %v2124, %v2126
        %v2128 = vrot.slane %v2014, 1
        %v2129 = vrot.slane %v2015, 1
        %v2130 = vsel %vm1777, %v2128, %v2129
        %v2131 = vrot.slane %v2016, 1
        %v2132 = vsel %vm1777, %v2129, %v2131
        %v2133 = vrot.slane %v2017, 1
        %v2134 = vrot.slane %v2018, 1
        %v2135 = vsel %vm1777, %v2133, %v2134
        %v2136 = vrot.slane %v2019, 1
        %v2137 = vsel %vm1777, %v2134, %v2136
        %v2138 = vrot.slane %v2020, 1
        %v2139 = vrot.slane %v2021, 1
        %v2140 = vsel %vm1777, %v2138, %v2139
        %v2141 = vrot.slane %v2022, 1
        %v2142 = vsel %vm1777, %v2139, %v2141
        %v2143 = vrot.slane %v2023, 1
        %v2144 = vrot.slane %v2024, 1
        %v2145 = vsel %vm1777, %v2143, %v2144
        %v2146 = vrot.slane %v2025, 1
        %v2147 = vsel %vm1777, %v2144, %v2146
        %v2148 = vrot.slane %v2026, 1
        %v2149 = vrot.slane %v2027, 1
        %v2150 = vsel %vm1777, %v2148, %v2149
        %v2151 = vrot.slane %v2028, 1
        %v2152 = vsel %vm1777, %v2149, %v2151
        %v2153 = vrot.slane %v2029, 1
        %v2154 = vrot.slane %v2030, 1
        %v2155 = vsel %vm1777, %v2153, %v2154
        %v2156 = vrot.slane %v2031, 1
        %v2157 = vsel %vm1777, %v2154, %v2156
        %v2158 = vrot.slane %v2032, 1
        %v2159 = vrot.slane %v2033, 1
        %v2160 = vsel %vm1777, %v2158, %v2159
        %v2161 = vrot.slane %v2034, 1
        %v2162 = vsel %vm1777, %v2159, %v2161
        %v2195 = vadd.f32 %v1890, %v2085
        %v2196 = vadd.f32 %v1891, %v2087
        %v2197 = vadd.f32 %v1892, %v2090
        %v2198 = vadd.f32 %v1893, %v2092
        %v2199 = vadd.f32 %v1894, %v2095
        %v2200 = vadd.f32 %v1895, %v2097
        %v2201 = vadd.f32 %v1896, %v2100
        %v2202 = vadd.f32 %v1897, %v2102
        %v2203 = vadd.f32 %v1898, %v2105
        %v2204 = vadd.f32 %v1899, %v2107
        %v2205 = vadd.f32 %v1900, %v2110
        %v2206 = vadd.f32 %v1901, %v2112
        %v2207 = vadd.f32 %v1902, %v2115
        %v2208 = vadd.f32 %v1903, %v2117
        %v2209 = vadd.f32 %v1904, %v2120
        %v2210 = vadd.f32 %v1905, %v2122
        %v2211 = vadd.f32 %v1906, %v2125
        %v2212 = vadd.f32 %v1907, %v2127
        %v2213 = vadd.f32 %v1908, %v2130
        %v2214 = vadd.f32 %v1909, %v2132
        %v2215 = vadd.f32 %v1910, %v2135
        %v2216 = vadd.f32 %v1911, %v2137
        %v2217 = vadd.f32 %v1912, %v2140
        %v2218 = vadd.f32 %v1913, %v2142
        %v2219 = vadd.f32 %v1914, %v2145
        %v2220 = vadd.f32 %v1915, %v2147
        %v2221 = vadd.f32 %v1916, %v2150
        %v2222 = vadd.f32 %v1917, %v2152
        %v2223 = vadd.f32 %v1918, %v2155
        %v2224 = vadd.f32 %v1919, %v2157
        %v2225 = vadd.f32 %v1920, %v2160
        %v2226 = vadd.f32 %v1921, %v2162
        %2227 = vset.pattern.permute.xlu0 2
        %2228 = vperm.xlu0 %2227, %v203
        %v2229 = vpop.permute.xlu0 %2228
        %2231 = vset.pattern.permute.xlu0 2
        %2232 = vperm.xlu0 %2231, %v206
        %v2233 = vpop.permute.xlu0 %2232
        %2235 = vset.pattern.permute.xlu0 2
        %2236 = vperm.xlu0 %2235, %v209
        %v2237 = vpop.permute.xlu0 %2236
        %2239 = vset.pattern.permute.xlu0 2
        %2240 = vperm.xlu0 %2239, %v212
        %v2241 = vpop.permute.xlu0 %2240
        %2243 = vset.pattern.permute.xlu0 2
        %2244 = vperm.xlu0 %2243, %v215
        %v2245 = vpop.permute.xlu0 %2244
        %2247 = vset.pattern.permute.xlu0 2
        %2248 = vperm.xlu0 %2247, %v218
        %v2249 = vpop.permute.xlu0 %2248
        %2251 = vset.pattern.permute.xlu0 2
        %2252 = vperm.xlu0 %2251, %v221
        %v2253 = vpop.permute.xlu0 %2252
        %2255 = vset.pattern.permute.xlu0 2
        %2256 = vperm.xlu0 %2255, %v224
        %v2257 = vpop.permute.xlu0 %2256
        %2259 = vset.pattern.permute.xlu0 2
        %2260 = vperm.xlu0 %2259, %v227
        %v2261 = vpop.permute.xlu0 %2260
        %2263 = vset.pattern.permute.xlu0 2
        %2264 = vperm.xlu0 %2263, %v230
        %v2265 = vpop.permute.xlu0 %2264
        %2267 = vset.pattern.permute.xlu0 2
        %2268 = vperm.xlu0 %2267, %v233
        %v2269 = vpop.permute.xlu0 %2268
        %2271 = vset.pattern.permute.xlu0 2
        %2272 = vperm.xlu0 %2271, %v236
        %v2273 = vpop.permute.xlu0 %2272
        %2275 = vset.pattern.permute.xlu0 2
        %2276 = vperm.xlu0 %2275, %v239
        %v2277 = vpop.permute.xlu0 %2276
        %2279 = vset.pattern.permute.xlu0 2
        %2280 = vperm.xlu0 %2279, %v242
        %v2281 = vpop.permute.xlu0 %2280
        %2283 = vset.pattern.permute.xlu0 2
        %2284 = vperm.xlu0 %2283, %v245
        %v2285 = vpop.permute.xlu0 %2284
        %2287 = vset.pattern.permute.xlu0 2
        %2288 = vperm.xlu0 %2287, %v248
        %v2289 = vpop.permute.xlu0 %2288
        %v2291 = vperm.slane %v371, 2
        %v2292 = vmul.f32 %v798, %v2291
        %v2293 = vmul.f32 %v802, %v2291
        %v2294 = vmul.f32 %v2229, %v2291
        %v2295 = vmul.f32 %v806, %v2291
        %v2296 = vmul.f32 %v810, %v2291
        %v2297 = vmul.f32 %v2233, %v2291
        %v2298 = vmul.f32 %v814, %v2291
        %v2299 = vmul.f32 %v818, %v2291
        %v2300 = vmul.f32 %v2237, %v2291
        %v2301 = vmul.f32 %v822, %v2291
        %v2302 = vmul.f32 %v826, %v2291
        %v2303 = vmul.f32 %v2241, %v2291
        %v2304 = vmul.f32 %v830, %v2291
        %v2305 = vmul.f32 %v834, %v2291
        %v2306 = vmul.f32 %v2245, %v2291
        %v2307 = vmul.f32 %v838, %v2291
        %v2308 = vmul.f32 %v842, %v2291
        %v2309 = vmul.f32 %v2249, %v2291
        %v2310 = vmul.f32 %v846, %v2291
        %v2311 = vmul.f32 %v850, %v2291
        %v2312 = vmul.f32 %v2253, %v2291
        %v2313 = vmul.f32 %v854, %v2291
        %v2314 = vmul.f32 %v858, %v2291
        %v2315 = vmul.f32 %v2257, %v2291
        %v2316 = vmul.f32 %v862, %v2291
        %v2317 = vmul.f32 %v866, %v2291
        %v2318 = vmul.f32 %v2261, %v2291
        %v2319 = vmul.f32 %v870, %v2291
        %v2320 = vmul.f32 %v874, %v2291
        %v2321 = vmul.f32 %v2265, %v2291
        %v2322 = vmul.f32 %v878, %v2291
        %v2323 = vmul.f32 %v882, %v2291
        %v2324 = vmul.f32 %v2269, %v2291
        %v2325 = vmul.f32 %v886, %v2291
        %v2326 = vmul.f32 %v890, %v2291
        %v2327 = vmul.f32 %v2273, %v2291
        %v2328 = vmul.f32 %v894, %v2291
        %v2329 = vmul.f32 %v898, %v2291
        %v2330 = vmul.f32 %v2277, %v2291
        %v2331 = vmul.f32 %v902, %v2291
        %v2332 = vmul.f32 %v906, %v2291
        %v2333 = vmul.f32 %v2281, %v2291
        %v2334 = vmul.f32 %v910, %v2291
        %v2335 = vmul.f32 %v914, %v2291
        %v2336 = vmul.f32 %v2285, %v2291
        %v2337 = vmul.f32 %v918, %v2291
        %v2338 = vmul.f32 %v922, %v2291
        %v2339 = vmul.f32 %v2289, %v2291
        %v2388 = vrot.slane %v2292, 1
        %v2389 = vrot.slane %v2293, 1
        %v2390 = vsel %vm1777, %v2388, %v2389
        %v2391 = vrot.slane %v2294, 1
        %v2392 = vsel %vm1777, %v2389, %v2391
        %v2393 = vrot.slane %v2295, 1
        %v2394 = vrot.slane %v2296, 1
        %v2395 = vsel %vm1777, %v2393, %v2394
        %v2396 = vrot.slane %v2297, 1
        %v2397 = vsel %vm1777, %v2394, %v2396
        %v2398 = vrot.slane %v2298, 1
        %v2399 = vrot.slane %v2299, 1
        %v2400 = vsel %vm1777, %v2398, %v2399
        %v2401 = vrot.slane %v2300, 1
        %v2402 = vsel %vm1777, %v2399, %v2401
        %v2403 = vrot.slane %v2301, 1
        %v2404 = vrot.slane %v2302, 1
        %v2405 = vsel %vm1777, %v2403, %v2404
        %v2406 = vrot.slane %v2303, 1
        %v2407 = vsel %vm1777, %v2404, %v2406
        %v2408 = vrot.slane %v2304, 1
        %v2409 = vrot.slane %v2305, 1
        %v2410 = vsel %vm1777, %v2408, %v2409
        %v2411 = vrot.slane %v2306, 1
        %v2412 = vsel %vm1777, %v2409, %v2411
        %v2413 = vrot.slane %v2307, 1
        %v2414 = vrot.slane %v2308, 1
        %v2415 = vsel %vm1777, %v2413, %v2414
        %v2416 = vrot.slane %v2309, 1
        %v2417 = vsel %vm1777, %v2414, %v2416
        %v2418 = vrot.slane %v2310, 1
        %v2419 = vrot.slane %v2311, 1
        %v2420 = vsel %vm1777, %v2418, %v2419
        %v2421 = vrot.slane %v2312, 1
        %v2422 = vsel %vm1777, %v2419, %v2421
        %v2423 = vrot.slane %v2313, 1
        %v2424 = vrot.slane %v2314, 1
        %v2425 = vsel %vm1777, %v2423, %v2424
        %v2426 = vrot.slane %v2315, 1
        %v2427 = vsel %vm1777, %v2424, %v2426
        %v2428 = vrot.slane %v2316, 1
        %v2429 = vrot.slane %v2317, 1
        %v2430 = vsel %vm1777, %v2428, %v2429
        %v2431 = vrot.slane %v2318, 1
        %v2432 = vsel %vm1777, %v2429, %v2431
        %v2433 = vrot.slane %v2319, 1
        %v2434 = vrot.slane %v2320, 1
        %v2435 = vsel %vm1777, %v2433, %v2434
        %v2436 = vrot.slane %v2321, 1
        %v2437 = vsel %vm1777, %v2434, %v2436
        %v2438 = vrot.slane %v2322, 1
        %v2439 = vrot.slane %v2323, 1
        %v2440 = vsel %vm1777, %v2438, %v2439
        %v2441 = vrot.slane %v2324, 1
        %v2442 = vsel %vm1777, %v2439, %v2441
        %v2443 = vrot.slane %v2325, 1
        %v2444 = vrot.slane %v2326, 1
        %v2445 = vsel %vm1777, %v2443, %v2444
        %v2446 = vrot.slane %v2327, 1
        %v2447 = vsel %vm1777, %v2444, %v2446
        %v2448 = vrot.slane %v2328, 1
        %v2449 = vrot.slane %v2329, 1
        %v2450 = vsel %vm1777, %v2448, %v2449
        %v2451 = vrot.slane %v2330, 1
        %v2452 = vsel %vm1777, %v2449, %v2451
        %v2453 = vrot.slane %v2331, 1
        %v2454 = vrot.slane %v2332, 1
        %v2455 = vsel %vm1777, %v2453, %v2454
        %v2456 = vrot.slane %v2333, 1
        %v2457 = vsel %vm1777, %v2454, %v2456
        %v2458 = vrot.slane %v2334, 1
        %v2459 = vrot.slane %v2335, 1
        %v2460 = vsel %vm1777, %v2458, %v2459
        %v2461 = vrot.slane %v2336, 1
        %v2462 = vsel %vm1777, %v2459, %v2461
        %v2463 = vrot.slane %v2337, 1
        %v2464 = vrot.slane %v2338, 1
        %v2465 = vsel %vm1777, %v2463, %v2464
        %v2466 = vrot.slane %v2339, 1
        %v2467 = vsel %vm1777, %v2464, %v2466
        %v2500 = vadd.f32 %v2195, %v2390
        %v2501 = vadd.f32 %v2196, %v2392
        %v2502 = vadd.f32 %v2197, %v2395
        %v2503 = vadd.f32 %v2198, %v2397
        %v2504 = vadd.f32 %v2199, %v2400
        %v2505 = vadd.f32 %v2200, %v2402
        %v2506 = vadd.f32 %v2201, %v2405
        %v2507 = vadd.f32 %v2202, %v2407
        %v2508 = vadd.f32 %v2203, %v2410
        %v2509 = vadd.f32 %v2204, %v2412
        %v2510 = vadd.f32 %v2205, %v2415
        %v2511 = vadd.f32 %v2206, %v2417
        %v2512 = vadd.f32 %v2207, %v2420
        %v2513 = vadd.f32 %v2208, %v2422
        %v2514 = vadd.f32 %v2209, %v2425
        %v2515 = vadd.f32 %v2210, %v2427
        %v2516 = vadd.f32 %v2211, %v2430
        %v2517 = vadd.f32 %v2212, %v2432
        %v2518 = vadd.f32 %v2213, %v2435
        %v2519 = vadd.f32 %v2214, %v2437
        %v2520 = vadd.f32 %v2215, %v2440
        %v2521 = vadd.f32 %v2216, %v2442
        %v2522 = vadd.f32 %v2217, %v2445
        %v2523 = vadd.f32 %v2218, %v2447
        %v2524 = vadd.f32 %v2219, %v2450
        %v2525 = vadd.f32 %v2220, %v2452
        %v2526 = vadd.f32 %v2221, %v2455
        %v2527 = vadd.f32 %v2222, %v2457
        %v2528 = vadd.f32 %v2223, %v2460
        %v2529 = vadd.f32 %v2224, %v2462
        %v2530 = vadd.f32 %v2225, %v2465
        %v2531 = vadd.f32 %v2226, %v2467
        %2533 = vset.pattern.permute.xlu0 0
        %2534 = vperm.xlu0 %2533, %v288
        %v2535 = vpop.permute.xlu0 %2534
        %2538 = vset.pattern.permute.xlu0 0
        %2539 = vperm.xlu0 %2538, %v289
        %v2540 = vpop.permute.xlu0 %2539
        %2543 = vset.pattern.permute.xlu0 0
        %2544 = vperm.xlu0 %2543, %v291
        %v2545 = vpop.permute.xlu0 %2544
        %2548 = vset.pattern.permute.xlu0 0
        %2549 = vperm.xlu0 %2548, %v292
        %v2550 = vpop.permute.xlu0 %2549
        %2553 = vset.pattern.permute.xlu0 0
        %2554 = vperm.xlu0 %2553, %v294
        %v2555 = vpop.permute.xlu0 %2554
        %2558 = vset.pattern.permute.xlu0 0
        %2559 = vperm.xlu0 %2558, %v295
        %v2560 = vpop.permute.xlu0 %2559
        %2563 = vset.pattern.permute.xlu0 0
        %2564 = vperm.xlu0 %2563, %v297
        %v2565 = vpop.permute.xlu0 %2564
        %2568 = vset.pattern.permute.xlu0 0
        %2569 = vperm.xlu0 %2568, %v298
        %v2570 = vpop.permute.xlu0 %2569
        %2573 = vset.pattern.permute.xlu0 0
        %2574 = vperm.xlu0 %2573, %v300
        %v2575 = vpop.permute.xlu0 %2574
        %2578 = vset.pattern.permute.xlu0 0
        %2579 = vperm.xlu0 %2578, %v301
        %v2580 = vpop.permute.xlu0 %2579
        %2583 = vset.pattern.permute.xlu0 0
        %2584 = vperm.xlu0 %2583, %v303
        %v2585 = vpop.permute.xlu0 %2584
        %2588 = vset.pattern.permute.xlu0 0
        %2589 = vperm.xlu0 %2588, %v304
        %v2590 = vpop.permute.xlu0 %2589
        %2593 = vset.pattern.permute.xlu0 0
        %2594 = vperm.xlu0 %2593, %v306
        %v2595 = vpop.permute.xlu0 %2594
        %2598 = vset.pattern.permute.xlu0 0
        %2599 = vperm.xlu0 %2598, %v307
        %v2600 = vpop.permute.xlu0 %2599
        %2603 = vset.pattern.permute.xlu0 0
        %2604 = vperm.xlu0 %2603, %v309
        %v2605 = vpop.permute.xlu0 %2604
        %2608 = vset.pattern.permute.xlu0 0
        %2609 = vperm.xlu0 %2608, %v310
        %v2610 = vpop.permute.xlu0 %2609
        %2613 = vset.pattern.permute.xlu0 0
        %2614 = vperm.xlu0 %2613, %v312
        %v2615 = vpop.permute.xlu0 %2614
        %2618 = vset.pattern.permute.xlu0 0
        %2619 = vperm.xlu0 %2618, %v313
        %v2620 = vpop.permute.xlu0 %2619
        %2623 = vset.pattern.permute.xlu0 0
        %2624 = vperm.xlu0 %2623, %v315
        %v2625 = vpop.permute.xlu0 %2624
        %2628 = vset.pattern.permute.xlu0 0
        %2629 = vperm.xlu0 %2628, %v316
        %v2630 = vpop.permute.xlu0 %2629
        %2633 = vset.pattern.permute.xlu0 0
        %2634 = vperm.xlu0 %2633, %v318
        %v2635 = vpop.permute.xlu0 %2634
        %2638 = vset.pattern.permute.xlu0 0
        %2639 = vperm.xlu0 %2638, %v319
        %v2640 = vpop.permute.xlu0 %2639
        %2643 = vset.pattern.permute.xlu0 0
        %2644 = vperm.xlu0 %2643, %v321
        %v2645 = vpop.permute.xlu0 %2644
        %2648 = vset.pattern.permute.xlu0 0
        %2649 = vperm.xlu0 %2648, %v322
        %v2650 = vpop.permute.xlu0 %2649
        %2653 = vset.pattern.permute.xlu0 0
        %2654 = vperm.xlu0 %2653, %v324
        %v2655 = vpop.permute.xlu0 %2654
        %2658 = vset.pattern.permute.xlu0 0
        %2659 = vperm.xlu0 %2658, %v325
        %v2660 = vpop.permute.xlu0 %2659
        %2663 = vset.pattern.permute.xlu0 0
        %2664 = vperm.xlu0 %2663, %v327
        %v2665 = vpop.permute.xlu0 %2664
        %2668 = vset.pattern.permute.xlu0 0
        %2669 = vperm.xlu0 %2668, %v328
        %v2670 = vpop.permute.xlu0 %2669
        %2673 = vset.pattern.permute.xlu0 0
        %2674 = vperm.xlu0 %2673, %v330
        %v2675 = vpop.permute.xlu0 %2674
        %2678 = vset.pattern.permute.xlu0 0
        %2679 = vperm.xlu0 %2678, %v331
        %v2680 = vpop.permute.xlu0 %2679
        %2683 = vset.pattern.permute.xlu0 0
        %2684 = vperm.xlu0 %2683, %v333
        %v2685 = vpop.permute.xlu0 %2684
        %2688 = vset.pattern.permute.xlu0 0
        %2689 = vperm.xlu0 %2688, %v334
        %v2690 = vpop.permute.xlu0 %2689
        %v2692 = vperm.slane %v372, 0
        %v2693 = vmul.f32 %v2535, %v2692
        %v2694 = vmul.f32 %v2540, %v2692
        %v2695 = vmul.f32 %v2545, %v2692
        %v2696 = vmul.f32 %v2550, %v2692
        %v2697 = vmul.f32 %v2555, %v2692
        %v2698 = vmul.f32 %v2560, %v2692
        %v2699 = vmul.f32 %v2565, %v2692
        %v2700 = vmul.f32 %v2570, %v2692
        %v2701 = vmul.f32 %v2575, %v2692
        %v2702 = vmul.f32 %v2580, %v2692
        %v2703 = vmul.f32 %v2585, %v2692
        %v2704 = vmul.f32 %v2590, %v2692
        %v2705 = vmul.f32 %v2595, %v2692
        %v2706 = vmul.f32 %v2600, %v2692
        %v2707 = vmul.f32 %v2605, %v2692
        %v2708 = vmul.f32 %v2610, %v2692
        %v2709 = vmul.f32 %v2615, %v2692
        %v2710 = vmul.f32 %v2620, %v2692
        %v2711 = vmul.f32 %v2625, %v2692
        %v2712 = vmul.f32 %v2630, %v2692
        %v2713 = vmul.f32 %v2635, %v2692
        %v2714 = vmul.f32 %v2640, %v2692
        %v2715 = vmul.f32 %v2645, %v2692
        %v2716 = vmul.f32 %v2650, %v2692
        %v2717 = vmul.f32 %v2655, %v2692
        %v2718 = vmul.f32 %v2660, %v2692
        %v2719 = vmul.f32 %v2665, %v2692
        %v2720 = vmul.f32 %v2670, %v2692
        %v2721 = vmul.f32 %v2675, %v2692
        %v2722 = vmul.f32 %v2680, %v2692
        %v2723 = vmul.f32 %v2685, %v2692
        %v2724 = vmul.f32 %v2690, %v2692
        %v2725 = vadd.f32 %v2500, %v2693
        %v2726 = vadd.f32 %v2501, %v2694
        %v2727 = vadd.f32 %v2502, %v2695
        %v2728 = vadd.f32 %v2503, %v2696
        %v2729 = vadd.f32 %v2504, %v2697
        %v2730 = vadd.f32 %v2505, %v2698
        %v2731 = vadd.f32 %v2506, %v2699
        %v2732 = vadd.f32 %v2507, %v2700
        %v2733 = vadd.f32 %v2508, %v2701
        %v2734 = vadd.f32 %v2509, %v2702
        %v2735 = vadd.f32 %v2510, %v2703
        %v2736 = vadd.f32 %v2511, %v2704
        %v2737 = vadd.f32 %v2512, %v2705
        %v2738 = vadd.f32 %v2513, %v2706
        %v2739 = vadd.f32 %v2514, %v2707
        %v2740 = vadd.f32 %v2515, %v2708
        %v2741 = vadd.f32 %v2516, %v2709
        %v2742 = vadd.f32 %v2517, %v2710
        %v2743 = vadd.f32 %v2518, %v2711
        %v2744 = vadd.f32 %v2519, %v2712
        %v2745 = vadd.f32 %v2520, %v2713
        %v2746 = vadd.f32 %v2521, %v2714
        %v2747 = vadd.f32 %v2522, %v2715
        %v2748 = vadd.f32 %v2523, %v2716
        %v2749 = vadd.f32 %v2524, %v2717
        %v2750 = vadd.f32 %v2525, %v2718
        %v2751 = vadd.f32 %v2526, %v2719
        %v2752 = vadd.f32 %v2527, %v2720
        %v2753 = vadd.f32 %v2528, %v2721
        %v2754 = vadd.f32 %v2529, %v2722
        %v2755 = vadd.f32 %v2530, %v2723
        %v2756 = vadd.f32 %v2531, %v2724
        %2757 = vset.pattern.permute.xlu0 1
        %2758 = vperm.xlu0 %2757, %v288
        %v2759 = vpop.permute.xlu0 %2758
        %2761 = vset.pattern.permute.xlu0 1
        %2762 = vperm.xlu0 %2761, %v289
        %v2763 = vpop.permute.xlu0 %2762
        %2765 = vset.pattern.permute.xlu0 1
        %2766 = vperm.xlu0 %2765, %v291
        %v2767 = vpop.permute.xlu0 %2766
        %2769 = vset.pattern.permute.xlu0 1
        %2770 = vperm.xlu0 %2769, %v292
        %v2771 = vpop.permute.xlu0 %2770
        %2773 = vset.pattern.permute.xlu0 1
        %2774 = vperm.xlu0 %2773, %v294
        %v2775 = vpop.permute.xlu0 %2774
        %2777 = vset.pattern.permute.xlu0 1
        %2778 = vperm.xlu0 %2777, %v295
        %v2779 = vpop.permute.xlu0 %2778
        %2781 = vset.pattern.permute.xlu0 1
        %2782 = vperm.xlu0 %2781, %v297
        %v2783 = vpop.permute.xlu0 %2782
        %2785 = vset.pattern.permute.xlu0 1
        %2786 = vperm.xlu0 %2785, %v298
        %v2787 = vpop.permute.xlu0 %2786
        %2789 = vset.pattern.permute.xlu0 1
        %2790 = vperm.xlu0 %2789, %v300
        %v2791 = vpop.permute.xlu0 %2790
        %2793 = vset.pattern.permute.xlu0 1
        %2794 = vperm.xlu0 %2793, %v301
        %v2795 = vpop.permute.xlu0 %2794
        %2797 = vset.pattern.permute.xlu0 1
        %2798 = vperm.xlu0 %2797, %v303
        %v2799 = vpop.permute.xlu0 %2798
        %2801 = vset.pattern.permute.xlu0 1
        %2802 = vperm.xlu0 %2801, %v304
        %v2803 = vpop.permute.xlu0 %2802
        %2805 = vset.pattern.permute.xlu0 1
        %2806 = vperm.xlu0 %2805, %v306
        %v2807 = vpop.permute.xlu0 %2806
        %2809 = vset.pattern.permute.xlu0 1
        %2810 = vperm.xlu0 %2809, %v307
        %v2811 = vpop.permute.xlu0 %2810
        %2813 = vset.pattern.permute.xlu0 1
        %2814 = vperm.xlu0 %2813, %v309
        %v2815 = vpop.permute.xlu0 %2814
        %2817 = vset.pattern.permute.xlu0 1
        %2818 = vperm.xlu0 %2817, %v310
        %v2819 = vpop.permute.xlu0 %2818
        %2821 = vset.pattern.permute.xlu0 1
        %2822 = vperm.xlu0 %2821, %v312
        %v2823 = vpop.permute.xlu0 %2822
        %2825 = vset.pattern.permute.xlu0 1
        %2826 = vperm.xlu0 %2825, %v313
        %v2827 = vpop.permute.xlu0 %2826
        %2829 = vset.pattern.permute.xlu0 1
        %2830 = vperm.xlu0 %2829, %v315
        %v2831 = vpop.permute.xlu0 %2830
        %2833 = vset.pattern.permute.xlu0 1
        %2834 = vperm.xlu0 %2833, %v316
        %v2835 = vpop.permute.xlu0 %2834
        %2837 = vset.pattern.permute.xlu0 1
        %2838 = vperm.xlu0 %2837, %v318
        %v2839 = vpop.permute.xlu0 %2838
        %2841 = vset.pattern.permute.xlu0 1
        %2842 = vperm.xlu0 %2841, %v319
        %v2843 = vpop.permute.xlu0 %2842
        %2845 = vset.pattern.permute.xlu0 1
        %2846 = vperm.xlu0 %2845, %v321
        %v2847 = vpop.permute.xlu0 %2846
        %2849 = vset.pattern.permute.xlu0 1
        %2850 = vperm.xlu0 %2849, %v322
        %v2851 = vpop.permute.xlu0 %2850
        %2853 = vset.pattern.permute.xlu0 1
        %2854 = vperm.xlu0 %2853, %v324
        %v2855 = vpop.permute.xlu0 %2854
        %2857 = vset.pattern.permute.xlu0 1
        %2858 = vperm.xlu0 %2857, %v325
        %v2859 = vpop.permute.xlu0 %2858
        %2861 = vset.pattern.permute.xlu0 1
        %2862 = vperm.xlu0 %2861, %v327
        %v2863 = vpop.permute.xlu0 %2862
        %2865 = vset.pattern.permute.xlu0 1
        %2866 = vperm.xlu0 %2865, %v328
        %v2867 = vpop.permute.xlu0 %2866
        %2869 = vset.pattern.permute.xlu0 1
        %2870 = vperm.xlu0 %2869, %v330
        %v2871 = vpop.permute.xlu0 %2870
        %2873 = vset.pattern.permute.xlu0 1
        %2874 = vperm.xlu0 %2873, %v331
        %v2875 = vpop.permute.xlu0 %2874
        %2877 = vset.pattern.permute.xlu0 1
        %2878 = vperm.xlu0 %2877, %v333
        %v2879 = vpop.permute.xlu0 %2878
        %2881 = vset.pattern.permute.xlu0 1
        %2882 = vperm.xlu0 %2881, %v334
        %v2883 = vpop.permute.xlu0 %2882
        %v2885 = vperm.slane %v372, 1
        %v2886 = vmul.f32 %v2759, %v2885
        %v2887 = vmul.f32 %v2763, %v2885
        %v2888 = vmul.f32 %v2767, %v2885
        %v2889 = vmul.f32 %v2771, %v2885
        %v2890 = vmul.f32 %v2775, %v2885
        %v2891 = vmul.f32 %v2779, %v2885
        %v2892 = vmul.f32 %v2783, %v2885
        %v2893 = vmul.f32 %v2787, %v2885
        %v2894 = vmul.f32 %v2791, %v2885
        %v2895 = vmul.f32 %v2795, %v2885
        %v2896 = vmul.f32 %v2799, %v2885
        %v2897 = vmul.f32 %v2803, %v2885
        %v2898 = vmul.f32 %v2807, %v2885
        %v2899 = vmul.f32 %v2811, %v2885
        %v2900 = vmul.f32 %v2815, %v2885
        %v2901 = vmul.f32 %v2819, %v2885
        %v2902 = vmul.f32 %v2823, %v2885
        %v2903 = vmul.f32 %v2827, %v2885
        %v2904 = vmul.f32 %v2831, %v2885
        %v2905 = vmul.f32 %v2835, %v2885
        %v2906 = vmul.f32 %v2839, %v2885
        %v2907 = vmul.f32 %v2843, %v2885
        %v2908 = vmul.f32 %v2847, %v2885
        %v2909 = vmul.f32 %v2851, %v2885
        %v2910 = vmul.f32 %v2855, %v2885
        %v2911 = vmul.f32 %v2859, %v2885
        %v2912 = vmul.f32 %v2863, %v2885
        %v2913 = vmul.f32 %v2867, %v2885
        %v2914 = vmul.f32 %v2871, %v2885
        %v2915 = vmul.f32 %v2875, %v2885
        %v2916 = vmul.f32 %v2879, %v2885
        %v2917 = vmul.f32 %v2883, %v2885
        %v2918 = vadd.f32 %v2725, %v2886
        %v2919 = vadd.f32 %v2726, %v2887
        %v2920 = vadd.f32 %v2727, %v2888
        %v2921 = vadd.f32 %v2728, %v2889
        %v2922 = vadd.f32 %v2729, %v2890
        %v2923 = vadd.f32 %v2730, %v2891
        %v2924 = vadd.f32 %v2731, %v2892
        %v2925 = vadd.f32 %v2732, %v2893
        %v2926 = vadd.f32 %v2733, %v2894
        %v2927 = vadd.f32 %v2734, %v2895
        %v2928 = vadd.f32 %v2735, %v2896
        %v2929 = vadd.f32 %v2736, %v2897
        %v2930 = vadd.f32 %v2737, %v2898
        %v2931 = vadd.f32 %v2738, %v2899
        %v2932 = vadd.f32 %v2739, %v2900
        %v2933 = vadd.f32 %v2740, %v2901
        %v2934 = vadd.f32 %v2741, %v2902
        %v2935 = vadd.f32 %v2742, %v2903
        %v2936 = vadd.f32 %v2743, %v2904
        %v2937 = vadd.f32 %v2744, %v2905
        %v2938 = vadd.f32 %v2745, %v2906
        %v2939 = vadd.f32 %v2746, %v2907
        %v2940 = vadd.f32 %v2747, %v2908
        %v2941 = vadd.f32 %v2748, %v2909
        %v2942 = vadd.f32 %v2749, %v2910
        %v2943 = vadd.f32 %v2750, %v2911
        %v2944 = vadd.f32 %v2751, %v2912
        %v2945 = vadd.f32 %v2752, %v2913
        %v2946 = vadd.f32 %v2753, %v2914
        %v2947 = vadd.f32 %v2754, %v2915
        %v2948 = vadd.f32 %v2755, %v2916
        %v2949 = vadd.f32 %v2756, %v2917
        %2950 = vset.pattern.permute.xlu0 2
        %2951 = vperm.xlu0 %2950, %v288
        %v2952 = vpop.permute.xlu0 %2951
        %2954 = vset.pattern.permute.xlu0 2
        %2955 = vperm.xlu0 %2954, %v289
        %v2956 = vpop.permute.xlu0 %2955
        %2958 = vset.pattern.permute.xlu0 2
        %2959 = vperm.xlu0 %2958, %v291
        %v2960 = vpop.permute.xlu0 %2959
        %2962 = vset.pattern.permute.xlu0 2
        %2963 = vperm.xlu0 %2962, %v292
        %v2964 = vpop.permute.xlu0 %2963
        %2966 = vset.pattern.permute.xlu0 2
        %2967 = vperm.xlu0 %2966, %v294
        %v2968 = vpop.permute.xlu0 %2967
        %2970 = vset.pattern.permute.xlu0 2
        %2971 = vperm.xlu0 %2970, %v295
        %v2972 = vpop.permute.xlu0 %2971
        %2974 = vset.pattern.permute.xlu0 2
        %2975 = vperm.xlu0 %2974, %v297
        %v2976 = vpop.permute.xlu0 %2975
        %2978 = vset.pattern.permute.xlu0 2
        %2979 = vperm.xlu0 %2978, %v298
        %v2980 = vpop.permute.xlu0 %2979
        %2982 = vset.pattern.permute.xlu0 2
        %2983 = vperm.xlu0 %2982, %v300
        %v2984 = vpop.permute.xlu0 %2983
        %2986 = vset.pattern.permute.xlu0 2
        %2987 = vperm.xlu0 %2986, %v301
        %v2988 = vpop.permute.xlu0 %2987
        %2990 = vset.pattern.permute.xlu0 2
        %2991 = vperm.xlu0 %2990, %v303
        %v2992 = vpop.permute.xlu0 %2991
        %2994 = vset.pattern.permute.xlu0 2
        %2995 = vperm.xlu0 %2994, %v304
        %v2996 = vpop.permute.xlu0 %2995
        %2998 = vset.pattern.permute.xlu0 2
        %2999 = vperm.xlu0 %2998, %v306
        %v3000 = vpop.permute.xlu0 %2999
        %3002 = vset.pattern.permute.xlu0 2
        %3003 = vperm.xlu0 %3002, %v307
        %v3004 = vpop.permute.xlu0 %3003
        %3006 = vset.pattern.permute.xlu0 2
        %3007 = vperm.xlu0 %3006, %v309
        %v3008 = vpop.permute.xlu0 %3007
        %3010 = vset.pattern.permute.xlu0 2
        %3011 = vperm.xlu0 %3010, %v310
        %v3012 = vpop.permute.xlu0 %3011
        %3014 = vset.pattern.permute.xlu0 2
        %3015 = vperm.xlu0 %3014, %v312
        %v3016 = vpop.permute.xlu0 %3015
        %3018 = vset.pattern.permute.xlu0 2
        %3019 = vperm.xlu0 %3018, %v313
        %v3020 = vpop.permute.xlu0 %3019
        %3022 = vset.pattern.permute.xlu0 2
        %3023 = vperm.xlu0 %3022, %v315
        %v3024 = vpop.permute.xlu0 %3023
        %3026 = vset.pattern.permute.xlu0 2
        %3027 = vperm.xlu0 %3026, %v316
        %v3028 = vpop.permute.xlu0 %3027
        %3030 = vset.pattern.permute.xlu0 2
        %3031 = vperm.xlu0 %3030, %v318
        %v3032 = vpop.permute.xlu0 %3031
        %3034 = vset.pattern.permute.xlu0 2
        %3035 = vperm.xlu0 %3034, %v319
        %v3036 = vpop.permute.xlu0 %3035
        %3038 = vset.pattern.permute.xlu0 2
        %3039 = vperm.xlu0 %3038, %v321
        %v3040 = vpop.permute.xlu0 %3039
        %3042 = vset.pattern.permute.xlu0 2
        %3043 = vperm.xlu0 %3042, %v322
        %v3044 = vpop.permute.xlu0 %3043
        %3046 = vset.pattern.permute.xlu0 2
        %3047 = vperm.xlu0 %3046, %v324
        %v3048 = vpop.permute.xlu0 %3047
        %3050 = vset.pattern.permute.xlu0 2
        %3051 = vperm.xlu0 %3050, %v325
        %v3052 = vpop.permute.xlu0 %3051
        %3054 = vset.pattern.permute.xlu0 2
        %3055 = vperm.xlu0 %3054, %v327
        %v3056 = vpop.permute.xlu0 %3055
        %3058 = vset.pattern.permute.xlu0 2
        %3059 = vperm.xlu0 %3058, %v328
        %v3060 = vpop.permute.xlu0 %3059
        %3062 = vset.pattern.permute.xlu0 2
        %3063 = vperm.xlu0 %3062, %v330
        %v3064 = vpop.permute.xlu0 %3063
        %3066 = vset.pattern.permute.xlu0 2
        %3067 = vperm.xlu0 %3066, %v331
        %v3068 = vpop.permute.xlu0 %3067
        %3070 = vset.pattern.permute.xlu0 2
        %3071 = vperm.xlu0 %3070, %v333
        %v3072 = vpop.permute.xlu0 %3071
        %3074 = vset.pattern.permute.xlu0 2
        %3075 = vperm.xlu0 %3074, %v334
        %v3076 = vpop.permute.xlu0 %3075
        %v3078 = vperm.slane %v372, 2
        %v3079 = vmul.f32 %v2952, %v3078
        %v3080 = vmul.f32 %v2956, %v3078
        %v3081 = vmul.f32 %v2960, %v3078
        %v3082 = vmul.f32 %v2964, %v3078
        %v3083 = vmul.f32 %v2968, %v3078
        %v3084 = vmul.f32 %v2972, %v3078
        %v3085 = vmul.f32 %v2976, %v3078
        %v3086 = vmul.f32 %v2980, %v3078
        %v3087 = vmul.f32 %v2984, %v3078
        %v3088 = vmul.f32 %v2988, %v3078
        %v3089 = vmul.f32 %v2992, %v3078
        %v3090 = vmul.f32 %v2996, %v3078
        %v3091 = vmul.f32 %v3000, %v3078
        %v3092 = vmul.f32 %v3004, %v3078
        %v3093 = vmul.f32 %v3008, %v3078
        %v3094 = vmul.f32 %v3012, %v3078
        %v3095 = vmul.f32 %v3016, %v3078
        %v3096 = vmul.f32 %v3020, %v3078
        %v3097 = vmul.f32 %v3024, %v3078
        %v3098 = vmul.f32 %v3028, %v3078
        %v3099 = vmul.f32 %v3032, %v3078
        %v3100 = vmul.f32 %v3036, %v3078
        %v3101 = vmul.f32 %v3040, %v3078
        %v3102 = vmul.f32 %v3044, %v3078
        %v3103 = vmul.f32 %v3048, %v3078
        %v3104 = vmul.f32 %v3052, %v3078
        %v3105 = vmul.f32 %v3056, %v3078
        %v3106 = vmul.f32 %v3060, %v3078
        %v3107 = vmul.f32 %v3064, %v3078
        %v3108 = vmul.f32 %v3068, %v3078
        %v3109 = vmul.f32 %v3072, %v3078
        %v3110 = vmul.f32 %v3076, %v3078
        %v3111 = vadd.f32 %v2918, %v3079
        %v3112 = vadd.f32 %v2919, %v3080
        %v3113 = vadd.f32 %v2920, %v3081
        %v3114 = vadd.f32 %v2921, %v3082
        %v3115 = vadd.f32 %v2922, %v3083
        %v3116 = vadd.f32 %v2923, %v3084
        %v3117 = vadd.f32 %v2924, %v3085
        %v3118 = vadd.f32 %v2925, %v3086
        %v3119 = vadd.f32 %v2926, %v3087
        %v3120 = vadd.f32 %v2927, %v3088
        %v3121 = vadd.f32 %v2928, %v3089
        %v3122 = vadd.f32 %v2929, %v3090
        %v3123 = vadd.f32 %v2930, %v3091
        %v3124 = vadd.f32 %v2931, %v3092
        %v3125 = vadd.f32 %v2932, %v3093
        %v3126 = vadd.f32 %v2933, %v3094
        %v3127 = vadd.f32 %v2934, %v3095
        %v3128 = vadd.f32 %v2935, %v3096
        %v3129 = vadd.f32 %v2936, %v3097
        %v3130 = vadd.f32 %v2937, %v3098
        %v3131 = vadd.f32 %v2938, %v3099
        %v3132 = vadd.f32 %v2939, %v3100
        %v3133 = vadd.f32 %v2940, %v3101
        %v3134 = vadd.f32 %v2941, %v3102
        %v3135 = vadd.f32 %v2942, %v3103
        %v3136 = vadd.f32 %v2943, %v3104
        %v3137 = vadd.f32 %v2944, %v3105
        %v3138 = vadd.f32 %v2945, %v3106
        %v3139 = vadd.f32 %v2946, %v3107
        %v3140 = vadd.f32 %v2947, %v3108
        %v3141 = vadd.f32 %v2948, %v3109
        %v3142 = vadd.f32 %v2949, %v3110
        %3144 = vset.pattern.permute.xlu0 0
        %3145 = vperm.xlu0 %3144, %v337
        %v3146 = vpop.permute.xlu0 %3145
        %3149 = vset.pattern.permute.xlu0 0
        %3150 = vperm.xlu0 %3149, %v338
        %v3151 = vpop.permute.xlu0 %3150
        %3154 = vset.pattern.permute.xlu0 0
        %3155 = vperm.xlu0 %3154, %v339
        %v3156 = vpop.permute.xlu0 %3155
        %3159 = vset.pattern.permute.xlu0 0
        %3160 = vperm.xlu0 %3159, %v340
        %v3161 = vpop.permute.xlu0 %3160
        %3164 = vset.pattern.permute.xlu0 0
        %3165 = vperm.xlu0 %3164, %v341
        %v3166 = vpop.permute.xlu0 %3165
        %3169 = vset.pattern.permute.xlu0 0
        %3170 = vperm.xlu0 %3169, %v342
        %v3171 = vpop.permute.xlu0 %3170
        %3174 = vset.pattern.permute.xlu0 0
        %3175 = vperm.xlu0 %3174, %v343
        %v3176 = vpop.permute.xlu0 %3175
        %3179 = vset.pattern.permute.xlu0 0
        %3180 = vperm.xlu0 %3179, %v344
        %v3181 = vpop.permute.xlu0 %3180
        %3184 = vset.pattern.permute.xlu0 0
        %3185 = vperm.xlu0 %3184, %v345
        %v3186 = vpop.permute.xlu0 %3185
        %3189 = vset.pattern.permute.xlu0 0
        %3190 = vperm.xlu0 %3189, %v346
        %v3191 = vpop.permute.xlu0 %3190
        %3194 = vset.pattern.permute.xlu0 0
        %3195 = vperm.xlu0 %3194, %v347
        %v3196 = vpop.permute.xlu0 %3195
        %3199 = vset.pattern.permute.xlu0 0
        %3200 = vperm.xlu0 %3199, %v348
        %v3201 = vpop.permute.xlu0 %3200
        %3204 = vset.pattern.permute.xlu0 0
        %3205 = vperm.xlu0 %3204, %v349
        %v3206 = vpop.permute.xlu0 %3205
        %3209 = vset.pattern.permute.xlu0 0
        %3210 = vperm.xlu0 %3209, %v350
        %v3211 = vpop.permute.xlu0 %3210
        %3214 = vset.pattern.permute.xlu0 0
        %3215 = vperm.xlu0 %3214, %v351
        %v3216 = vpop.permute.xlu0 %3215
        %3219 = vset.pattern.permute.xlu0 0
        %3220 = vperm.xlu0 %3219, %v352
        %v3221 = vpop.permute.xlu0 %3220
        %3224 = vset.pattern.permute.xlu0 0
        %3225 = vperm.xlu0 %3224, %v353
        %v3226 = vpop.permute.xlu0 %3225
        %3229 = vset.pattern.permute.xlu0 0
        %3230 = vperm.xlu0 %3229, %v354
        %v3231 = vpop.permute.xlu0 %3230
        %3234 = vset.pattern.permute.xlu0 0
        %3235 = vperm.xlu0 %3234, %v355
        %v3236 = vpop.permute.xlu0 %3235
        %3239 = vset.pattern.permute.xlu0 0
        %3240 = vperm.xlu0 %3239, %v356
        %v3241 = vpop.permute.xlu0 %3240
        %3244 = vset.pattern.permute.xlu0 0
        %3245 = vperm.xlu0 %3244, %v357
        %v3246 = vpop.permute.xlu0 %3245
        %3249 = vset.pattern.permute.xlu0 0
        %3250 = vperm.xlu0 %3249, %v358
        %v3251 = vpop.permute.xlu0 %3250
        %3254 = vset.pattern.permute.xlu0 0
        %3255 = vperm.xlu0 %3254, %v359
        %v3256 = vpop.permute.xlu0 %3255
        %3259 = vset.pattern.permute.xlu0 0
        %3260 = vperm.xlu0 %3259, %v360
        %v3261 = vpop.permute.xlu0 %3260
        %3264 = vset.pattern.permute.xlu0 0
        %3265 = vperm.xlu0 %3264, %v361
        %v3266 = vpop.permute.xlu0 %3265
        %3269 = vset.pattern.permute.xlu0 0
        %3270 = vperm.xlu0 %3269, %v362
        %v3271 = vpop.permute.xlu0 %3270
        %3274 = vset.pattern.permute.xlu0 0
        %3275 = vperm.xlu0 %3274, %v363
        %v3276 = vpop.permute.xlu0 %3275
        %3279 = vset.pattern.permute.xlu0 0
        %3280 = vperm.xlu0 %3279, %v364
        %v3281 = vpop.permute.xlu0 %3280
        %3284 = vset.pattern.permute.xlu0 0
        %3285 = vperm.xlu0 %3284, %v365
        %v3286 = vpop.permute.xlu0 %3285
        %3289 = vset.pattern.permute.xlu0 0
        %3290 = vperm.xlu0 %3289, %v366
        %v3291 = vpop.permute.xlu0 %3290
        %3294 = vset.pattern.permute.xlu0 0
        %3295 = vperm.xlu0 %3294, %v367
        %v3296 = vpop.permute.xlu0 %3295
        %3299 = vset.pattern.permute.xlu0 0
        %3300 = vperm.xlu0 %3299, %v368
        %v3301 = vpop.permute.xlu0 %3300
        %v3303 = vperm.slane %v373, 0
        %v3304 = vmul.f32 %v3146, %v3303
        %v3305 = vmul.f32 %v3151, %v3303
        %v3306 = vmul.f32 %v3156, %v3303
        %v3307 = vmul.f32 %v3161, %v3303
        %v3308 = vmul.f32 %v3166, %v3303
        %v3309 = vmul.f32 %v3171, %v3303
        %v3310 = vmul.f32 %v3176, %v3303
        %v3311 = vmul.f32 %v3181, %v3303
        %v3312 = vmul.f32 %v3186, %v3303
        %v3313 = vmul.f32 %v3191, %v3303
        %v3314 = vmul.f32 %v3196, %v3303
        %v3315 = vmul.f32 %v3201, %v3303
        %v3316 = vmul.f32 %v3206, %v3303
        %v3317 = vmul.f32 %v3211, %v3303
        %v3318 = vmul.f32 %v3216, %v3303
        %v3319 = vmul.f32 %v3221, %v3303
        %v3320 = vmul.f32 %v3226, %v3303
        %v3321 = vmul.f32 %v3231, %v3303
        %v3322 = vmul.f32 %v3236, %v3303
        %v3323 = vmul.f32 %v3241, %v3303
        %v3324 = vmul.f32 %v3246, %v3303
        %v3325 = vmul.f32 %v3251, %v3303
        %v3326 = vmul.f32 %v3256, %v3303
        %v3327 = vmul.f32 %v3261, %v3303
        %v3328 = vmul.f32 %v3266, %v3303
        %v3329 = vmul.f32 %v3271, %v3303
        %v3330 = vmul.f32 %v3276, %v3303
        %v3331 = vmul.f32 %v3281, %v3303
        %v3332 = vmul.f32 %v3286, %v3303
        %v3333 = vmul.f32 %v3291, %v3303
        %v3334 = vmul.f32 %v3296, %v3303
        %v3335 = vmul.f32 %v3301, %v3303
        %v3336 = vadd.f32 %v3111, %v3304
        %v3337 = vadd.f32 %v3112, %v3305
        %v3338 = vadd.f32 %v3113, %v3306
        %v3339 = vadd.f32 %v3114, %v3307
        %v3340 = vadd.f32 %v3115, %v3308
        %v3341 = vadd.f32 %v3116, %v3309
        %v3342 = vadd.f32 %v3117, %v3310
        %v3343 = vadd.f32 %v3118, %v3311
        %v3344 = vadd.f32 %v3119, %v3312
        %v3345 = vadd.f32 %v3120, %v3313
        %v3346 = vadd.f32 %v3121, %v3314
        %v3347 = vadd.f32 %v3122, %v3315
        %v3348 = vadd.f32 %v3123, %v3316
        %v3349 = vadd.f32 %v3124, %v3317
        %v3350 = vadd.f32 %v3125, %v3318
        %v3351 = vadd.f32 %v3126, %v3319
        %v3352 = vadd.f32 %v3127, %v3320
        %v3353 = vadd.f32 %v3128, %v3321
        %v3354 = vadd.f32 %v3129, %v3322
        %v3355 = vadd.f32 %v3130, %v3323
        %v3356 = vadd.f32 %v3131, %v3324
        %v3357 = vadd.f32 %v3132, %v3325
        %v3358 = vadd.f32 %v3133, %v3326
        %v3359 = vadd.f32 %v3134, %v3327
        %v3360 = vadd.f32 %v3135, %v3328
        %v3361 = vadd.f32 %v3136, %v3329
        %v3362 = vadd.f32 %v3137, %v3330
        %v3363 = vadd.f32 %v3138, %v3331
        %v3364 = vadd.f32 %v3139, %v3332
        %v3365 = vadd.f32 %v3140, %v3333
        %v3366 = vadd.f32 %v3141, %v3334
        %v3367 = vadd.f32 %v3142, %v3335
        %3368 = vset.pattern.permute.xlu0 1
        %3369 = vperm.xlu0 %3368, %v337
        %v3370 = vpop.permute.xlu0 %3369
        %3372 = vset.pattern.permute.xlu0 1
        %3373 = vperm.xlu0 %3372, %v338
        %v3374 = vpop.permute.xlu0 %3373
        %3376 = vset.pattern.permute.xlu0 1
        %3377 = vperm.xlu0 %3376, %v339
        %v3378 = vpop.permute.xlu0 %3377
        %3380 = vset.pattern.permute.xlu0 1
        %3381 = vperm.xlu0 %3380, %v340
        %v3382 = vpop.permute.xlu0 %3381
        %3384 = vset.pattern.permute.xlu0 1
        %3385 = vperm.xlu0 %3384, %v341
        %v3386 = vpop.permute.xlu0 %3385
        %3388 = vset.pattern.permute.xlu0 1
        %3389 = vperm.xlu0 %3388, %v342
        %v3390 = vpop.permute.xlu0 %3389
        %3392 = vset.pattern.permute.xlu0 1
        %3393 = vperm.xlu0 %3392, %v343
        %v3394 = vpop.permute.xlu0 %3393
        %3396 = vset.pattern.permute.xlu0 1
        %3397 = vperm.xlu0 %3396, %v344
        %v3398 = vpop.permute.xlu0 %3397
        %3400 = vset.pattern.permute.xlu0 1
        %3401 = vperm.xlu0 %3400, %v345
        %v3402 = vpop.permute.xlu0 %3401
        %3404 = vset.pattern.permute.xlu0 1
        %3405 = vperm.xlu0 %3404, %v346
        %v3406 = vpop.permute.xlu0 %3405
        %3408 = vset.pattern.permute.xlu0 1
        %3409 = vperm.xlu0 %3408, %v347
        %v3410 = vpop.permute.xlu0 %3409
        %3412 = vset.pattern.permute.xlu0 1
        %3413 = vperm.xlu0 %3412, %v348
        %v3414 = vpop.permute.xlu0 %3413
        %3416 = vset.pattern.permute.xlu0 1
        %3417 = vperm.xlu0 %3416, %v349
        %v3418 = vpop.permute.xlu0 %3417
        %3420 = vset.pattern.permute.xlu0 1
        %3421 = vperm.xlu0 %3420, %v350
        %v3422 = vpop.permute.xlu0 %3421
        %3424 = vset.pattern.permute.xlu0 1
        %3425 = vperm.xlu0 %3424, %v351
        %v3426 = vpop.permute.xlu0 %3425
        %3428 = vset.pattern.permute.xlu0 1
        %3429 = vperm.xlu0 %3428, %v352
        %v3430 = vpop.permute.xlu0 %3429
        %3432 = vset.pattern.permute.xlu0 1
        %3433 = vperm.xlu0 %3432, %v353
        %v3434 = vpop.permute.xlu0 %3433
        %3436 = vset.pattern.permute.xlu0 1
        %3437 = vperm.xlu0 %3436, %v354
        %v3438 = vpop.permute.xlu0 %3437
        %3440 = vset.pattern.permute.xlu0 1
        %3441 = vperm.xlu0 %3440, %v355
        %v3442 = vpop.permute.xlu0 %3441
        %3444 = vset.pattern.permute.xlu0 1
        %3445 = vperm.xlu0 %3444, %v356
        %v3446 = vpop.permute.xlu0 %3445
        %3448 = vset.pattern.permute.xlu0 1
        %3449 = vperm.xlu0 %3448, %v357
        %v3450 = vpop.permute.xlu0 %3449
        %3452 = vset.pattern.permute.xlu0 1
        %3453 = vperm.xlu0 %3452, %v358
        %v3454 = vpop.permute.xlu0 %3453
        %3456 = vset.pattern.permute.xlu0 1
        %3457 = vperm.xlu0 %3456, %v359
        %v3458 = vpop.permute.xlu0 %3457
        %3460 = vset.pattern.permute.xlu0 1
        %3461 = vperm.xlu0 %3460, %v360
        %v3462 = vpop.permute.xlu0 %3461
        %3464 = vset.pattern.permute.xlu0 1
        %3465 = vperm.xlu0 %3464, %v361
        %v3466 = vpop.permute.xlu0 %3465
        %3468 = vset.pattern.permute.xlu0 1
        %3469 = vperm.xlu0 %3468, %v362
        %v3470 = vpop.permute.xlu0 %3469
        %3472 = vset.pattern.permute.xlu0 1
        %3473 = vperm.xlu0 %3472, %v363
        %v3474 = vpop.permute.xlu0 %3473
        %3476 = vset.pattern.permute.xlu0 1
        %3477 = vperm.xlu0 %3476, %v364
        %v3478 = vpop.permute.xlu0 %3477
        %3480 = vset.pattern.permute.xlu0 1
        %3481 = vperm.xlu0 %3480, %v365
        %v3482 = vpop.permute.xlu0 %3481
        %3484 = vset.pattern.permute.xlu0 1
        %3485 = vperm.xlu0 %3484, %v366
        %v3486 = vpop.permute.xlu0 %3485
        %3488 = vset.pattern.permute.xlu0 1
        %3489 = vperm.xlu0 %3488, %v367
        %v3490 = vpop.permute.xlu0 %3489
        %3492 = vset.pattern.permute.xlu0 1
        %3493 = vperm.xlu0 %3492, %v368
        %v3494 = vpop.permute.xlu0 %3493
        %v3496 = vperm.slane %v373, 1
        %v3497 = vmul.f32 %v3370, %v3496
        %v3498 = vmul.f32 %v3374, %v3496
        %v3499 = vmul.f32 %v3378, %v3496
        %v3500 = vmul.f32 %v3382, %v3496
        %v3501 = vmul.f32 %v3386, %v3496
        %v3502 = vmul.f32 %v3390, %v3496
        %v3503 = vmul.f32 %v3394, %v3496
        %v3504 = vmul.f32 %v3398, %v3496
        %v3505 = vmul.f32 %v3402, %v3496
        %v3506 = vmul.f32 %v3406, %v3496
        %v3507 = vmul.f32 %v3410, %v3496
        %v3508 = vmul.f32 %v3414, %v3496
        %v3509 = vmul.f32 %v3418, %v3496
        %v3510 = vmul.f32 %v3422, %v3496
        %v3511 = vmul.f32 %v3426, %v3496
        %v3512 = vmul.f32 %v3430, %v3496
        %v3513 = vmul.f32 %v3434, %v3496
        %v3514 = vmul.f32 %v3438, %v3496
        %v3515 = vmul.f32 %v3442, %v3496
        %v3516 = vmul.f32 %v3446, %v3496
        %v3517 = vmul.f32 %v3450, %v3496
        %v3518 = vmul.f32 %v3454, %v3496
        %v3519 = vmul.f32 %v3458, %v3496
        %v3520 = vmul.f32 %v3462, %v3496
        %v3521 = vmul.f32 %v3466, %v3496
        %v3522 = vmul.f32 %v3470, %v3496
        %v3523 = vmul.f32 %v3474, %v3496
        %v3524 = vmul.f32 %v3478, %v3496
        %v3525 = vmul.f32 %v3482, %v3496
        %v3526 = vmul.f32 %v3486, %v3496
        %v3527 = vmul.f32 %v3490, %v3496
        %v3528 = vmul.f32 %v3494, %v3496
        %v3529 = vadd.f32 %v3336, %v3497
        %v3530 = vadd.f32 %v3337, %v3498
        %v3531 = vadd.f32 %v3338, %v3499
        %v3532 = vadd.f32 %v3339, %v3500
        %v3533 = vadd.f32 %v3340, %v3501
        %v3534 = vadd.f32 %v3341, %v3502
        %v3535 = vadd.f32 %v3342, %v3503
        %v3536 = vadd.f32 %v3343, %v3504
        %v3537 = vadd.f32 %v3344, %v3505
        %v3538 = vadd.f32 %v3345, %v3506
        %v3539 = vadd.f32 %v3346, %v3507
        %v3540 = vadd.f32 %v3347, %v3508
        %v3541 = vadd.f32 %v3348, %v3509
        %v3542 = vadd.f32 %v3349, %v3510
        %v3543 = vadd.f32 %v3350, %v3511
        %v3544 = vadd.f32 %v3351, %v3512
        %v3545 = vadd.f32 %v3352, %v3513
        %v3546 = vadd.f32 %v3353, %v3514
        %v3547 = vadd.f32 %v3354, %v3515
        %v3548 = vadd.f32 %v3355, %v3516
        %v3549 = vadd.f32 %v3356, %v3517
        %v3550 = vadd.f32 %v3357, %v3518
        %v3551 = vadd.f32 %v3358, %v3519
        %v3552 = vadd.f32 %v3359, %v3520
        %v3553 = vadd.f32 %v3360, %v3521
        %v3554 = vadd.f32 %v3361, %v3522
        %v3555 = vadd.f32 %v3362, %v3523
        %v3556 = vadd.f32 %v3363, %v3524
        %v3557 = vadd.f32 %v3364, %v3525
        %v3558 = vadd.f32 %v3365, %v3526
        %v3559 = vadd.f32 %v3366, %v3527
        %v3560 = vadd.f32 %v3367, %v3528
        %3561 = vset.pattern.permute.xlu0 2
        %3562 = vperm.xlu0 %3561, %v337
        %v3563 = vpop.permute.xlu0 %3562
        %3565 = vset.pattern.permute.xlu0 2
        %3566 = vperm.xlu0 %3565, %v338
        %v3567 = vpop.permute.xlu0 %3566
        %3569 = vset.pattern.permute.xlu0 2
        %3570 = vperm.xlu0 %3569, %v339
        %v3571 = vpop.permute.xlu0 %3570
        %3573 = vset.pattern.permute.xlu0 2
        %3574 = vperm.xlu0 %3573, %v340
        %v3575 = vpop.permute.xlu0 %3574
        %3577 = vset.pattern.permute.xlu0 2
        %3578 = vperm.xlu0 %3577, %v341
        %v3579 = vpop.permute.xlu0 %3578
        %3581 = vset.pattern.permute.xlu0 2
        %3582 = vperm.xlu0 %3581, %v342
        %v3583 = vpop.permute.xlu0 %3582
        %3585 = vset.pattern.permute.xlu0 2
        %3586 = vperm.xlu0 %3585, %v343
        %v3587 = vpop.permute.xlu0 %3586
        %3589 = vset.pattern.permute.xlu0 2
        %3590 = vperm.xlu0 %3589, %v344
        %v3591 = vpop.permute.xlu0 %3590
        %3593 = vset.pattern.permute.xlu0 2
        %3594 = vperm.xlu0 %3593, %v345
        %v3595 = vpop.permute.xlu0 %3594
        %3597 = vset.pattern.permute.xlu0 2
        %3598 = vperm.xlu0 %3597, %v346
        %v3599 = vpop.permute.xlu0 %3598
        %3601 = vset.pattern.permute.xlu0 2
        %3602 = vperm.xlu0 %3601, %v347
        %v3603 = vpop.permute.xlu0 %3602
        %3605 = vset.pattern.permute.xlu0 2
        %3606 = vperm.xlu0 %3605, %v348
        %v3607 = vpop.permute.xlu0 %3606
        %3609 = vset.pattern.permute.xlu0 2
        %3610 = vperm.xlu0 %3609, %v349
        %v3611 = vpop.permute.xlu0 %3610
        %3613 = vset.pattern.permute.xlu0 2
        %3614 = vperm.xlu0 %3613, %v350
        %v3615 = vpop.permute.xlu0 %3614
        %3617 = vset.pattern.permute.xlu0 2
        %3618 = vperm.xlu0 %3617, %v351
        %v3619 = vpop.permute.xlu0 %3618
        %3621 = vset.pattern.permute.xlu0 2
        %3622 = vperm.xlu0 %3621, %v352
        %v3623 = vpop.permute.xlu0 %3622
        %3625 = vset.pattern.permute.xlu0 2
        %3626 = vperm.xlu0 %3625, %v353
        %v3627 = vpop.permute.xlu0 %3626
        %3629 = vset.pattern.permute.xlu0 2
        %3630 = vperm.xlu0 %3629, %v354
        %v3631 = vpop.permute.xlu0 %3630
        %3633 = vset.pattern.permute.xlu0 2
        %3634 = vperm.xlu0 %3633, %v355
        %v3635 = vpop.permute.xlu0 %3634
        %3637 = vset.pattern.permute.xlu0 2
        %3638 = vperm.xlu0 %3637, %v356
        %v3639 = vpop.permute.xlu0 %3638
        %3641 = vset.pattern.permute.xlu0 2
        %3642 = vperm.xlu0 %3641, %v357
        %v3643 = vpop.permute.xlu0 %3642
        %3645 = vset.pattern.permute.xlu0 2
        %3646 = vperm.xlu0 %3645, %v358
        %v3647 = vpop.permute.xlu0 %3646
        %3649 = vset.pattern.permute.xlu0 2
        %3650 = vperm.xlu0 %3649, %v359
        %v3651 = vpop.permute.xlu0 %3650
        %3653 = vset.pattern.permute.xlu0 2
        %3654 = vperm.xlu0 %3653, %v360
        %v3655 = vpop.permute.xlu0 %3654
        %3657 = vset.pattern.permute.xlu0 2
        %3658 = vperm.xlu0 %3657, %v361
        %v3659 = vpop.permute.xlu0 %3658
        %3661 = vset.pattern.permute.xlu0 2
        %3662 = vperm.xlu0 %3661, %v362
        %v3663 = vpop.permute.xlu0 %3662
        %3665 = vset.pattern.permute.xlu0 2
        %3666 = vperm.xlu0 %3665, %v363
        %v3667 = vpop.permute.xlu0 %3666
        %3669 = vset.pattern.permute.xlu0 2
        %3670 = vperm.xlu0 %3669, %v364
        %v3671 = vpop.permute.xlu0 %3670
        %3673 = vset.pattern.permute.xlu0 2
        %3674 = vperm.xlu0 %3673, %v365
        %v3675 = vpop.permute.xlu0 %3674
        %3677 = vset.pattern.permute.xlu0 2
        %3678 = vperm.xlu0 %3677, %v366
        %v3679 = vpop.permute.xlu0 %3678
        %3681 = vset.pattern.permute.xlu0 2
        %3682 = vperm.xlu0 %3681, %v367
        %v3683 = vpop.permute.xlu0 %3682
        %3685 = vset.pattern.permute.xlu0 2
        %3686 = vperm.xlu0 %3685, %v368
        %v3687 = vpop.permute.xlu0 %3686
        %v3689 = vperm.slane %v373, 2
        %v3690 = vmul.f32 %v3563, %v3689
        %v3691 = vmul.f32 %v3567, %v3689
        %v3692 = vmul.f32 %v3571, %v3689
        %v3693 = vmul.f32 %v3575, %v3689
        %v3694 = vmul.f32 %v3579, %v3689
        %v3695 = vmul.f32 %v3583, %v3689
        %v3696 = vmul.f32 %v3587, %v3689
        %v3697 = vmul.f32 %v3591, %v3689
        %v3698 = vmul.f32 %v3595, %v3689
        %v3699 = vmul.f32 %v3599, %v3689
        %v3700 = vmul.f32 %v3603, %v3689
        %v3701 = vmul.f32 %v3607, %v3689
        %v3702 = vmul.f32 %v3611, %v3689
        %v3703 = vmul.f32 %v3615, %v3689
        %v3704 = vmul.f32 %v3619, %v3689
        %v3705 = vmul.f32 %v3623, %v3689
        %v3706 = vmul.f32 %v3627, %v3689
        %v3707 = vmul.f32 %v3631, %v3689
        %v3708 = vmul.f32 %v3635, %v3689
        %v3709 = vmul.f32 %v3639, %v3689
        %v3710 = vmul.f32 %v3643, %v3689
        %v3711 = vmul.f32 %v3647, %v3689
        %v3712 = vmul.f32 %v3651, %v3689
        %v3713 = vmul.f32 %v3655, %v3689
        %v3714 = vmul.f32 %v3659, %v3689
        %v3715 = vmul.f32 %v3663, %v3689
        %v3716 = vmul.f32 %v3667, %v3689
        %v3717 = vmul.f32 %v3671, %v3689
        %v3718 = vmul.f32 %v3675, %v3689
        %v3719 = vmul.f32 %v3679, %v3689
        %v3720 = vmul.f32 %v3683, %v3689
        %v3721 = vmul.f32 %v3687, %v3689
        %v3722 = vadd.f32 %v3529, %v3690
        %v3723 = vadd.f32 %v3530, %v3691
        %v3724 = vadd.f32 %v3531, %v3692
        %v3725 = vadd.f32 %v3532, %v3693
        %v3726 = vadd.f32 %v3533, %v3694
        %v3727 = vadd.f32 %v3534, %v3695
        %v3728 = vadd.f32 %v3535, %v3696
        %v3729 = vadd.f32 %v3536, %v3697
        %v3730 = vadd.f32 %v3537, %v3698
        %v3731 = vadd.f32 %v3538, %v3699
        %v3732 = vadd.f32 %v3539, %v3700
        %v3733 = vadd.f32 %v3540, %v3701
        %v3734 = vadd.f32 %v3541, %v3702
        %v3735 = vadd.f32 %v3542, %v3703
        %v3736 = vadd.f32 %v3543, %v3704
        %v3737 = vadd.f32 %v3544, %v3705
        %v3738 = vadd.f32 %v3545, %v3706
        %v3739 = vadd.f32 %v3546, %v3707
        %v3740 = vadd.f32 %v3547, %v3708
        %v3741 = vadd.f32 %v3548, %v3709
        %v3742 = vadd.f32 %v3549, %v3710
        %v3743 = vadd.f32 %v3550, %v3711
        %v3744 = vadd.f32 %v3551, %v3712
        %v3745 = vadd.f32 %v3552, %v3713
        %v3746 = vadd.f32 %v3553, %v3714
        %v3747 = vadd.f32 %v3554, %v3715
        %v3748 = vadd.f32 %v3555, %v3716
        %v3749 = vadd.f32 %v3556, %v3717
        %v3750 = vadd.f32 %v3557, %v3718
        %v3751 = vadd.f32 %v3558, %v3719
        %v3752 = vadd.f32 %v3559, %v3720
        %v3753 = vadd.f32 %v3560, %v3721
        %3755 = vset.pattern.permute.xlu0 0
        %3756 = vperm.xlu0 %3755, %v290
        %v3757 = vpop.permute.xlu0 %3756
        %3760 = vset.pattern.permute.xlu0 0
        %3761 = vperm.xlu0 %3760, %v293
        %v3762 = vpop.permute.xlu0 %3761
        %3765 = vset.pattern.permute.xlu0 0
        %3766 = vperm.xlu0 %3765, %v296
        %v3767 = vpop.permute.xlu0 %3766
        %3770 = vset.pattern.permute.xlu0 0
        %3771 = vperm.xlu0 %3770, %v299
        %v3772 = vpop.permute.xlu0 %3771
        %3775 = vset.pattern.permute.xlu0 0
        %3776 = vperm.xlu0 %3775, %v302
        %v3777 = vpop.permute.xlu0 %3776
        %3780 = vset.pattern.permute.xlu0 0
        %3781 = vperm.xlu0 %3780, %v305
        %v3782 = vpop.permute.xlu0 %3781
        %3785 = vset.pattern.permute.xlu0 0
        %3786 = vperm.xlu0 %3785, %v308
        %v3787 = vpop.permute.xlu0 %3786
        %3790 = vset.pattern.permute.xlu0 0
        %3791 = vperm.xlu0 %3790, %v311
        %v3792 = vpop.permute.xlu0 %3791
        %3795 = vset.pattern.permute.xlu0 0
        %3796 = vperm.xlu0 %3795, %v314
        %v3797 = vpop.permute.xlu0 %3796
        %3800 = vset.pattern.permute.xlu0 0
        %3801 = vperm.xlu0 %3800, %v317
        %v3802 = vpop.permute.xlu0 %3801
        %3805 = vset.pattern.permute.xlu0 0
        %3806 = vperm.xlu0 %3805, %v320
        %v3807 = vpop.permute.xlu0 %3806
        %3810 = vset.pattern.permute.xlu0 0
        %3811 = vperm.xlu0 %3810, %v323
        %v3812 = vpop.permute.xlu0 %3811
        %3815 = vset.pattern.permute.xlu0 0
        %3816 = vperm.xlu0 %3815, %v326
        %v3817 = vpop.permute.xlu0 %3816
        %3820 = vset.pattern.permute.xlu0 0
        %3821 = vperm.xlu0 %3820, %v329
        %v3822 = vpop.permute.xlu0 %3821
        %3825 = vset.pattern.permute.xlu0 0
        %3826 = vperm.xlu0 %3825, %v332
        %v3827 = vpop.permute.xlu0 %3826
        %3830 = vset.pattern.permute.xlu0 0
        %3831 = vperm.xlu0 %3830, %v335
        %v3832 = vpop.permute.xlu0 %3831
        %v3834 = vperm.slane %v374, 0
        %v3835 = vmul.f32 %v2535, %v3834
        %v3836 = vmul.f32 %v2540, %v3834
        %v3837 = vmul.f32 %v3757, %v3834
        %v3838 = vmul.f32 %v2545, %v3834
        %v3839 = vmul.f32 %v2550, %v3834
        %v3840 = vmul.f32 %v3762, %v3834
        %v3841 = vmul.f32 %v2555, %v3834
        %v3842 = vmul.f32 %v2560, %v3834
        %v3843 = vmul.f32 %v3767, %v3834
        %v3844 = vmul.f32 %v2565, %v3834
        %v3845 = vmul.f32 %v2570, %v3834
        %v3846 = vmul.f32 %v3772, %v3834
        %v3847 = vmul.f32 %v2575, %v3834
        %v3848 = vmul.f32 %v2580, %v3834
        %v3849 = vmul.f32 %v3777, %v3834
        %v3850 = vmul.f32 %v2585, %v3834
        %v3851 = vmul.f32 %v2590, %v3834
        %v3852 = vmul.f32 %v3782, %v3834
        %v3853 = vmul.f32 %v2595, %v3834
        %v3854 = vmul.f32 %v2600, %v3834
        %v3855 = vmul.f32 %v3787, %v3834
        %v3856 = vmul.f32 %v2605, %v3834
        %v3857 = vmul.f32 %v2610, %v3834
        %v3858 = vmul.f32 %v3792, %v3834
        %v3859 = vmul.f32 %v2615, %v3834
        %v3860 = vmul.f32 %v2620, %v3834
        %v3861 = vmul.f32 %v3797, %v3834
        %v3862 = vmul.f32 %v2625, %v3834
        %v3863 = vmul.f32 %v2630, %v3834
        %v3864 = vmul.f32 %v3802, %v3834
        %v3865 = vmul.f32 %v2635, %v3834
        %v3866 = vmul.f32 %v2640, %v3834
        %v3867 = vmul.f32 %v3807, %v3834
        %v3868 = vmul.f32 %v2645, %v3834
        %v3869 = vmul.f32 %v2650, %v3834
        %v3870 = vmul.f32 %v3812, %v3834
        %v3871 = vmul.f32 %v2655, %v3834
        %v3872 = vmul.f32 %v2660, %v3834
        %v3873 = vmul.f32 %v3817, %v3834
        %v3874 = vmul.f32 %v2665, %v3834
        %v3875 = vmul.f32 %v2670, %v3834
        %v3876 = vmul.f32 %v3822, %v3834
        %v3877 = vmul.f32 %v2675, %v3834
        %v3878 = vmul.f32 %v2680, %v3834
        %v3879 = vmul.f32 %v3827, %v3834
        %v3880 = vmul.f32 %v2685, %v3834
        %v3881 = vmul.f32 %v2690, %v3834
        %v3882 = vmul.f32 %v3832, %v3834
        %v3931 = vrot.slane %v3835, 1
        %v3932 = vrot.slane %v3836, 1
        %v3933 = vsel %vm1777, %v3931, %v3932
        %v3934 = vrot.slane %v3837, 1
        %v3935 = vsel %vm1777, %v3932, %v3934
        %v3936 = vrot.slane %v3838, 1
        %v3937 = vrot.slane %v3839, 1
        %v3938 = vsel %vm1777, %v3936, %v3937
        %v3939 = vrot.slane %v3840, 1
        %v3940 = vsel %vm1777, %v3937, %v3939
        %v3941 = vrot.slane %v3841, 1
        %v3942 = vrot.slane %v3842, 1
        %v3943 = vsel %vm1777, %v3941, %v3942
        %v3944 = vrot.slane %v3843, 1
        %v3945 = vsel %vm1777, %v3942, %v3944
        %v3946 = vrot.slane %v3844, 1
        %v3947 = vrot.slane %v3845, 1
        %v3948 = vsel %vm1777, %v3946, %v3947
        %v3949 = vrot.slane %v3846, 1
        %v3950 = vsel %vm1777, %v3947, %v3949
        %v3951 = vrot.slane %v3847, 1
        %v3952 = vrot.slane %v3848, 1
        %v3953 = vsel %vm1777, %v3951, %v3952
        %v3954 = vrot.slane %v3849, 1
        %v3955 = vsel %vm1777, %v3952, %v3954
        %v3956 = vrot.slane %v3850, 1
        %v3957 = vrot.slane %v3851, 1
        %v3958 = vsel %vm1777, %v3956, %v3957
        %v3959 = vrot.slane %v3852, 1
        %v3960 = vsel %vm1777, %v3957, %v3959
        %v3961 = vrot.slane %v3853, 1
        %v3962 = vrot.slane %v3854, 1
        %v3963 = vsel %vm1777, %v3961, %v3962
        %v3964 = vrot.slane %v3855, 1
        %v3965 = vsel %vm1777, %v3962, %v3964
        %v3966 = vrot.slane %v3856, 1
        %v3967 = vrot.slane %v3857, 1
        %v3968 = vsel %vm1777, %v3966, %v3967
        %v3969 = vrot.slane %v3858, 1
        %v3970 = vsel %vm1777, %v3967, %v3969
        %v3971 = vrot.slane %v3859, 1
        %v3972 = vrot.slane %v3860, 1
        %v3973 = vsel %vm1777, %v3971, %v3972
        %v3974 = vrot.slane %v3861, 1
        %v3975 = vsel %vm1777, %v3972, %v3974
        %v3976 = vrot.slane %v3862, 1
        %v3977 = vrot.slane %v3863, 1
        %v3978 = vsel %vm1777, %v3976, %v3977
        %v3979 = vrot.slane %v3864, 1
        %v3980 = vsel %vm1777, %v3977, %v3979
        %v3981 = vrot.slane %v3865, 1
        %v3982 = vrot.slane %v3866, 1
        %v3983 = vsel %vm1777, %v3981, %v3982
        %v3984 = vrot.slane %v3867, 1
        %v3985 = vsel %vm1777, %v3982, %v3984
        %v3986 = vrot.slane %v3868, 1
        %v3987 = vrot.slane %v3869, 1
        %v3988 = vsel %vm1777, %v3986, %v3987
        %v3989 = vrot.slane %v3870, 1
        %v3990 = vsel %vm1777, %v3987, %v3989
        %v3991 = vrot.slane %v3871, 1
        %v3992 = vrot.slane %v3872, 1
        %v3993 = vsel %vm1777, %v3991, %v3992
        %v3994 = vrot.slane %v3873, 1
        %v3995 = vsel %vm1777, %v3992, %v3994
        %v3996 = vrot.slane %v3874, 1
        %v3997 = vrot.slane %v3875, 1
        %v3998 = vsel %vm1777, %v3996, %v3997
        %v3999 = vrot.slane %v3876, 1
        %v4000 = vsel %vm1777, %v3997, %v3999
        %v4001 = vrot.slane %v3877, 1
        %v4002 = vrot.slane %v3878, 1
        %v4003 = vsel %vm1777, %v4001, %v4002
        %v4004 = vrot.slane %v3879, 1
        %v4005 = vsel %vm1777, %v4002, %v4004
        %v4006 = vrot.slane %v3880, 1
        %v4007 = vrot.slane %v3881, 1
        %v4008 = vsel %vm1777, %v4006, %v4007
        %v4009 = vrot.slane %v3882, 1
        %v4010 = vsel %vm1777, %v4007, %v4009
        %v4043 = vadd.f32 %v3722, %v3933
        %v4044 = vadd.f32 %v3723, %v3935
        %v4045 = vadd.f32 %v3724, %v3938
        %v4046 = vadd.f32 %v3725, %v3940
        %v4047 = vadd.f32 %v3726, %v3943
        %v4048 = vadd.f32 %v3727, %v3945
        %v4049 = vadd.f32 %v3728, %v3948
        %v4050 = vadd.f32 %v3729, %v3950
        %v4051 = vadd.f32 %v3730, %v3953
        %v4052 = vadd.f32 %v3731, %v3955
        %v4053 = vadd.f32 %v3732, %v3958
        %v4054 = vadd.f32 %v3733, %v3960
        %v4055 = vadd.f32 %v3734, %v3963
        %v4056 = vadd.f32 %v3735, %v3965
        %v4057 = vadd.f32 %v3736, %v3968
        %v4058 = vadd.f32 %v3737, %v3970
        %v4059 = vadd.f32 %v3738, %v3973
        %v4060 = vadd.f32 %v3739, %v3975
        %v4061 = vadd.f32 %v3740, %v3978
        %v4062 = vadd.f32 %v3741, %v3980
        %v4063 = vadd.f32 %v3742, %v3983
        %v4064 = vadd.f32 %v3743, %v3985
        %v4065 = vadd.f32 %v3744, %v3988
        %v4066 = vadd.f32 %v3745, %v3990
        %v4067 = vadd.f32 %v3746, %v3993
        %v4068 = vadd.f32 %v3747, %v3995
        %v4069 = vadd.f32 %v3748, %v3998
        %v4070 = vadd.f32 %v3749, %v4000
        %v4071 = vadd.f32 %v3750, %v4003
        %v4072 = vadd.f32 %v3751, %v4005
        %v4073 = vadd.f32 %v3752, %v4008
        %v4074 = vadd.f32 %v3753, %v4010
        %4075 = vset.pattern.permute.xlu0 1
        %4076 = vperm.xlu0 %4075, %v290
        %v4077 = vpop.permute.xlu0 %4076
        %4079 = vset.pattern.permute.xlu0 1
        %4080 = vperm.xlu0 %4079, %v293
        %v4081 = vpop.permute.xlu0 %4080
        %4083 = vset.pattern.permute.xlu0 1
        %4084 = vperm.xlu0 %4083, %v296
        %v4085 = vpop.permute.xlu0 %4084
        %4087 = vset.pattern.permute.xlu0 1
        %4088 = vperm.xlu0 %4087, %v299
        %v4089 = vpop.permute.xlu0 %4088
        %4091 = vset.pattern.permute.xlu0 1
        %4092 = vperm.xlu0 %4091, %v302
        %v4093 = vpop.permute.xlu0 %4092
        %4095 = vset.pattern.permute.xlu0 1
        %4096 = vperm.xlu0 %4095, %v305
        %v4097 = vpop.permute.xlu0 %4096
        %4099 = vset.pattern.permute.xlu0 1
        %4100 = vperm.xlu0 %4099, %v308
        %v4101 = vpop.permute.xlu0 %4100
        %4103 = vset.pattern.permute.xlu0 1
        %4104 = vperm.xlu0 %4103, %v311
        %v4105 = vpop.permute.xlu0 %4104
        %4107 = vset.pattern.permute.xlu0 1
        %4108 = vperm.xlu0 %4107, %v314
        %v4109 = vpop.permute.xlu0 %4108
        %4111 = vset.pattern.permute.xlu0 1
        %4112 = vperm.xlu0 %4111, %v317
        %v4113 = vpop.permute.xlu0 %4112
        %4115 = vset.pattern.permute.xlu0 1
        %4116 = vperm.xlu0 %4115, %v320
        %v4117 = vpop.permute.xlu0 %4116
        %4119 = vset.pattern.permute.xlu0 1
        %4120 = vperm.xlu0 %4119, %v323
        %v4121 = vpop.permute.xlu0 %4120
        %4123 = vset.pattern.permute.xlu0 1
        %4124 = vperm.xlu0 %4123, %v326
        %v4125 = vpop.permute.xlu0 %4124
        %4127 = vset.pattern.permute.xlu0 1
        %4128 = vperm.xlu0 %4127, %v329
        %v4129 = vpop.permute.xlu0 %4128
        %4131 = vset.pattern.permute.xlu0 1
        %4132 = vperm.xlu0 %4131, %v332
        %v4133 = vpop.permute.xlu0 %4132
        %4135 = vset.pattern.permute.xlu0 1
        %4136 = vperm.xlu0 %4135, %v335
        %v4137 = vpop.permute.xlu0 %4136
        %v4139 = vperm.slane %v374, 1
        %v4140 = vmul.f32 %v2759, %v4139
        %v4141 = vmul.f32 %v2763, %v4139
        %v4142 = vmul.f32 %v4077, %v4139
        %v4143 = vmul.f32 %v2767, %v4139
        %v4144 = vmul.f32 %v2771, %v4139
        %v4145 = vmul.f32 %v4081, %v4139
        %v4146 = vmul.f32 %v2775, %v4139
        %v4147 = vmul.f32 %v2779, %v4139
        %v4148 = vmul.f32 %v4085, %v4139
        %v4149 = vmul.f32 %v2783, %v4139
        %v4150 = vmul.f32 %v2787, %v4139
        %v4151 = vmul.f32 %v4089, %v4139
        %v4152 = vmul.f32 %v2791, %v4139
        %v4153 = vmul.f32 %v2795, %v4139
        %v4154 = vmul.f32 %v4093, %v4139
        %v4155 = vmul.f32 %v2799, %v4139
        %v4156 = vmul.f32 %v2803, %v4139
        %v4157 = vmul.f32 %v4097, %v4139
        %v4158 = vmul.f32 %v2807, %v4139
        %v4159 = vmul.f32 %v2811, %v4139
        %v4160 = vmul.f32 %v4101, %v4139
        %v4161 = vmul.f32 %v2815, %v4139
        %v4162 = vmul.f32 %v2819, %v4139
        %v4163 = vmul.f32 %v4105, %v4139
        %v4164 = vmul.f32 %v2823, %v4139
        %v4165 = vmul.f32 %v2827, %v4139
        %v4166 = vmul.f32 %v4109, %v4139
        %v4167 = vmul.f32 %v2831, %v4139
        %v4168 = vmul.f32 %v2835, %v4139
        %v4169 = vmul.f32 %v4113, %v4139
        %v4170 = vmul.f32 %v2839, %v4139
        %v4171 = vmul.f32 %v2843, %v4139
        %v4172 = vmul.f32 %v4117, %v4139
        %v4173 = vmul.f32 %v2847, %v4139
        %v4174 = vmul.f32 %v2851, %v4139
        %v4175 = vmul.f32 %v4121, %v4139
        %v4176 = vmul.f32 %v2855, %v4139
        %v4177 = vmul.f32 %v2859, %v4139
        %v4178 = vmul.f32 %v4125, %v4139
        %v4179 = vmul.f32 %v2863, %v4139
        %v4180 = vmul.f32 %v2867, %v4139
        %v4181 = vmul.f32 %v4129, %v4139
        %v4182 = vmul.f32 %v2871, %v4139
        %v4183 = vmul.f32 %v2875, %v4139
        %v4184 = vmul.f32 %v4133, %v4139
        %v4185 = vmul.f32 %v2879, %v4139
        %v4186 = vmul.f32 %v2883, %v4139
        %v4187 = vmul.f32 %v4137, %v4139
        %v4236 = vrot.slane %v4140, 1
        %v4237 = vrot.slane %v4141, 1
        %v4238 = vsel %vm1777, %v4236, %v4237
        %v4239 = vrot.slane %v4142, 1
        %v4240 = vsel %vm1777, %v4237, %v4239
        %v4241 = vrot.slane %v4143, 1
        %v4242 = vrot.slane %v4144, 1
        %v4243 = vsel %vm1777, %v4241, %v4242
        %v4244 = vrot.slane %v4145, 1
        %v4245 = vsel %vm1777, %v4242, %v4244
        %v4246 = vrot.slane %v4146, 1
        %v4247 = vrot.slane %v4147, 1
        %v4248 = vsel %vm1777, %v4246, %v4247
        %v4249 = vrot.slane %v4148, 1
        %v4250 = vsel %vm1777, %v4247, %v4249
        %v4251 = vrot.slane %v4149, 1
        %v4252 = vrot.slane %v4150, 1
        %v4253 = vsel %vm1777, %v4251, %v4252
        %v4254 = vrot.slane %v4151, 1
        %v4255 = vsel %vm1777, %v4252, %v4254
        %v4256 = vrot.slane %v4152, 1
        %v4257 = vrot.slane %v4153, 1
        %v4258 = vsel %vm1777, %v4256, %v4257
        %v4259 = vrot.slane %v4154, 1
        %v4260 = vsel %vm1777, %v4257, %v4259
        %v4261 = vrot.slane %v4155, 1
        %v4262 = vrot.slane %v4156, 1
        %v4263 = vsel %vm1777, %v4261, %v4262
        %v4264 = vrot.slane %v4157, 1
        %v4265 = vsel %vm1777, %v4262, %v4264
        %v4266 = vrot.slane %v4158, 1
        %v4267 = vrot.slane %v4159, 1
        %v4268 = vsel %vm1777, %v4266, %v4267
        %v4269 = vrot.slane %v4160, 1
        %v4270 = vsel %vm1777, %v4267, %v4269
        %v4271 = vrot.slane %v4161, 1
        %v4272 = vrot.slane %v4162, 1
        %v4273 = vsel %vm1777, %v4271, %v4272
        %v4274 = vrot.slane %v4163, 1
        %v4275 = vsel %vm1777, %v4272, %v4274
        %v4276 = vrot.slane %v4164, 1
        %v4277 = vrot.slane %v4165, 1
        %v4278 = vsel %vm1777, %v4276, %v4277
        %v4279 = vrot.slane %v4166, 1
        %v4280 = vsel %vm1777, %v4277, %v4279
        %v4281 = vrot.slane %v4167, 1
        %v4282 = vrot.slane %v4168, 1
        %v4283 = vsel %vm1777, %v4281, %v4282
        %v4284 = vrot.slane %v4169, 1
        %v4285 = vsel %vm1777, %v4282, %v4284
        %v4286 = vrot.slane %v4170, 1
        %v4287 = vrot.slane %v4171, 1
        %v4288 = vsel %vm1777, %v4286, %v4287
        %v4289 = vrot.slane %v4172, 1
        %v4290 = vsel %vm1777, %v4287, %v4289
        %v4291 = vrot.slane %v4173, 1
        %v4292 = vrot.slane %v4174, 1
        %v4293 = vsel %vm1777, %v4291, %v4292
        %v4294 = vrot.slane %v4175, 1
        %v4295 = vsel %vm1777, %v4292, %v4294
        %v4296 = vrot.slane %v4176, 1
        %v4297 = vrot.slane %v4177, 1
        %v4298 = vsel %vm1777, %v4296, %v4297
        %v4299 = vrot.slane %v4178, 1
        %v4300 = vsel %vm1777, %v4297, %v4299
        %v4301 = vrot.slane %v4179, 1
        %v4302 = vrot.slane %v4180, 1
        %v4303 = vsel %vm1777, %v4301, %v4302
        %v4304 = vrot.slane %v4181, 1
        %v4305 = vsel %vm1777, %v4302, %v4304
        %v4306 = vrot.slane %v4182, 1
        %v4307 = vrot.slane %v4183, 1
        %v4308 = vsel %vm1777, %v4306, %v4307
        %v4309 = vrot.slane %v4184, 1
        %v4310 = vsel %vm1777, %v4307, %v4309
        %v4311 = vrot.slane %v4185, 1
        %v4312 = vrot.slane %v4186, 1
        %v4313 = vsel %vm1777, %v4311, %v4312
        %v4314 = vrot.slane %v4187, 1
        %v4315 = vsel %vm1777, %v4312, %v4314
        %v4348 = vadd.f32 %v4043, %v4238
        %v4349 = vadd.f32 %v4044, %v4240
        %v4350 = vadd.f32 %v4045, %v4243
        %v4351 = vadd.f32 %v4046, %v4245
        %v4352 = vadd.f32 %v4047, %v4248
        %v4353 = vadd.f32 %v4048, %v4250
        %v4354 = vadd.f32 %v4049, %v4253
        %v4355 = vadd.f32 %v4050, %v4255
        %v4356 = vadd.f32 %v4051, %v4258
        %v4357 = vadd.f32 %v4052, %v4260
        %v4358 = vadd.f32 %v4053, %v4263
        %v4359 = vadd.f32 %v4054, %v4265
        %v4360 = vadd.f32 %v4055, %v4268
        %v4361 = vadd.f32 %v4056, %v4270
        %v4362 = vadd.f32 %v4057, %v4273
        %v4363 = vadd.f32 %v4058, %v4275
        %v4364 = vadd.f32 %v4059, %v4278
        %v4365 = vadd.f32 %v4060, %v4280
        %v4366 = vadd.f32 %v4061, %v4283
        %v4367 = vadd.f32 %v4062, %v4285
        %v4368 = vadd.f32 %v4063, %v4288
        %v4369 = vadd.f32 %v4064, %v4290
        %v4370 = vadd.f32 %v4065, %v4293
        %v4371 = vadd.f32 %v4066, %v4295
        %v4372 = vadd.f32 %v4067, %v4298
        %v4373 = vadd.f32 %v4068, %v4300
        %v4374 = vadd.f32 %v4069, %v4303
        %v4375 = vadd.f32 %v4070, %v4305
        %v4376 = vadd.f32 %v4071, %v4308
        %v4377 = vadd.f32 %v4072, %v4310
        %v4378 = vadd.f32 %v4073, %v4313
        %v4379 = vadd.f32 %v4074, %v4315
        %4380 = vset.pattern.permute.xlu0 2
        %4381 = vperm.xlu0 %4380, %v290
        %v4382 = vpop.permute.xlu0 %4381
        %4384 = vset.pattern.permute.xlu0 2
        %4385 = vperm.xlu0 %4384, %v293
        %v4386 = vpop.permute.xlu0 %4385
        %4388 = vset.pattern.permute.xlu0 2
        %4389 = vperm.xlu0 %4388, %v296
        %v4390 = vpop.permute.xlu0 %4389
        %4392 = vset.pattern.permute.xlu0 2
        %4393 = vperm.xlu0 %4392, %v299
        %v4394 = vpop.permute.xlu0 %4393
        %4396 = vset.pattern.permute.xlu0 2
        %4397 = vperm.xlu0 %4396, %v302
        %v4398 = vpop.permute.xlu0 %4397
        %4400 = vset.pattern.permute.xlu0 2
        %4401 = vperm.xlu0 %4400, %v305
        %v4402 = vpop.permute.xlu0 %4401
        %4404 = vset.pattern.permute.xlu0 2
        %4405 = vperm.xlu0 %4404, %v308
        %v4406 = vpop.permute.xlu0 %4405
        %4408 = vset.pattern.permute.xlu0 2
        %4409 = vperm.xlu0 %4408, %v311
        %v4410 = vpop.permute.xlu0 %4409
        %4412 = vset.pattern.permute.xlu0 2
        %4413 = vperm.xlu0 %4412, %v314
        %v4414 = vpop.permute.xlu0 %4413
        %4416 = vset.pattern.permute.xlu0 2
        %4417 = vperm.xlu0 %4416, %v317
        %v4418 = vpop.permute.xlu0 %4417
        %4420 = vset.pattern.permute.xlu0 2
        %4421 = vperm.xlu0 %4420, %v320
        %v4422 = vpop.permute.xlu0 %4421
        %4424 = vset.pattern.permute.xlu0 2
        %4425 = vperm.xlu0 %4424, %v323
        %v4426 = vpop.permute.xlu0 %4425
        %4428 = vset.pattern.permute.xlu0 2
        %4429 = vperm.xlu0 %4428, %v326
        %v4430 = vpop.permute.xlu0 %4429
        %4432 = vset.pattern.permute.xlu0 2
        %4433 = vperm.xlu0 %4432, %v329
        %v4434 = vpop.permute.xlu0 %4433
        %4436 = vset.pattern.permute.xlu0 2
        %4437 = vperm.xlu0 %4436, %v332
        %v4438 = vpop.permute.xlu0 %4437
        %4440 = vset.pattern.permute.xlu0 2
        %4441 = vperm.xlu0 %4440, %v335
        %v4442 = vpop.permute.xlu0 %4441
        %v4444 = vperm.slane %v374, 2
        %v4445 = vmul.f32 %v2952, %v4444
        %v4446 = vmul.f32 %v2956, %v4444
        %v4447 = vmul.f32 %v4382, %v4444
        %v4448 = vmul.f32 %v2960, %v4444
        %v4449 = vmul.f32 %v2964, %v4444
        %v4450 = vmul.f32 %v4386, %v4444
        %v4451 = vmul.f32 %v2968, %v4444
        %v4452 = vmul.f32 %v2972, %v4444
        %v4453 = vmul.f32 %v4390, %v4444
        %v4454 = vmul.f32 %v2976, %v4444
        %v4455 = vmul.f32 %v2980, %v4444
        %v4456 = vmul.f32 %v4394, %v4444
        %v4457 = vmul.f32 %v2984, %v4444
        %v4458 = vmul.f32 %v2988, %v4444
        %v4459 = vmul.f32 %v4398, %v4444
        %v4460 = vmul.f32 %v2992, %v4444
        %v4461 = vmul.f32 %v2996, %v4444
        %v4462 = vmul.f32 %v4402, %v4444
        %v4463 = vmul.f32 %v3000, %v4444
        %v4464 = vmul.f32 %v3004, %v4444
        %v4465 = vmul.f32 %v4406, %v4444
        %v4466 = vmul.f32 %v3008, %v4444
        %v4467 = vmul.f32 %v3012, %v4444
        %v4468 = vmul.f32 %v4410, %v4444
        %v4469 = vmul.f32 %v3016, %v4444
        %v4470 = vmul.f32 %v3020, %v4444
        %v4471 = vmul.f32 %v4414, %v4444
        %v4472 = vmul.f32 %v3024, %v4444
        %v4473 = vmul.f32 %v3028, %v4444
        %v4474 = vmul.f32 %v4418, %v4444
        %v4475 = vmul.f32 %v3032, %v4444
        %v4476 = vmul.f32 %v3036, %v4444
        %v4477 = vmul.f32 %v4422, %v4444
        %v4478 = vmul.f32 %v3040, %v4444
        %v4479 = vmul.f32 %v3044, %v4444
        %v4480 = vmul.f32 %v4426, %v4444
        %v4481 = vmul.f32 %v3048, %v4444
        %v4482 = vmul.f32 %v3052, %v4444
        %v4483 = vmul.f32 %v4430, %v4444
        %v4484 = vmul.f32 %v3056, %v4444
        %v4485 = vmul.f32 %v3060, %v4444
        %v4486 = vmul.f32 %v4434, %v4444
        %v4487 = vmul.f32 %v3064, %v4444
        %v4488 = vmul.f32 %v3068, %v4444
        %v4489 = vmul.f32 %v4438, %v4444
        %v4490 = vmul.f32 %v3072, %v4444
        %v4491 = vmul.f32 %v3076, %v4444
        %v4492 = vmul.f32 %v4442, %v4444
        %v4541 = vrot.slane %v4445, 1
        %v4542 = vrot.slane %v4446, 1
        %v4543 = vsel %vm1777, %v4541, %v4542
        %v4544 = vrot.slane %v4447, 1
        %v4545 = vsel %vm1777, %v4542, %v4544
        %v4546 = vrot.slane %v4448, 1
        %v4547 = vrot.slane %v4449, 1
        %v4548 = vsel %vm1777, %v4546, %v4547
        %v4549 = vrot.slane %v4450, 1
        %v4550 = vsel %vm1777, %v4547, %v4549
        %v4551 = vrot.slane %v4451, 1
        %v4552 = vrot.slane %v4452, 1
        %v4553 = vsel %vm1777, %v4551, %v4552
        %v4554 = vrot.slane %v4453, 1
        %v4555 = vsel %vm1777, %v4552, %v4554
        %v4556 = vrot.slane %v4454, 1
        %v4557 = vrot.slane %v4455, 1
        %v4558 = vsel %vm1777, %v4556, %v4557
        %v4559 = vrot.slane %v4456, 1
        %v4560 = vsel %vm1777, %v4557, %v4559
        %v4561 = vrot.slane %v4457, 1
        %v4562 = vrot.slane %v4458, 1
        %v4563 = vsel %vm1777, %v4561, %v4562
        %v4564 = vrot.slane %v4459, 1
        %v4565 = vsel %vm1777, %v4562, %v4564
        %v4566 = vrot.slane %v4460, 1
        %v4567 = vrot.slane %v4461, 1
        %v4568 = vsel %vm1777, %v4566, %v4567
        %v4569 = vrot.slane %v4462, 1
        %v4570 = vsel %vm1777, %v4567, %v4569
        %v4571 = vrot.slane %v4463, 1
        %v4572 = vrot.slane %v4464, 1
        %v4573 = vsel %vm1777, %v4571, %v4572
        %v4574 = vrot.slane %v4465, 1
        %v4575 = vsel %vm1777, %v4572, %v4574
        %v4576 = vrot.slane %v4466, 1
        %v4577 = vrot.slane %v4467, 1
        %v4578 = vsel %vm1777, %v4576, %v4577
        %v4579 = vrot.slane %v4468, 1
        %v4580 = vsel %vm1777, %v4577, %v4579
        %v4581 = vrot.slane %v4469, 1
        %v4582 = vrot.slane %v4470, 1
        %v4583 = vsel %vm1777, %v4581, %v4582
        %v4584 = vrot.slane %v4471, 1
        %v4585 = vsel %vm1777, %v4582, %v4584
        %v4586 = vrot.slane %v4472, 1
        %v4587 = vrot.slane %v4473, 1
        %v4588 = vsel %vm1777, %v4586, %v4587
        %v4589 = vrot.slane %v4474, 1
        %v4590 = vsel %vm1777, %v4587, %v4589
        %v4591 = vrot.slane %v4475, 1
        %v4592 = vrot.slane %v4476, 1
        %v4593 = vsel %vm1777, %v4591, %v4592
        %v4594 = vrot.slane %v4477, 1
        %v4595 = vsel %vm1777, %v4592, %v4594
        %v4596 = vrot.slane %v4478, 1
        %v4597 = vrot.slane %v4479, 1
        %v4598 = vsel %vm1777, %v4596, %v4597
        %v4599 = vrot.slane %v4480, 1
        %v4600 = vsel %vm1777, %v4597, %v4599
        %v4601 = vrot.slane %v4481, 1
        %v4602 = vrot.slane %v4482, 1
        %v4603 = vsel %vm1777, %v4601, %v4602
        %v4604 = vrot.slane %v4483, 1
        %v4605 = vsel %vm1777, %v4602, %v4604
        %v4606 = vrot.slane %v4484, 1
        %v4607 = vrot.slane %v4485, 1
        %v4608 = vsel %vm1777, %v4606, %v4607
        %v4609 = vrot.slane %v4486, 1
        %v4610 = vsel %vm1777, %v4607, %v4609
        %v4611 = vrot.slane %v4487, 1
        %v4612 = vrot.slane %v4488, 1
        %v4613 = vsel %vm1777, %v4611, %v4612
        %v4614 = vrot.slane %v4489, 1
        %v4615 = vsel %vm1777, %v4612, %v4614
        %v4616 = vrot.slane %v4490, 1
        %v4617 = vrot.slane %v4491, 1
        %v4618 = vsel %vm1777, %v4616, %v4617
        %v4619 = vrot.slane %v4492, 1
        %v4620 = vsel %vm1777, %v4617, %v4619
        %v4653 = vadd.f32 %v4348, %v4543
        %v4654 = vadd.f32 %v4349, %v4545
        %v4655 = vadd.f32 %v4350, %v4548
        %v4656 = vadd.f32 %v4351, %v4550
        %v4657 = vadd.f32 %v4352, %v4553
        %v4658 = vadd.f32 %v4353, %v4555
        %v4659 = vadd.f32 %v4354, %v4558
        %v4660 = vadd.f32 %v4355, %v4560
        %v4661 = vadd.f32 %v4356, %v4563
        %v4662 = vadd.f32 %v4357, %v4565
        %v4663 = vadd.f32 %v4358, %v4568
        %v4664 = vadd.f32 %v4359, %v4570
        %v4665 = vadd.f32 %v4360, %v4573
        %v4666 = vadd.f32 %v4361, %v4575
        %v4667 = vadd.f32 %v4362, %v4578
        %v4668 = vadd.f32 %v4363, %v4580
        %v4669 = vadd.f32 %v4364, %v4583
        %v4670 = vadd.f32 %v4365, %v4585
        %v4671 = vadd.f32 %v4366, %v4588
        %v4672 = vadd.f32 %v4367, %v4590
        %v4673 = vadd.f32 %v4368, %v4593
        %v4674 = vadd.f32 %v4369, %v4595
        %v4675 = vadd.f32 %v4370, %v4598
        %v4676 = vadd.f32 %v4371, %v4600
        %v4677 = vadd.f32 %v4372, %v4603
        %v4678 = vadd.f32 %v4373, %v4605
        %v4679 = vadd.f32 %v4374, %v4608
        %v4680 = vadd.f32 %v4375, %v4610
        %v4681 = vadd.f32 %v4376, %v4613
        %v4682 = vadd.f32 %v4377, %v4615
        %v4683 = vadd.f32 %v4378, %v4618
        %v4684 = vadd.f32 %v4379, %v4620
        %4686 = vset.pattern.permute.xlu0 0
        %4687 = vperm.xlu0 %4686, %v249
        %v4688 = vpop.permute.xlu0 %4687
        %4691 = vset.pattern.permute.xlu0 0
        %4692 = vperm.xlu0 %4691, %v250
        %v4693 = vpop.permute.xlu0 %4692
        %v4695 = vperm.slane %v375, 0
        %v4696 = vmul.f32 %v391, %v4695
        %v4697 = vmul.f32 %v396, %v4695
        %v4698 = vmul.f32 %v401, %v4695
        %v4699 = vmul.f32 %v406, %v4695
        %v4700 = vmul.f32 %v411, %v4695
        %v4701 = vmul.f32 %v416, %v4695
        %v4702 = vmul.f32 %v421, %v4695
        %v4703 = vmul.f32 %v426, %v4695
        %v4704 = vmul.f32 %v431, %v4695
        %v4705 = vmul.f32 %v436, %v4695
        %v4706 = vmul.f32 %v441, %v4695
        %v4707 = vmul.f32 %v446, %v4695
        %v4708 = vmul.f32 %v451, %v4695
        %v4709 = vmul.f32 %v456, %v4695
        %v4710 = vmul.f32 %v461, %v4695
        %v4711 = vmul.f32 %v466, %v4695
        %v4712 = vmul.f32 %v471, %v4695
        %v4713 = vmul.f32 %v476, %v4695
        %v4714 = vmul.f32 %v481, %v4695
        %v4715 = vmul.f32 %v486, %v4695
        %v4716 = vmul.f32 %v491, %v4695
        %v4717 = vmul.f32 %v496, %v4695
        %v4718 = vmul.f32 %v501, %v4695
        %v4719 = vmul.f32 %v506, %v4695
        %v4720 = vmul.f32 %v511, %v4695
        %v4721 = vmul.f32 %v516, %v4695
        %v4722 = vmul.f32 %v521, %v4695
        %v4723 = vmul.f32 %v526, %v4695
        %v4724 = vmul.f32 %v531, %v4695
        %v4725 = vmul.f32 %v536, %v4695
        %v4726 = vmul.f32 %v4688, %v4695
        %v4727 = vmul.f32 %v4693, %v4695
        %v4728 = vadd.f32 %v4653, %v4696
        %v4729 = vadd.f32 %v4654, %v4697
        %v4730 = vadd.f32 %v4655, %v4698
        %v4731 = vadd.f32 %v4656, %v4699
        %v4732 = vadd.f32 %v4657, %v4700
        %v4733 = vadd.f32 %v4658, %v4701
        %v4734 = vadd.f32 %v4659, %v4702
        %v4735 = vadd.f32 %v4660, %v4703
        %v4736 = vadd.f32 %v4661, %v4704
        %v4737 = vadd.f32 %v4662, %v4705
        %v4738 = vadd.f32 %v4663, %v4706
        %v4739 = vadd.f32 %v4664, %v4707
        %v4740 = vadd.f32 %v4665, %v4708
        %v4741 = vadd.f32 %v4666, %v4709
        %v4742 = vadd.f32 %v4667, %v4710
        %v4743 = vadd.f32 %v4668, %v4711
        %v4744 = vadd.f32 %v4669, %v4712
        %v4745 = vadd.f32 %v4670, %v4713
        %v4746 = vadd.f32 %v4671, %v4714
        %v4747 = vadd.f32 %v4672, %v4715
        %v4748 = vadd.f32 %v4673, %v4716
        %v4749 = vadd.f32 %v4674, %v4717
        %v4750 = vadd.f32 %v4675, %v4718
        %v4751 = vadd.f32 %v4676, %v4719
        %v4752 = vadd.f32 %v4677, %v4720
        %v4753 = vadd.f32 %v4678, %v4721
        %v4754 = vadd.f32 %v4679, %v4722
        %v4755 = vadd.f32 %v4680, %v4723
        %v4756 = vadd.f32 %v4681, %v4724
        %v4757 = vadd.f32 %v4682, %v4725
        %v4758 = vadd.f32 %v4683, %v4726
        %v4759 = vadd.f32 %v4684, %v4727
        %4760 = vset.pattern.permute.xlu0 1
        %4761 = vperm.xlu0 %4760, %v249
        %v4762 = vpop.permute.xlu0 %4761
        %4764 = vset.pattern.permute.xlu0 1
        %4765 = vperm.xlu0 %4764, %v250
        %v4766 = vpop.permute.xlu0 %4765
        %v4768 = vperm.slane %v375, 1
        %v4769 = vmul.f32 %v613, %v4768
        %v4770 = vmul.f32 %v617, %v4768
        %v4771 = vmul.f32 %v621, %v4768
        %v4772 = vmul.f32 %v625, %v4768
        %v4773 = vmul.f32 %v629, %v4768
        %v4774 = vmul.f32 %v633, %v4768
        %v4775 = vmul.f32 %v637, %v4768
        %v4776 = vmul.f32 %v641, %v4768
        %v4777 = vmul.f32 %v645, %v4768
        %v4778 = vmul.f32 %v649, %v4768
        %v4779 = vmul.f32 %v653, %v4768
        %v4780 = vmul.f32 %v657, %v4768
        %v4781 = vmul.f32 %v661, %v4768
        %v4782 = vmul.f32 %v665, %v4768
        %v4783 = vmul.f32 %v669, %v4768
        %v4784 = vmul.f32 %v673, %v4768
        %v4785 = vmul.f32 %v677, %v4768
        %v4786 = vmul.f32 %v681, %v4768
        %v4787 = vmul.f32 %v685, %v4768
        %v4788 = vmul.f32 %v689, %v4768
        %v4789 = vmul.f32 %v693, %v4768
        %v4790 = vmul.f32 %v697, %v4768
        %v4791 = vmul.f32 %v701, %v4768
        %v4792 = vmul.f32 %v705, %v4768
        %v4793 = vmul.f32 %v709, %v4768
        %v4794 = vmul.f32 %v713, %v4768
        %v4795 = vmul.f32 %v717, %v4768
        %v4796 = vmul.f32 %v721, %v4768
        %v4797 = vmul.f32 %v725, %v4768
        %v4798 = vmul.f32 %v729, %v4768
        %v4799 = vmul.f32 %v4762, %v4768
        %v4800 = vmul.f32 %v4766, %v4768
        %v4801 = vadd.f32 %v4728, %v4769
        %v4802 = vadd.f32 %v4729, %v4770
        %v4803 = vadd.f32 %v4730, %v4771
        %v4804 = vadd.f32 %v4731, %v4772
        %v4805 = vadd.f32 %v4732, %v4773
        %v4806 = vadd.f32 %v4733, %v4774
        %v4807 = vadd.f32 %v4734, %v4775
        %v4808 = vadd.f32 %v4735, %v4776
        %v4809 = vadd.f32 %v4736, %v4777
        %v4810 = vadd.f32 %v4737, %v4778
        %v4811 = vadd.f32 %v4738, %v4779
        %v4812 = vadd.f32 %v4739, %v4780
        %v4813 = vadd.f32 %v4740, %v4781
        %v4814 = vadd.f32 %v4741, %v4782
        %v4815 = vadd.f32 %v4742, %v4783
        %v4816 = vadd.f32 %v4743, %v4784
        %v4817 = vadd.f32 %v4744, %v4785
        %v4818 = vadd.f32 %v4745, %v4786
        %v4819 = vadd.f32 %v4746, %v4787
        %v4820 = vadd.f32 %v4747, %v4788
        %v4821 = vadd.f32 %v4748, %v4789
        %v4822 = vadd.f32 %v4749, %v4790
        %v4823 = vadd.f32 %v4750, %v4791
        %v4824 = vadd.f32 %v4751, %v4792
        %v4825 = vadd.f32 %v4752, %v4793
        %v4826 = vadd.f32 %v4753, %v4794
        %v4827 = vadd.f32 %v4754, %v4795
        %v4828 = vadd.f32 %v4755, %v4796
        %v4829 = vadd.f32 %v4756, %v4797
        %v4830 = vadd.f32 %v4757, %v4798
        %v4831 = vadd.f32 %v4758, %v4799
        %v4832 = vadd.f32 %v4759, %v4800
        %4833 = vset.pattern.permute.xlu0 2
        %4834 = vperm.xlu0 %4833, %v249
        %v4835 = vpop.permute.xlu0 %4834
        %4837 = vset.pattern.permute.xlu0 2
        %4838 = vperm.xlu0 %4837, %v250
        %v4839 = vpop.permute.xlu0 %4838
        %v4841 = vperm.slane %v375, 2
        %v4842 = vmul.f32 %v806, %v4841
        %v4843 = vmul.f32 %v810, %v4841
        %v4844 = vmul.f32 %v814, %v4841
        %v4845 = vmul.f32 %v818, %v4841
        %v4846 = vmul.f32 %v822, %v4841
        %v4847 = vmul.f32 %v826, %v4841
        %v4848 = vmul.f32 %v830, %v4841
        %v4849 = vmul.f32 %v834, %v4841
        %v4850 = vmul.f32 %v838, %v4841
        %v4851 = vmul.f32 %v842, %v4841
        %v4852 = vmul.f32 %v846, %v4841
        %v4853 = vmul.f32 %v850, %v4841
        %v4854 = vmul.f32 %v854, %v4841
        %v4855 = vmul.f32 %v858, %v4841
        %v4856 = vmul.f32 %v862, %v4841
        %v4857 = vmul.f32 %v866, %v4841
        %v4858 = vmul.f32 %v870, %v4841
        %v4859 = vmul.f32 %v874, %v4841
        %v4860 = vmul.f32 %v878, %v4841
        %v4861 = vmul.f32 %v882, %v4841
        %v4862 = vmul.f32 %v886, %v4841
        %v4863 = vmul.f32 %v890, %v4841
        %v4864 = vmul.f32 %v894, %v4841
        %v4865 = vmul.f32 %v898, %v4841
        %v4866 = vmul.f32 %v902, %v4841
        %v4867 = vmul.f32 %v906, %v4841
        %v4868 = vmul.f32 %v910, %v4841
        %v4869 = vmul.f32 %v914, %v4841
        %v4870 = vmul.f32 %v918, %v4841
        %v4871 = vmul.f32 %v922, %v4841
        %v4872 = vmul.f32 %v4835, %v4841
        %v4873 = vmul.f32 %v4839, %v4841
        %v4874 = vadd.f32 %v4801, %v4842
        %v4875 = vadd.f32 %v4802, %v4843
        %v4876 = vadd.f32 %v4803, %v4844
        %v4877 = vadd.f32 %v4804, %v4845
        %v4878 = vadd.f32 %v4805, %v4846
        %v4879 = vadd.f32 %v4806, %v4847
        %v4880 = vadd.f32 %v4807, %v4848
        %v4881 = vadd.f32 %v4808, %v4849
        %v4882 = vadd.f32 %v4809, %v4850
        %v4883 = vadd.f32 %v4810, %v4851
        %v4884 = vadd.f32 %v4811, %v4852
        %v4885 = vadd.f32 %v4812, %v4853
        %v4886 = vadd.f32 %v4813, %v4854
        %v4887 = vadd.f32 %v4814, %v4855
        %v4888 = vadd.f32 %v4815, %v4856
        %v4889 = vadd.f32 %v4816, %v4857
        %v4890 = vadd.f32 %v4817, %v4858
        %v4891 = vadd.f32 %v4818, %v4859
        %v4892 = vadd.f32 %v4819, %v4860
        %v4893 = vadd.f32 %v4820, %v4861
        %v4894 = vadd.f32 %v4821, %v4862
        %v4895 = vadd.f32 %v4822, %v4863
        %v4896 = vadd.f32 %v4823, %v4864
        %v4897 = vadd.f32 %v4824, %v4865
        %v4898 = vadd.f32 %v4825, %v4866
        %v4899 = vadd.f32 %v4826, %v4867
        %v4900 = vadd.f32 %v4827, %v4868
        %v4901 = vadd.f32 %v4828, %v4869
        %v4902 = vadd.f32 %v4829, %v4870
        %v4903 = vadd.f32 %v4830, %v4871
        %v4904 = vadd.f32 %v4831, %v4872
        %v4905 = vadd.f32 %v4832, %v4873
        %4907 = vset.pattern.permute.xlu0 0
        %4908 = vperm.xlu0 %4907, %v285
        %v4909 = vpop.permute.xlu0 %4908
        %4912 = vset.pattern.permute.xlu0 0
        %4913 = vperm.xlu0 %4912, %v286
        %v4914 = vpop.permute.xlu0 %4913
        %v4916 = vperm.slane %v376, 0
        %v4917 = vmul.f32 %v1002, %v4916
        %v4918 = vmul.f32 %v1007, %v4916
        %v4919 = vmul.f32 %v1012, %v4916
        %v4920 = vmul.f32 %v1017, %v4916
        %v4921 = vmul.f32 %v1022, %v4916
        %v4922 = vmul.f32 %v1027, %v4916
        %v4923 = vmul.f32 %v1032, %v4916
        %v4924 = vmul.f32 %v1037, %v4916
        %v4925 = vmul.f32 %v1042, %v4916
        %v4926 = vmul.f32 %v1047, %v4916
        %v4927 = vmul.f32 %v1052, %v4916
        %v4928 = vmul.f32 %v1057, %v4916
        %v4929 = vmul.f32 %v1062, %v4916
        %v4930 = vmul.f32 %v1067, %v4916
        %v4931 = vmul.f32 %v1072, %v4916
        %v4932 = vmul.f32 %v1077, %v4916
        %v4933 = vmul.f32 %v1082, %v4916
        %v4934 = vmul.f32 %v1087, %v4916
        %v4935 = vmul.f32 %v1092, %v4916
        %v4936 = vmul.f32 %v1097, %v4916
        %v4937 = vmul.f32 %v1102, %v4916
        %v4938 = vmul.f32 %v1107, %v4916
        %v4939 = vmul.f32 %v1112, %v4916
        %v4940 = vmul.f32 %v1117, %v4916
        %v4941 = vmul.f32 %v1122, %v4916
        %v4942 = vmul.f32 %v1127, %v4916
        %v4943 = vmul.f32 %v1132, %v4916
        %v4944 = vmul.f32 %v1137, %v4916
        %v4945 = vmul.f32 %v1142, %v4916
        %v4946 = vmul.f32 %v1147, %v4916
        %v4947 = vmul.f32 %v4909, %v4916
        %v4948 = vmul.f32 %v4914, %v4916
        %v4949 = vadd.f32 %v4874, %v4917
        %v4950 = vadd.f32 %v4875, %v4918
        %v4951 = vadd.f32 %v4876, %v4919
        %v4952 = vadd.f32 %v4877, %v4920
        %v4953 = vadd.f32 %v4878, %v4921
        %v4954 = vadd.f32 %v4879, %v4922
        %v4955 = vadd.f32 %v4880, %v4923
        %v4956 = vadd.f32 %v4881, %v4924
        %v4957 = vadd.f32 %v4882, %v4925
        %v4958 = vadd.f32 %v4883, %v4926
        %v4959 = vadd.f32 %v4884, %v4927
        %v4960 = vadd.f32 %v4885, %v4928
        %v4961 = vadd.f32 %v4886, %v4929
        %v4962 = vadd.f32 %v4887, %v4930
        %v4963 = vadd.f32 %v4888, %v4931
        %v4964 = vadd.f32 %v4889, %v4932
        %v4965 = vadd.f32 %v4890, %v4933
        %v4966 = vadd.f32 %v4891, %v4934
        %v4967 = vadd.f32 %v4892, %v4935
        %v4968 = vadd.f32 %v4893, %v4936
        %v4969 = vadd.f32 %v4894, %v4937
        %v4970 = vadd.f32 %v4895, %v4938
        %v4971 = vadd.f32 %v4896, %v4939
        %v4972 = vadd.f32 %v4897, %v4940
        %v4973 = vadd.f32 %v4898, %v4941
        %v4974 = vadd.f32 %v4899, %v4942
        %v4975 = vadd.f32 %v4900, %v4943
        %v4976 = vadd.f32 %v4901, %v4944
        %v4977 = vadd.f32 %v4902, %v4945
        %v4978 = vadd.f32 %v4903, %v4946
        %v4979 = vadd.f32 %v4904, %v4947
        %v4980 = vadd.f32 %v4905, %v4948
        %4981 = vset.pattern.permute.xlu0 1
        %4982 = vperm.xlu0 %4981, %v285
        %v4983 = vpop.permute.xlu0 %4982
        %4985 = vset.pattern.permute.xlu0 1
        %4986 = vperm.xlu0 %4985, %v286
        %v4987 = vpop.permute.xlu0 %4986
        %v4989 = vperm.slane %v376, 1
        %v4990 = vmul.f32 %v1224, %v4989
        %v4991 = vmul.f32 %v1228, %v4989
        %v4992 = vmul.f32 %v1232, %v4989
        %v4993 = vmul.f32 %v1236, %v4989
        %v4994 = vmul.f32 %v1240, %v4989
        %v4995 = vmul.f32 %v1244, %v4989
        %v4996 = vmul.f32 %v1248, %v4989
        %v4997 = vmul.f32 %v1252, %v4989
        %v4998 = vmul.f32 %v1256, %v4989
        %v4999 = vmul.f32 %v1260, %v4989
        %v5000 = vmul.f32 %v1264, %v4989
        %v5001 = vmul.f32 %v1268, %v4989
        %v5002 = vmul.f32 %v1272, %v4989
        %v5003 = vmul.f32 %v1276, %v4989
        %v5004 = vmul.f32 %v1280, %v4989
        %v5005 = vmul.f32 %v1284, %v4989
        %v5006 = vmul.f32 %v1288, %v4989
        %v5007 = vmul.f32 %v1292, %v4989
        %v5008 = vmul.f32 %v1296, %v4989
        %v5009 = vmul.f32 %v1300, %v4989
        %v5010 = vmul.f32 %v1304, %v4989
        %v5011 = vmul.f32 %v1308, %v4989
        %v5012 = vmul.f32 %v1312, %v4989
        %v5013 = vmul.f32 %v1316, %v4989
        %v5014 = vmul.f32 %v1320, %v4989
        %v5015 = vmul.f32 %v1324, %v4989
        %v5016 = vmul.f32 %v1328, %v4989
        %v5017 = vmul.f32 %v1332, %v4989
        %v5018 = vmul.f32 %v1336, %v4989
        %v5019 = vmul.f32 %v1340, %v4989
        %v5020 = vmul.f32 %v4983, %v4989
        %v5021 = vmul.f32 %v4987, %v4989
        %v5022 = vadd.f32 %v4949, %v4990
        %v5023 = vadd.f32 %v4950, %v4991
        %v5024 = vadd.f32 %v4951, %v4992
        %v5025 = vadd.f32 %v4952, %v4993
        %v5026 = vadd.f32 %v4953, %v4994
        %v5027 = vadd.f32 %v4954, %v4995
        %v5028 = vadd.f32 %v4955, %v4996
        %v5029 = vadd.f32 %v4956, %v4997
        %v5030 = vadd.f32 %v4957, %v4998
        %v5031 = vadd.f32 %v4958, %v4999
        %v5032 = vadd.f32 %v4959, %v5000
        %v5033 = vadd.f32 %v4960, %v5001
        %v5034 = vadd.f32 %v4961, %v5002
        %v5035 = vadd.f32 %v4962, %v5003
        %v5036 = vadd.f32 %v4963, %v5004
        %v5037 = vadd.f32 %v4964, %v5005
        %v5038 = vadd.f32 %v4965, %v5006
        %v5039 = vadd.f32 %v4966, %v5007
        %v5040 = vadd.f32 %v4967, %v5008
        %v5041 = vadd.f32 %v4968, %v5009
        %v5042 = vadd.f32 %v4969, %v5010
        %v5043 = vadd.f32 %v4970, %v5011
        %v5044 = vadd.f32 %v4971, %v5012
        %v5045 = vadd.f32 %v4972, %v5013
        %v5046 = vadd.f32 %v4973, %v5014
        %v5047 = vadd.f32 %v4974, %v5015
        %v5048 = vadd.f32 %v4975, %v5016
        %v5049 = vadd.f32 %v4976, %v5017
        %v5050 = vadd.f32 %v4977, %v5018
        %v5051 = vadd.f32 %v4978, %v5019
        %v5052 = vadd.f32 %v4979, %v5020
        %v5053 = vadd.f32 %v4980, %v5021
        %5054 = vset.pattern.permute.xlu0 2
        %5055 = vperm.xlu0 %5054, %v285
        %v5056 = vpop.permute.xlu0 %5055
        %5058 = vset.pattern.permute.xlu0 2
        %5059 = vperm.xlu0 %5058, %v286
        %v5060 = vpop.permute.xlu0 %5059
        %v5062 = vperm.slane %v376, 2
        %v5063 = vmul.f32 %v1417, %v5062
        %v5064 = vmul.f32 %v1421, %v5062
        %v5065 = vmul.f32 %v1425, %v5062
        %v5066 = vmul.f32 %v1429, %v5062
        %v5067 = vmul.f32 %v1433, %v5062
        %v5068 = vmul.f32 %v1437, %v5062
        %v5069 = vmul.f32 %v1441, %v5062
        %v5070 = vmul.f32 %v1445, %v5062
        %v5071 = vmul.f32 %v1449, %v5062
        %v5072 = vmul.f32 %v1453, %v5062
        %v5073 = vmul.f32 %v1457, %v5062
        %v5074 = vmul.f32 %v1461, %v5062
        %v5075 = vmul.f32 %v1465, %v5062
        %v5076 = vmul.f32 %v1469, %v5062
        %v5077 = vmul.f32 %v1473, %v5062
        %v5078 = vmul.f32 %v1477, %v5062
        %v5079 = vmul.f32 %v1481, %v5062
        %v5080 = vmul.f32 %v1485, %v5062
        %v5081 = vmul.f32 %v1489, %v5062
        %v5082 = vmul.f32 %v1493, %v5062
        %v5083 = vmul.f32 %v1497, %v5062
        %v5084 = vmul.f32 %v1501, %v5062
        %v5085 = vmul.f32 %v1505, %v5062
        %v5086 = vmul.f32 %v1509, %v5062
        %v5087 = vmul.f32 %v1513, %v5062
        %v5088 = vmul.f32 %v1517, %v5062
        %v5089 = vmul.f32 %v1521, %v5062
        %v5090 = vmul.f32 %v1525, %v5062
        %v5091 = vmul.f32 %v1529, %v5062
        %v5092 = vmul.f32 %v1533, %v5062
        %v5093 = vmul.f32 %v5056, %v5062
        %v5094 = vmul.f32 %v5060, %v5062
        %v5095 = vadd.f32 %v5022, %v5063
        %v5096 = vadd.f32 %v5023, %v5064
        %v5097 = vadd.f32 %v5024, %v5065
        %v5098 = vadd.f32 %v5025, %v5066
        %v5099 = vadd.f32 %v5026, %v5067
        %v5100 = vadd.f32 %v5027, %v5068
        %v5101 = vadd.f32 %v5028, %v5069
        %v5102 = vadd.f32 %v5029, %v5070
        %v5103 = vadd.f32 %v5030, %v5071
        %v5104 = vadd.f32 %v5031, %v5072
        %v5105 = vadd.f32 %v5032, %v5073
        %v5106 = vadd.f32 %v5033, %v5074
        %v5107 = vadd.f32 %v5034, %v5075
        %v5108 = vadd.f32 %v5035, %v5076
        %v5109 = vadd.f32 %v5036, %v5077
        %v5110 = vadd.f32 %v5037, %v5078
        %v5111 = vadd.f32 %v5038, %v5079
        %v5112 = vadd.f32 %v5039, %v5080
        %v5113 = vadd.f32 %v5040, %v5081
        %v5114 = vadd.f32 %v5041, %v5082
        %v5115 = vadd.f32 %v5042, %v5083
        %v5116 = vadd.f32 %v5043, %v5084
        %v5117 = vadd.f32 %v5044, %v5085
        %v5118 = vadd.f32 %v5045, %v5086
        %v5119 = vadd.f32 %v5046, %v5087
        %v5120 = vadd.f32 %v5047, %v5088
        %v5121 = vadd.f32 %v5048, %v5089
        %v5122 = vadd.f32 %v5049, %v5090
        %v5123 = vadd.f32 %v5050, %v5091
        %v5124 = vadd.f32 %v5051, %v5092
        %v5125 = vadd.f32 %v5052, %v5093
        %v5126 = vadd.f32 %v5053, %v5094
        %5128 = vset.pattern.permute.xlu0 0
        %5129 = vperm.xlu0 %5128, %v251
        %v5130 = vpop.permute.xlu0 %5129
        %v5132 = vperm.slane %v377, 0
        %v5133 = vmul.f32 %v391, %v5132
        %v5134 = vmul.f32 %v396, %v5132
        %v5135 = vmul.f32 %v1608, %v5132
        %v5136 = vmul.f32 %v401, %v5132
        %v5137 = vmul.f32 %v406, %v5132
        %v5138 = vmul.f32 %v1613, %v5132
        %v5139 = vmul.f32 %v411, %v5132
        %v5140 = vmul.f32 %v416, %v5132
        %v5141 = vmul.f32 %v1618, %v5132
        %v5142 = vmul.f32 %v421, %v5132
        %v5143 = vmul.f32 %v426, %v5132
        %v5144 = vmul.f32 %v1623, %v5132
        %v5145 = vmul.f32 %v431, %v5132
        %v5146 = vmul.f32 %v436, %v5132
        %v5147 = vmul.f32 %v1628, %v5132
        %v5148 = vmul.f32 %v441, %v5132
        %v5149 = vmul.f32 %v446, %v5132
        %v5150 = vmul.f32 %v1633, %v5132
        %v5151 = vmul.f32 %v451, %v5132
        %v5152 = vmul.f32 %v456, %v5132
        %v5153 = vmul.f32 %v1638, %v5132
        %v5154 = vmul.f32 %v461, %v5132
        %v5155 = vmul.f32 %v466, %v5132
        %v5156 = vmul.f32 %v1643, %v5132
        %v5157 = vmul.f32 %v471, %v5132
        %v5158 = vmul.f32 %v476, %v5132
        %v5159 = vmul.f32 %v1648, %v5132
        %v5160 = vmul.f32 %v481, %v5132
        %v5161 = vmul.f32 %v486, %v5132
        %v5162 = vmul.f32 %v1653, %v5132
        %v5163 = vmul.f32 %v491, %v5132
        %v5164 = vmul.f32 %v496, %v5132
        %v5165 = vmul.f32 %v1658, %v5132
        %v5166 = vmul.f32 %v501, %v5132
        %v5167 = vmul.f32 %v506, %v5132
        %v5168 = vmul.f32 %v1663, %v5132
        %v5169 = vmul.f32 %v511, %v5132
        %v5170 = vmul.f32 %v516, %v5132
        %v5171 = vmul.f32 %v1668, %v5132
        %v5172 = vmul.f32 %v521, %v5132
        %v5173 = vmul.f32 %v526, %v5132
        %v5174 = vmul.f32 %v1673, %v5132
        %v5175 = vmul.f32 %v531, %v5132
        %v5176 = vmul.f32 %v536, %v5132
        %v5177 = vmul.f32 %v1678, %v5132
        %v5178 = vmul.f32 %v4688, %v5132
        %v5179 = vmul.f32 %v4693, %v5132
        %v5180 = vmul.f32 %v5130, %v5132
        %v5229 = vrot.slane %v5133, 1
        %v5230 = vrot.slane %v5134, 1
        %v5231 = vsel %vm1777, %v5229, %v5230
        %v5232 = vrot.slane %v5135, 1
        %v5233 = vsel %vm1777, %v5230, %v5232
        %v5234 = vrot.slane %v5136, 1
        %v5235 = vrot.slane %v5137, 1
        %v5236 = vsel %vm1777, %v5234, %v5235
        %v5237 = vrot.slane %v5138, 1
        %v5238 = vsel %vm1777, %v5235, %v5237
        %v5239 = vrot.slane %v5139, 1
        %v5240 = vrot.slane %v5140, 1
        %v5241 = vsel %vm1777, %v5239, %v5240
        %v5242 = vrot.slane %v5141, 1
        %v5243 = vsel %vm1777, %v5240, %v5242
        %v5244 = vrot.slane %v5142, 1
        %v5245 = vrot.slane %v5143, 1
        %v5246 = vsel %vm1777, %v5244, %v5245
        %v5247 = vrot.slane %v5144, 1
        %v5248 = vsel %vm1777, %v5245, %v5247
        %v5249 = vrot.slane %v5145, 1
        %v5250 = vrot.slane %v5146, 1
        %v5251 = vsel %vm1777, %v5249, %v5250
        %v5252 = vrot.slane %v5147, 1
        %v5253 = vsel %vm1777, %v5250, %v5252
        %v5254 = vrot.slane %v5148, 1
        %v5255 = vrot.slane %v5149, 1
        %v5256 = vsel %vm1777, %v5254, %v5255
        %v5257 = vrot.slane %v5150, 1
        %v5258 = vsel %vm1777, %v5255, %v5257
        %v5259 = vrot.slane %v5151, 1
        %v5260 = vrot.slane %v5152, 1
        %v5261 = vsel %vm1777, %v5259, %v5260
        %v5262 = vrot.slane %v5153, 1
        %v5263 = vsel %vm1777, %v5260, %v5262
        %v5264 = vrot.slane %v5154, 1
        %v5265 = vrot.slane %v5155, 1
        %v5266 = vsel %vm1777, %v5264, %v5265
        %v5267 = vrot.slane %v5156, 1
        %v5268 = vsel %vm1777, %v5265, %v5267
        %v5269 = vrot.slane %v5157, 1
        %v5270 = vrot.slane %v5158, 1
        %v5271 = vsel %vm1777, %v5269, %v5270
        %v5272 = vrot.slane %v5159, 1
        %v5273 = vsel %vm1777, %v5270, %v5272
        %v5274 = vrot.slane %v5160, 1
        %v5275 = vrot.slane %v5161, 1
        %v5276 = vsel %vm1777, %v5274, %v5275
        %v5277 = vrot.slane %v5162, 1
        %v5278 = vsel %vm1777, %v5275, %v5277
        %v5279 = vrot.slane %v5163, 1
        %v5280 = vrot.slane %v5164, 1
        %v5281 = vsel %vm1777, %v5279, %v5280
        %v5282 = vrot.slane %v5165, 1
        %v5283 = vsel %vm1777, %v5280, %v5282
        %v5284 = vrot.slane %v5166, 1
        %v5285 = vrot.slane %v5167, 1
        %v5286 = vsel %vm1777, %v5284, %v5285
        %v5287 = vrot.slane %v5168, 1
        %v5288 = vsel %vm1777, %v5285, %v5287
        %v5289 = vrot.slane %v5169, 1
        %v5290 = vrot.slane %v5170, 1
        %v5291 = vsel %vm1777, %v5289, %v5290
        %v5292 = vrot.slane %v5171, 1
        %v5293 = vsel %vm1777, %v5290, %v5292
        %v5294 = vrot.slane %v5172, 1
        %v5295 = vrot.slane %v5173, 1
        %v5296 = vsel %vm1777, %v5294, %v5295
        %v5297 = vrot.slane %v5174, 1
        %v5298 = vsel %vm1777, %v5295, %v5297
        %v5299 = vrot.slane %v5175, 1
        %v5300 = vrot.slane %v5176, 1
        %v5301 = vsel %vm1777, %v5299, %v5300
        %v5302 = vrot.slane %v5177, 1
        %v5303 = vsel %vm1777, %v5300, %v5302
        %v5304 = vrot.slane %v5178, 1
        %v5305 = vrot.slane %v5179, 1
        %v5306 = vsel %vm1777, %v5304, %v5305
        %v5307 = vrot.slane %v5180, 1
        %v5308 = vsel %vm1777, %v5305, %v5307
        %v5341 = vadd.f32 %v5095, %v5231
        %v5342 = vadd.f32 %v5096, %v5233
        %v5343 = vadd.f32 %v5097, %v5236
        %v5344 = vadd.f32 %v5098, %v5238
        %v5345 = vadd.f32 %v5099, %v5241
        %v5346 = vadd.f32 %v5100, %v5243
        %v5347 = vadd.f32 %v5101, %v5246
        %v5348 = vadd.f32 %v5102, %v5248
        %v5349 = vadd.f32 %v5103, %v5251
        %v5350 = vadd.f32 %v5104, %v5253
        %v5351 = vadd.f32 %v5105, %v5256
        %v5352 = vadd.f32 %v5106, %v5258
        %v5353 = vadd.f32 %v5107, %v5261
        %v5354 = vadd.f32 %v5108, %v5263
        %v5355 = vadd.f32 %v5109, %v5266
        %v5356 = vadd.f32 %v5110, %v5268
        %v5357 = vadd.f32 %v5111, %v5271
        %v5358 = vadd.f32 %v5112, %v5273
        %v5359 = vadd.f32 %v5113, %v5276
        %v5360 = vadd.f32 %v5114, %v5278
        %v5361 = vadd.f32 %v5115, %v5281
        %v5362 = vadd.f32 %v5116, %v5283
        %v5363 = vadd.f32 %v5117, %v5286
        %v5364 = vadd.f32 %v5118, %v5288
        %v5365 = vadd.f32 %v5119, %v5291
        %v5366 = vadd.f32 %v5120, %v5293
        %v5367 = vadd.f32 %v5121, %v5296
        %v5368 = vadd.f32 %v5122, %v5298
        %v5369 = vadd.f32 %v5123, %v5301
        %v5370 = vadd.f32 %v5124, %v5303
        %v5371 = vadd.f32 %v5125, %v5306
        %v5372 = vadd.f32 %v5126, %v5308
        %5373 = vset.pattern.permute.xlu0 1
        %5374 = vperm.xlu0 %5373, %v251
        %v5375 = vpop.permute.xlu0 %5374
        %v5377 = vperm.slane %v377, 1
        %v5378 = vmul.f32 %v613, %v5377
        %v5379 = vmul.f32 %v617, %v5377
        %v5380 = vmul.f32 %v1928, %v5377
        %v5381 = vmul.f32 %v621, %v5377
        %v5382 = vmul.f32 %v625, %v5377
        %v5383 = vmul.f32 %v1932, %v5377
        %v5384 = vmul.f32 %v629, %v5377
        %v5385 = vmul.f32 %v633, %v5377
        %v5386 = vmul.f32 %v1936, %v5377
        %v5387 = vmul.f32 %v637, %v5377
        %v5388 = vmul.f32 %v641, %v5377
        %v5389 = vmul.f32 %v1940, %v5377
        %v5390 = vmul.f32 %v645, %v5377
        %v5391 = vmul.f32 %v649, %v5377
        %v5392 = vmul.f32 %v1944, %v5377
        %v5393 = vmul.f32 %v653, %v5377
        %v5394 = vmul.f32 %v657, %v5377
        %v5395 = vmul.f32 %v1948, %v5377
        %v5396 = vmul.f32 %v661, %v5377
        %v5397 = vmul.f32 %v665, %v5377
        %v5398 = vmul.f32 %v1952, %v5377
        %v5399 = vmul.f32 %v669, %v5377
        %v5400 = vmul.f32 %v673, %v5377
        %v5401 = vmul.f32 %v1956, %v5377
        %v5402 = vmul.f32 %v677, %v5377
        %v5403 = vmul.f32 %v681, %v5377
        %v5404 = vmul.f32 %v1960, %v5377
        %v5405 = vmul.f32 %v685, %v5377
        %v5406 = vmul.f32 %v689, %v5377
        %v5407 = vmul.f32 %v1964, %v5377
        %v5408 = vmul.f32 %v693, %v5377
        %v5409 = vmul.f32 %v697, %v5377
        %v5410 = vmul.f32 %v1968, %v5377
        %v5411 = vmul.f32 %v701, %v5377
        %v5412 = vmul.f32 %v705, %v5377
        %v5413 = vmul.f32 %v1972, %v5377
        %v5414 = vmul.f32 %v709, %v5377
        %v5415 = vmul.f32 %v713, %v5377
        %v5416 = vmul.f32 %v1976, %v5377
        %v5417 = vmul.f32 %v717, %v5377
        %v5418 = vmul.f32 %v721, %v5377
        %v5419 = vmul.f32 %v1980, %v5377
        %v5420 = vmul.f32 %v725, %v5377
        %v5421 = vmul.f32 %v729, %v5377
        %v5422 = vmul.f32 %v1984, %v5377
        %v5423 = vmul.f32 %v4762, %v5377
        %v5424 = vmul.f32 %v4766, %v5377
        %v5425 = vmul.f32 %v5375, %v5377
        %v5474 = vrot.slane %v5378, 1
        %v5475 = vrot.slane %v5379, 1
        %v5476 = vsel %vm1777, %v5474, %v5475
        %v5477 = vrot.slane %v5380, 1
        %v5478 = vsel %vm1777, %v5475, %v5477
        %v5479 = vrot.slane %v5381, 1
        %v5480 = vrot.slane %v5382, 1
        %v5481 = vsel %vm1777, %v5479, %v5480
        %v5482 = vrot.slane %v5383, 1
        %v5483 = vsel %vm1777, %v5480, %v5482
        %v5484 = vrot.slane %v5384, 1
        %v5485 = vrot.slane %v5385, 1
        %v5486 = vsel %vm1777, %v5484, %v5485
        %v5487 = vrot.slane %v5386, 1
        %v5488 = vsel %vm1777, %v5485, %v5487
        %v5489 = vrot.slane %v5387, 1
        %v5490 = vrot.slane %v5388, 1
        %v5491 = vsel %vm1777, %v5489, %v5490
        %v5492 = vrot.slane %v5389, 1
        %v5493 = vsel %vm1777, %v5490, %v5492
        %v5494 = vrot.slane %v5390, 1
        %v5495 = vrot.slane %v5391, 1
        %v5496 = vsel %vm1777, %v5494, %v5495
        %v5497 = vrot.slane %v5392, 1
        %v5498 = vsel %vm1777, %v5495, %v5497
        %v5499 = vrot.slane %v5393, 1
        %v5500 = vrot.slane %v5394, 1
        %v5501 = vsel %vm1777, %v5499, %v5500
        %v5502 = vrot.slane %v5395, 1
        %v5503 = vsel %vm1777, %v5500, %v5502
        %v5504 = vrot.slane %v5396, 1
        %v5505 = vrot.slane %v5397, 1
        %v5506 = vsel %vm1777, %v5504, %v5505
        %v5507 = vrot.slane %v5398, 1
        %v5508 = vsel %vm1777, %v5505, %v5507
        %v5509 = vrot.slane %v5399, 1
        %v5510 = vrot.slane %v5400, 1
        %v5511 = vsel %vm1777, %v5509, %v5510
        %v5512 = vrot.slane %v5401, 1
        %v5513 = vsel %vm1777, %v5510, %v5512
        %v5514 = vrot.slane %v5402, 1
        %v5515 = vrot.slane %v5403, 1
        %v5516 = vsel %vm1777, %v5514, %v5515
        %v5517 = vrot.slane %v5404, 1
        %v5518 = vsel %vm1777, %v5515, %v5517
        %v5519 = vrot.slane %v5405, 1
        %v5520 = vrot.slane %v5406, 1
        %v5521 = vsel %vm1777, %v5519, %v5520
        %v5522 = vrot.slane %v5407, 1
        %v5523 = vsel %vm1777, %v5520, %v5522
        %v5524 = vrot.slane %v5408, 1
        %v5525 = vrot.slane %v5409, 1
        %v5526 = vsel %vm1777, %v5524, %v5525
        %v5527 = vrot.slane %v5410, 1
        %v5528 = vsel %vm1777, %v5525, %v5527
        %v5529 = vrot.slane %v5411, 1
        %v5530 = vrot.slane %v5412, 1
        %v5531 = vsel %vm1777, %v5529, %v5530
        %v5532 = vrot.slane %v5413, 1
        %v5533 = vsel %vm1777, %v5530, %v5532
        %v5534 = vrot.slane %v5414, 1
        %v5535 = vrot.slane %v5415, 1
        %v5536 = vsel %vm1777, %v5534, %v5535
        %v5537 = vrot.slane %v5416, 1
        %v5538 = vsel %vm1777, %v5535, %v5537
        %v5539 = vrot.slane %v5417, 1
        %v5540 = vrot.slane %v5418, 1
        %v5541 = vsel %vm1777, %v5539, %v5540
        %v5542 = vrot.slane %v5419, 1
        %v5543 = vsel %vm1777, %v5540, %v5542
        %v5544 = vrot.slane %v5420, 1
        %v5545 = vrot.slane %v5421, 1
        %v5546 = vsel %vm1777, %v5544, %v5545
        %v5547 = vrot.slane %v5422, 1
        %v5548 = vsel %vm1777, %v5545, %v5547
        %v5549 = vrot.slane %v5423, 1
        %v5550 = vrot.slane %v5424, 1
        %v5551 = vsel %vm1777, %v5549, %v5550
        %v5552 = vrot.slane %v5425, 1
        %v5553 = vsel %vm1777, %v5550, %v5552
        %v5586 = vadd.f32 %v5341, %v5476
        %v5587 = vadd.f32 %v5342, %v5478
        %v5588 = vadd.f32 %v5343, %v5481
        %v5589 = vadd.f32 %v5344, %v5483
        %v5590 = vadd.f32 %v5345, %v5486
        %v5591 = vadd.f32 %v5346, %v5488
        %v5592 = vadd.f32 %v5347, %v5491
        %v5593 = vadd.f32 %v5348, %v5493
        %v5594 = vadd.f32 %v5349, %v5496
        %v5595 = vadd.f32 %v5350, %v5498
        %v5596 = vadd.f32 %v5351, %v5501
        %v5597 = vadd.f32 %v5352, %v5503
        %v5598 = vadd.f32 %v5353, %v5506
        %v5599 = vadd.f32 %v5354, %v5508
        %v5600 = vadd.f32 %v5355, %v5511
        %v5601 = vadd.f32 %v5356, %v5513
        %v5602 = vadd.f32 %v5357, %v5516
        %v5603 = vadd.f32 %v5358, %v5518
        %v5604 = vadd.f32 %v5359, %v5521
        %v5605 = vadd.f32 %v5360, %v5523
        %v5606 = vadd.f32 %v5361, %v5526
        %v5607 = vadd.f32 %v5362, %v5528
        %v5608 = vadd.f32 %v5363, %v5531
        %v5609 = vadd.f32 %v5364, %v5533
        %v5610 = vadd.f32 %v5365, %v5536
        %v5611 = vadd.f32 %v5366, %v5538
        %v5612 = vadd.f32 %v5367, %v5541
        %v5613 = vadd.f32 %v5368, %v5543
        %v5614 = vadd.f32 %v5369, %v5546
        %v5615 = vadd.f32 %v5370, %v5548
        %v5616 = vadd.f32 %v5371, %v5551
        %v5617 = vadd.f32 %v5372, %v5553
        %5618 = vset.pattern.permute.xlu0 2
        %5619 = vperm.xlu0 %5618, %v251
        %v5620 = vpop.permute.xlu0 %5619
        %v5622 = vperm.slane %v377, 2
        %v5623 = vmul.f32 %v806, %v5622
        %v5624 = vmul.f32 %v810, %v5622
        %v5625 = vmul.f32 %v2233, %v5622
        %v5626 = vmul.f32 %v814, %v5622
        %v5627 = vmul.f32 %v818, %v5622
        %v5628 = vmul.f32 %v2237, %v5622
        %v5629 = vmul.f32 %v822, %v5622
        %v5630 = vmul.f32 %v826, %v5622
        %v5631 = vmul.f32 %v2241, %v5622
        %v5632 = vmul.f32 %v830, %v5622
        %v5633 = vmul.f32 %v834, %v5622
        %v5634 = vmul.f32 %v2245, %v5622
        %v5635 = vmul.f32 %v838, %v5622
        %v5636 = vmul.f32 %v842, %v5622
        %v5637 = vmul.f32 %v2249, %v5622
        %v5638 = vmul.f32 %v846, %v5622
        %v5639 = vmul.f32 %v850, %v5622
        %v5640 = vmul.f32 %v2253, %v5622
        %v5641 = vmul.f32 %v854, %v5622
        %v5642 = vmul.f32 %v858, %v5622
        %v5643 = vmul.f32 %v2257, %v5622
        %v5644 = vmul.f32 %v862, %v5622
        %v5645 = vmul.f32 %v866, %v5622
        %v5646 = vmul.f32 %v2261, %v5622
        %v5647 = vmul.f32 %v870, %v5622
        %v5648 = vmul.f32 %v874, %v5622
        %v5649 = vmul.f32 %v2265, %v5622
        %v5650 = vmul.f32 %v878, %v5622
        %v5651 = vmul.f32 %v882, %v5622
        %v5652 = vmul.f32 %v2269, %v5622
        %v5653 = vmul.f32 %v886, %v5622
        %v5654 = vmul.f32 %v890, %v5622
        %v5655 = vmul.f32 %v2273, %v5622
        %v5656 = vmul.f32 %v894, %v5622
        %v5657 = vmul.f32 %v898, %v5622
        %v5658 = vmul.f32 %v2277, %v5622
        %v5659 = vmul.f32 %v902, %v5622
        %v5660 = vmul.f32 %v906, %v5622
        %v5661 = vmul.f32 %v2281, %v5622
        %v5662 = vmul.f32 %v910, %v5622
        %v5663 = vmul.f32 %v914, %v5622
        %v5664 = vmul.f32 %v2285, %v5622
        %v5665 = vmul.f32 %v918, %v5622
        %v5666 = vmul.f32 %v922, %v5622
        %v5667 = vmul.f32 %v2289, %v5622
        %v5668 = vmul.f32 %v4835, %v5622
        %v5669 = vmul.f32 %v4839, %v5622
        %v5670 = vmul.f32 %v5620, %v5622
        %v5719 = vrot.slane %v5623, 1
        %v5720 = vrot.slane %v5624, 1
        %v5721 = vsel %vm1777, %v5719, %v5720
        %v5722 = vrot.slane %v5625, 1
        %v5723 = vsel %vm1777, %v5720, %v5722
        %v5724 = vrot.slane %v5626, 1
        %v5725 = vrot.slane %v5627, 1
        %v5726 = vsel %vm1777, %v5724, %v5725
        %v5727 = vrot.slane %v5628, 1
        %v5728 = vsel %vm1777, %v5725, %v5727
        %v5729 = vrot.slane %v5629, 1
        %v5730 = vrot.slane %v5630, 1
        %v5731 = vsel %vm1777, %v5729, %v5730
        %v5732 = vrot.slane %v5631, 1
        %v5733 = vsel %vm1777, %v5730, %v5732
        %v5734 = vrot.slane %v5632, 1
        %v5735 = vrot.slane %v5633, 1
        %v5736 = vsel %vm1777, %v5734, %v5735
        %v5737 = vrot.slane %v5634, 1
        %v5738 = vsel %vm1777, %v5735, %v5737
        %v5739 = vrot.slane %v5635, 1
        %v5740 = vrot.slane %v5636, 1
        %v5741 = vsel %vm1777, %v5739, %v5740
        %v5742 = vrot.slane %v5637, 1
        %v5743 = vsel %vm1777, %v5740, %v5742
        %v5744 = vrot.slane %v5638, 1
        %v5745 = vrot.slane %v5639, 1
        %v5746 = vsel %vm1777, %v5744, %v5745
        %v5747 = vrot.slane %v5640, 1
        %v5748 = vsel %vm1777, %v5745, %v5747
        %v5749 = vrot.slane %v5641, 1
        %v5750 = vrot.slane %v5642, 1
        %v5751 = vsel %vm1777, %v5749, %v5750
        %v5752 = vrot.slane %v5643, 1
        %v5753 = vsel %vm1777, %v5750, %v5752
        %v5754 = vrot.slane %v5644, 1
        %v5755 = vrot.slane %v5645, 1
        %v5756 = vsel %vm1777, %v5754, %v5755
        %v5757 = vrot.slane %v5646, 1
        %v5758 = vsel %vm1777, %v5755, %v5757
        %v5759 = vrot.slane %v5647, 1
        %v5760 = vrot.slane %v5648, 1
        %v5761 = vsel %vm1777, %v5759, %v5760
        %v5762 = vrot.slane %v5649, 1
        %v5763 = vsel %vm1777, %v5760, %v5762
        %v5764 = vrot.slane %v5650, 1
        %v5765 = vrot.slane %v5651, 1
        %v5766 = vsel %vm1777, %v5764, %v5765
        %v5767 = vrot.slane %v5652, 1
        %v5768 = vsel %vm1777, %v5765, %v5767
        %v5769 = vrot.slane %v5653, 1
        %v5770 = vrot.slane %v5654, 1
        %v5771 = vsel %vm1777, %v5769, %v5770
        %v5772 = vrot.slane %v5655, 1
        %v5773 = vsel %vm1777, %v5770, %v5772
        %v5774 = vrot.slane %v5656, 1
        %v5775 = vrot.slane %v5657, 1
        %v5776 = vsel %vm1777, %v5774, %v5775
        %v5777 = vrot.slane %v5658, 1
        %v5778 = vsel %vm1777, %v5775, %v5777
        %v5779 = vrot.slane %v5659, 1
        %v5780 = vrot.slane %v5660, 1
        %v5781 = vsel %vm1777, %v5779, %v5780
        %v5782 = vrot.slane %v5661, 1
        %v5783 = vsel %vm1777, %v5780, %v5782
        %v5784 = vrot.slane %v5662, 1
        %v5785 = vrot.slane %v5663, 1
        %v5786 = vsel %vm1777, %v5784, %v5785
        %v5787 = vrot.slane %v5664, 1
        %v5788 = vsel %vm1777, %v5785, %v5787
        %v5789 = vrot.slane %v5665, 1
        %v5790 = vrot.slane %v5666, 1
        %v5791 = vsel %vm1777, %v5789, %v5790
        %v5792 = vrot.slane %v5667, 1
        %v5793 = vsel %vm1777, %v5790, %v5792
        %v5794 = vrot.slane %v5668, 1
        %v5795 = vrot.slane %v5669, 1
        %v5796 = vsel %vm1777, %v5794, %v5795
        %v5797 = vrot.slane %v5670, 1
        %v5798 = vsel %vm1777, %v5795, %v5797
        %v5831 = vadd.f32 %v5586, %v5721
        %v5832 = vadd.f32 %v5587, %v5723
        %v5833 = vadd.f32 %v5588, %v5726
        %v5834 = vadd.f32 %v5589, %v5728
        %v5835 = vadd.f32 %v5590, %v5731
        %v5836 = vadd.f32 %v5591, %v5733
        %v5837 = vadd.f32 %v5592, %v5736
        %v5838 = vadd.f32 %v5593, %v5738
        %v5839 = vadd.f32 %v5594, %v5741
        %v5840 = vadd.f32 %v5595, %v5743
        %v5841 = vadd.f32 %v5596, %v5746
        %v5842 = vadd.f32 %v5597, %v5748
        %v5843 = vadd.f32 %v5598, %v5751
        %v5844 = vadd.f32 %v5599, %v5753
        %v5845 = vadd.f32 %v5600, %v5756
        %v5846 = vadd.f32 %v5601, %v5758
        %v5847 = vadd.f32 %v5602, %v5761
        %v5848 = vadd.f32 %v5603, %v5763
        %v5849 = vadd.f32 %v5604, %v5766
        %v5850 = vadd.f32 %v5605, %v5768
        %v5851 = vadd.f32 %v5606, %v5771
        %v5852 = vadd.f32 %v5607, %v5773
        %v5853 = vadd.f32 %v5608, %v5776
        %v5854 = vadd.f32 %v5609, %v5778
        %v5855 = vadd.f32 %v5610, %v5781
        %v5856 = vadd.f32 %v5611, %v5783
        %v5857 = vadd.f32 %v5612, %v5786
        %v5858 = vadd.f32 %v5613, %v5788
        %v5859 = vadd.f32 %v5614, %v5791
        %v5860 = vadd.f32 %v5615, %v5793
        %v5861 = vadd.f32 %v5616, %v5796
        %v5862 = vadd.f32 %v5617, %v5798
        %v5863 = vld [vmem:[%s2] sm:$0x1]
        %v5865 = vperm.slane %v5863, 0
        %v5867 = vmul.f32 %v5831, %v5865
        %v5868 = vmul.f32 %v5832, %v5865
        %v5869 = vmul.f32 %v5833, %v5865
        %v5870 = vmul.f32 %v5834, %v5865
        %v5871 = vmul.f32 %v5835, %v5865
        %v5872 = vmul.f32 %v5836, %v5865
        %v5873 = vmul.f32 %v5837, %v5865
        %v5874 = vmul.f32 %v5838, %v5865
        %v5875 = vmul.f32 %v5839, %v5865
        %v5876 = vmul.f32 %v5840, %v5865
        %v5877 = vmul.f32 %v5841, %v5865
        %v5878 = vmul.f32 %v5842, %v5865
        %v5879 = vmul.f32 %v5843, %v5865
        %v5880 = vmul.f32 %v5844, %v5865
        %v5881 = vmul.f32 %v5845, %v5865
        %v5882 = vmul.f32 %v5846, %v5865
        %v5883 = vmul.f32 %v5847, %v5865
        %v5884 = vmul.f32 %v5848, %v5865
        %v5885 = vmul.f32 %v5849, %v5865
        %v5886 = vmul.f32 %v5850, %v5865
        %v5887 = vmul.f32 %v5851, %v5865
        %v5888 = vmul.f32 %v5852, %v5865
        %v5889 = vmul.f32 %v5853, %v5865
        %v5890 = vmul.f32 %v5854, %v5865
        %v5891 = vmul.f32 %v5855, %v5865
        %v5892 = vmul.f32 %v5856, %v5865
        %v5893 = vmul.f32 %v5857, %v5865
        %v5894 = vmul.f32 %v5858, %v5865
        %v5895 = vmul.f32 %v5859, %v5865
        %v5896 = vmul.f32 %v5860, %v5865
        %v5897 = vmul.f32 %v5861, %v5865
        %v5898 = vmul.f32 %v5862, %v5865
        %v5899 = vld [vmem:[%s3] sm:$0x1]
        %v5901 = vperm.slane %v5899, 0
        %v5903 = vadd.f32 %v5867, %v5901
        %v5904 = vadd.f32 %v5868, %v5901
        %v5905 = vadd.f32 %v5869, %v5901
        %v5906 = vadd.f32 %v5870, %v5901
        %v5907 = vadd.f32 %v5871, %v5901
        %v5908 = vadd.f32 %v5872, %v5901
        %v5909 = vadd.f32 %v5873, %v5901
        %v5910 = vadd.f32 %v5874, %v5901
        %v5911 = vadd.f32 %v5875, %v5901
        %v5912 = vadd.f32 %v5876, %v5901
        %v5913 = vadd.f32 %v5877, %v5901
        %v5914 = vadd.f32 %v5878, %v5901
        %v5915 = vadd.f32 %v5879, %v5901
        %v5916 = vadd.f32 %v5880, %v5901
        %v5917 = vadd.f32 %v5881, %v5901
        %v5918 = vadd.f32 %v5882, %v5901
        %v5919 = vadd.f32 %v5883, %v5901
        %v5920 = vadd.f32 %v5884, %v5901
        %v5921 = vadd.f32 %v5885, %v5901
        %v5922 = vadd.f32 %v5886, %v5901
        %v5923 = vadd.f32 %v5887, %v5901
        %v5924 = vadd.f32 %v5888, %v5901
        %v5925 = vadd.f32 %v5889, %v5901
        %v5926 = vadd.f32 %v5890, %v5901
        %v5927 = vadd.f32 %v5891, %v5901
        %v5928 = vadd.f32 %v5892, %v5901
        %v5929 = vadd.f32 %v5893, %v5901
        %v5930 = vadd.f32 %v5894, %v5901
        %v5931 = vadd.f32 %v5895, %v5901
        %v5932 = vadd.f32 %v5896, %v5901
        %v5933 = vadd.f32 %v5897, %v5901
        %v5934 = vadd.f32 %v5898, %v5901
        %v5935 = vxor.u32 %v5903, 2147483648
        %v5936 = vxor.u32 %v5904, 2147483648
        %v5937 = vxor.u32 %v5905, 2147483648
        %v5938 = vxor.u32 %v5906, 2147483648
        %v5939 = vxor.u32 %v5907, 2147483648
        %v5940 = vxor.u32 %v5908, 2147483648
        %v5941 = vxor.u32 %v5909, 2147483648
        %v5942 = vxor.u32 %v5910, 2147483648
        %v5943 = vxor.u32 %v5911, 2147483648
        %v5944 = vxor.u32 %v5912, 2147483648
        %v5945 = vxor.u32 %v5913, 2147483648
        %v5946 = vxor.u32 %v5914, 2147483648
        %v5947 = vxor.u32 %v5915, 2147483648
        %v5948 = vxor.u32 %v5916, 2147483648
        %v5949 = vxor.u32 %v5917, 2147483648
        %v5950 = vxor.u32 %v5918, 2147483648
        %v5951 = vxor.u32 %v5919, 2147483648
        %v5952 = vxor.u32 %v5920, 2147483648
        %v5953 = vxor.u32 %v5921, 2147483648
        %v5954 = vxor.u32 %v5922, 2147483648
        %v5955 = vxor.u32 %v5923, 2147483648
        %v5956 = vxor.u32 %v5924, 2147483648
        %v5957 = vxor.u32 %v5925, 2147483648
        %v5958 = vxor.u32 %v5926, 2147483648
        %v5959 = vxor.u32 %v5927, 2147483648
        %v5960 = vxor.u32 %v5928, 2147483648
        %v5961 = vxor.u32 %v5929, 2147483648
        %v5962 = vxor.u32 %v5930, 2147483648
        %v5963 = vxor.u32 %v5931, 2147483648
        %v5964 = vxor.u32 %v5932, 2147483648
        %v5965 = vxor.u32 %v5933, 2147483648
        %v5966 = vxor.u32 %v5934, 2147483648
        %v5967 = vmul.f32 %v5935, 1.442695
        %v5968 = vpow.pop %v5967
        %v5969 = vmul.f32 %v5936, 1.442695
        %v5970 = vpow.pop %v5969
        %v5971 = vmul.f32 %v5937, 1.442695
        %v5972 = vpow.pop %v5971
        %v5973 = vmul.f32 %v5938, 1.442695
        %v5974 = vpow.pop %v5973
        %v5975 = vmul.f32 %v5939, 1.442695
        %v5976 = vpow.pop %v5975
        %v5977 = vmul.f32 %v5940, 1.442695
        %v5978 = vpow.pop %v5977
        %v5979 = vmul.f32 %v5941, 1.442695
        %v5980 = vpow.pop %v5979
        %v5981 = vmul.f32 %v5942, 1.442695
        %v5982 = vpow.pop %v5981
        %v5983 = vmul.f32 %v5943, 1.442695
        %v5984 = vpow.pop %v5983
        %v5985 = vmul.f32 %v5944, 1.442695
        %v5986 = vpow.pop %v5985
        %v5987 = vmul.f32 %v5945, 1.442695
        %v5988 = vpow.pop %v5987
        %v5989 = vmul.f32 %v5946, 1.442695
        %v5990 = vpow.pop %v5989
        %v5991 = vmul.f32 %v5947, 1.442695
        %v5992 = vpow.pop %v5991
        %v5993 = vmul.f32 %v5948, 1.442695
        %v5994 = vpow.pop %v5993
        %v5995 = vmul.f32 %v5949, 1.442695
        %v5996 = vpow.pop %v5995
        %v5997 = vmul.f32 %v5950, 1.442695
        %v5998 = vpow.pop %v5997
        %v5999 = vmul.f32 %v5951, 1.442695
        %v6000 = vpow.pop %v5999
        %v6001 = vmul.f32 %v5952, 1.442695
        %v6002 = vpow.pop %v6001
        %v6003 = vmul.f32 %v5953, 1.442695
        %v6004 = vpow.pop %v6003
        %v6005 = vmul.f32 %v5954, 1.442695
        %v6006 = vpow.pop %v6005
        %v6007 = vmul.f32 %v5955, 1.442695
        %v6008 = vpow.pop %v6007
        %v6009 = vmul.f32 %v5956, 1.442695
        %v6010 = vpow.pop %v6009
        %v6011 = vmul.f32 %v5957, 1.442695
        %v6012 = vpow.pop %v6011
        %v6013 = vmul.f32 %v5958, 1.442695
        %v6014 = vpow.pop %v6013
        %v6015 = vmul.f32 %v5959, 1.442695
        %v6016 = vpow.pop %v6015
        %v6017 = vmul.f32 %v5960, 1.442695
        %v6018 = vpow.pop %v6017
        %v6019 = vmul.f32 %v5961, 1.442695
        %v6020 = vpow.pop %v6019
        %v6021 = vmul.f32 %v5962, 1.442695
        %v6022 = vpow.pop %v6021
        %v6023 = vmul.f32 %v5963, 1.442695
        %v6024 = vpow.pop %v6023
        %v6025 = vmul.f32 %v5964, 1.442695
        %v6026 = vpow.pop %v6025
        %v6027 = vmul.f32 %v5965, 1.442695
        %v6028 = vpow.pop %v6027
        %v6029 = vmul.f32 %v5966, 1.442695
        %v6030 = vpow.pop %v6029
        %v6031 = vadd.f32 %v5968, 1.0
        %v6032 = vadd.f32 %v5970, 1.0
        %v6033 = vadd.f32 %v5972, 1.0
        %v6034 = vadd.f32 %v5974, 1.0
        %v6035 = vadd.f32 %v5976, 1.0
        %v6036 = vadd.f32 %v5978, 1.0
        %v6037 = vadd.f32 %v5980, 1.0
        %v6038 = vadd.f32 %v5982, 1.0
        %v6039 = vadd.f32 %v5984, 1.0
        %v6040 = vadd.f32 %v5986, 1.0
        %v6041 = vadd.f32 %v5988, 1.0
        %v6042 = vadd.f32 %v5990, 1.0
        %v6043 = vadd.f32 %v5992, 1.0
        %v6044 = vadd.f32 %v5994, 1.0
        %v6045 = vadd.f32 %v5996, 1.0
        %v6046 = vadd.f32 %v5998, 1.0
        %v6047 = vadd.f32 %v6000, 1.0
        %v6048 = vadd.f32 %v6002, 1.0
        %v6049 = vadd.f32 %v6004, 1.0
        %v6050 = vadd.f32 %v6006, 1.0
        %v6051 = vadd.f32 %v6008, 1.0
        %v6052 = vadd.f32 %v6010, 1.0
        %v6053 = vadd.f32 %v6012, 1.0
        %v6054 = vadd.f32 %v6014, 1.0
        %v6055 = vadd.f32 %v6016, 1.0
        %v6056 = vadd.f32 %v6018, 1.0
        %v6057 = vadd.f32 %v6020, 1.0
        %v6058 = vadd.f32 %v6022, 1.0
        %v6059 = vadd.f32 %v6024, 1.0
        %v6060 = vadd.f32 %v6026, 1.0
        %v6061 = vadd.f32 %v6028, 1.0
        %v6062 = vadd.f32 %v6030, 1.0
        %v6063 = vrcp.pop %v6031
        %v6064 = vmul.f32 %v6031, %v6063
        %v6065 = vsub.f32 1.0, %v6064
        %v6066 = vmul.f32 %v6063, %v6065
        %v6067 = vadd.f32 %v6063, %v6066
        %vm6068 = vweird.f32 %v6031
        %vm6069 = vweird.f32 %v6063
        %vm6070 = vmor %vm6068, %vm6069
        %v6071 = vsel %vm6070, %v6063, %v6067
        %v6072 = vand.u32 2147483647, %v6031
        %vm6073 = vcmp.eq.f32.partialorder %v6072, 8.507059e+37
        %v6074 = vand.u32 %v6031, 2147483648
        %v6075 = vor.u32 1.1754944e-38, %v6074
        %v6076 = vsel %vm6073, %v6075, %v6071
        %v6077 = vmul.f32 1.0, %v6076
        %v6078 = vrcp.pop %v6032
        %v6079 = vmul.f32 %v6032, %v6078
        %v6080 = vsub.f32 1.0, %v6079
        %v6081 = vmul.f32 %v6078, %v6080
        %v6082 = vadd.f32 %v6078, %v6081
        %vm6083 = vweird.f32 %v6032
        %vm6084 = vweird.f32 %v6078
        %vm6085 = vmor %vm6083, %vm6084
        %v6086 = vsel %vm6085, %v6078, %v6082
        %v6087 = vand.u32 2147483647, %v6032
        %vm6088 = vcmp.eq.f32.partialorder %v6087, 8.507059e+37
        %v6089 = vand.u32 %v6032, 2147483648
        %v6090 = vor.u32 1.1754944e-38, %v6089
        %v6091 = vsel %vm6088, %v6090, %v6086
        %v6092 = vmul.f32 1.0, %v6091
        %v6093 = vrcp.pop %v6033
        %v6094 = vmul.f32 %v6033, %v6093
        %v6095 = vsub.f32 1.0, %v6094
        %v6096 = vmul.f32 %v6093, %v6095
        %v6097 = vadd.f32 %v6093, %v6096
        %vm6098 = vweird.f32 %v6033
        %vm6099 = vweird.f32 %v6093
        %vm6100 = vmor %vm6098, %vm6099
        %v6101 = vsel %vm6100, %v6093, %v6097
        %v6102 = vand.u32 2147483647, %v6033
        %vm6103 = vcmp.eq.f32.partialorder %v6102, 8.507059e+37
        %v6104 = vand.u32 %v6033, 2147483648
        %v6105 = vor.u32 1.1754944e-38, %v6104
        %v6106 = vsel %vm6103, %v6105, %v6101
        %v6107 = vmul.f32 1.0, %v6106
        %v6108 = vrcp.pop %v6034
        %v6109 = vmul.f32 %v6034, %v6108
        %v6110 = vsub.f32 1.0, %v6109
        %v6111 = vmul.f32 %v6108, %v6110
        %v6112 = vadd.f32 %v6108, %v6111
        %vm6113 = vweird.f32 %v6034
        %vm6114 = vweird.f32 %v6108
        %vm6115 = vmor %vm6113, %vm6114
        %v6116 = vsel %vm6115, %v6108, %v6112
        %v6117 = vand.u32 2147483647, %v6034
        %vm6118 = vcmp.eq.f32.partialorder %v6117, 8.507059e+37
        %v6119 = vand.u32 %v6034, 2147483648
        %v6120 = vor.u32 1.1754944e-38, %v6119
        %v6121 = vsel %vm6118, %v6120, %v6116
        %v6122 = vmul.f32 1.0, %v6121
        %v6123 = vrcp.pop %v6035
        %v6124 = vmul.f32 %v6035, %v6123
        %v6125 = vsub.f32 1.0, %v6124
        %v6126 = vmul.f32 %v6123, %v6125
        %v6127 = vadd.f32 %v6123, %v6126
        %vm6128 = vweird.f32 %v6035
        %vm6129 = vweird.f32 %v6123
        %vm6130 = vmor %vm6128, %vm6129
        %v6131 = vsel %vm6130, %v6123, %v6127
        %v6132 = vand.u32 2147483647, %v6035
        %vm6133 = vcmp.eq.f32.partialorder %v6132, 8.507059e+37
        %v6134 = vand.u32 %v6035, 2147483648
        %v6135 = vor.u32 1.1754944e-38, %v6134
        %v6136 = vsel %vm6133, %v6135, %v6131
        %v6137 = vmul.f32 1.0, %v6136
        %v6138 = vrcp.pop %v6036
        %v6139 = vmul.f32 %v6036, %v6138
        %v6140 = vsub.f32 1.0, %v6139
        %v6141 = vmul.f32 %v6138, %v6140
        %v6142 = vadd.f32 %v6138, %v6141
        %vm6143 = vweird.f32 %v6036
        %vm6144 = vweird.f32 %v6138
        %vm6145 = vmor %vm6143, %vm6144
        %v6146 = vsel %vm6145, %v6138, %v6142
        %v6147 = vand.u32 2147483647, %v6036
        %vm6148 = vcmp.eq.f32.partialorder %v6147, 8.507059e+37
        %v6149 = vand.u32 %v6036, 2147483648
        %v6150 = vor.u32 1.1754944e-38, %v6149
        %v6151 = vsel %vm6148, %v6150, %v6146
        %v6152 = vmul.f32 1.0, %v6151
        %v6153 = vrcp.pop %v6037
        %v6154 = vmul.f32 %v6037, %v6153
        %v6155 = vsub.f32 1.0, %v6154
        %v6156 = vmul.f32 %v6153, %v6155
        %v6157 = vadd.f32 %v6153, %v6156
        %vm6158 = vweird.f32 %v6037
        %vm6159 = vweird.f32 %v6153
        %vm6160 = vmor %vm6158, %vm6159
        %v6161 = vsel %vm6160, %v6153, %v6157
        %v6162 = vand.u32 2147483647, %v6037
        %vm6163 = vcmp.eq.f32.partialorder %v6162, 8.507059e+37
        %v6164 = vand.u32 %v6037, 2147483648
        %v6165 = vor.u32 1.1754944e-38, %v6164
        %v6166 = vsel %vm6163, %v6165, %v6161
        %v6167 = vmul.f32 1.0, %v6166
        %v6168 = vrcp.pop %v6038
        %v6169 = vmul.f32 %v6038, %v6168
        %v6170 = vsub.f32 1.0, %v6169
        %v6171 = vmul.f32 %v6168, %v6170
        %v6172 = vadd.f32 %v6168, %v6171
        %vm6173 = vweird.f32 %v6038
        %vm6174 = vweird.f32 %v6168
        %vm6175 = vmor %vm6173, %vm6174
        %v6176 = vsel %vm6175, %v6168, %v6172
        %v6177 = vand.u32 2147483647, %v6038
        %vm6178 = vcmp.eq.f32.partialorder %v6177, 8.507059e+37
        %v6179 = vand.u32 %v6038, 2147483648
        %v6180 = vor.u32 1.1754944e-38, %v6179
        %v6181 = vsel %vm6178, %v6180, %v6176
        %v6182 = vmul.f32 1.0, %v6181
        %v6183 = vrcp.pop %v6039
        %v6184 = vmul.f32 %v6039, %v6183
        %v6185 = vsub.f32 1.0, %v6184
        %v6186 = vmul.f32 %v6183, %v6185
        %v6187 = vadd.f32 %v6183, %v6186
        %vm6188 = vweird.f32 %v6039
        %vm6189 = vweird.f32 %v6183
        %vm6190 = vmor %vm6188, %vm6189
        %v6191 = vsel %vm6190, %v6183, %v6187
        %v6192 = vand.u32 2147483647, %v6039
        %vm6193 = vcmp.eq.f32.partialorder %v6192, 8.507059e+37
        %v6194 = vand.u32 %v6039, 2147483648
        %v6195 = vor.u32 1.1754944e-38, %v6194
        %v6196 = vsel %vm6193, %v6195, %v6191
        %v6197 = vmul.f32 1.0, %v6196
        %v6198 = vrcp.pop %v6040
        %v6199 = vmul.f32 %v6040, %v6198
        %v6200 = vsub.f32 1.0, %v6199
        %v6201 = vmul.f32 %v6198, %v6200
        %v6202 = vadd.f32 %v6198, %v6201
        %vm6203 = vweird.f32 %v6040
        %vm6204 = vweird.f32 %v6198
        %vm6205 = vmor %vm6203, %vm6204
        %v6206 = vsel %vm6205, %v6198, %v6202
        %v6207 = vand.u32 2147483647, %v6040
        %vm6208 = vcmp.eq.f32.partialorder %v6207, 8.507059e+37
        %v6209 = vand.u32 %v6040, 2147483648
        %v6210 = vor.u32 1.1754944e-38, %v6209
        %v6211 = vsel %vm6208, %v6210, %v6206
        %v6212 = vmul.f32 1.0, %v6211
        %v6213 = vrcp.pop %v6041
        %v6214 = vmul.f32 %v6041, %v6213
        %v6215 = vsub.f32 1.0, %v6214
        %v6216 = vmul.f32 %v6213, %v6215
        %v6217 = vadd.f32 %v6213, %v6216
        %vm6218 = vweird.f32 %v6041
        %vm6219 = vweird.f32 %v6213
        %vm6220 = vmor %vm6218, %vm6219
        %v6221 = vsel %vm6220, %v6213, %v6217
        %v6222 = vand.u32 2147483647, %v6041
        %vm6223 = vcmp.eq.f32.partialorder %v6222, 8.507059e+37
        %v6224 = vand.u32 %v6041, 2147483648
        %v6225 = vor.u32 1.1754944e-38, %v6224
        %v6226 = vsel %vm6223, %v6225, %v6221
        %v6227 = vmul.f32 1.0, %v6226
        %v6228 = vrcp.pop %v6042
        %v6229 = vmul.f32 %v6042, %v6228
        %v6230 = vsub.f32 1.0, %v6229
        %v6231 = vmul.f32 %v6228, %v6230
        %v6232 = vadd.f32 %v6228, %v6231
        %vm6233 = vweird.f32 %v6042
        %vm6234 = vweird.f32 %v6228
        %vm6235 = vmor %vm6233, %vm6234
        %v6236 = vsel %vm6235, %v6228, %v6232
        %v6237 = vand.u32 2147483647, %v6042
        %vm6238 = vcmp.eq.f32.partialorder %v6237, 8.507059e+37
        %v6239 = vand.u32 %v6042, 2147483648
        %v6240 = vor.u32 1.1754944e-38, %v6239
        %v6241 = vsel %vm6238, %v6240, %v6236
        %v6242 = vmul.f32 1.0, %v6241
        %v6243 = vrcp.pop %v6043
        %v6244 = vmul.f32 %v6043, %v6243
        %v6245 = vsub.f32 1.0, %v6244
        %v6246 = vmul.f32 %v6243, %v6245
        %v6247 = vadd.f32 %v6243, %v6246
        %vm6248 = vweird.f32 %v6043
        %vm6249 = vweird.f32 %v6243
        %vm6250 = vmor %vm6248, %vm6249
        %v6251 = vsel %vm6250, %v6243, %v6247
        %v6252 = vand.u32 2147483647, %v6043
        %vm6253 = vcmp.eq.f32.partialorder %v6252, 8.507059e+37
        %v6254 = vand.u32 %v6043, 2147483648
        %v6255 = vor.u32 1.1754944e-38, %v6254
        %v6256 = vsel %vm6253, %v6255, %v6251
        %v6257 = vmul.f32 1.0, %v6256
        %v6258 = vrcp.pop %v6044
        %v6259 = vmul.f32 %v6044, %v6258
        %v6260 = vsub.f32 1.0, %v6259
        %v6261 = vmul.f32 %v6258, %v6260
        %v6262 = vadd.f32 %v6258, %v6261
        %vm6263 = vweird.f32 %v6044
        %vm6264 = vweird.f32 %v6258
        %vm6265 = vmor %vm6263, %vm6264
        %v6266 = vsel %vm6265, %v6258, %v6262
        %v6267 = vand.u32 2147483647, %v6044
        %vm6268 = vcmp.eq.f32.partialorder %v6267, 8.507059e+37
        %v6269 = vand.u32 %v6044, 2147483648
        %v6270 = vor.u32 1.1754944e-38, %v6269
        %v6271 = vsel %vm6268, %v6270, %v6266
        %v6272 = vmul.f32 1.0, %v6271
        %v6273 = vrcp.pop %v6045
        %v6274 = vmul.f32 %v6045, %v6273
        %v6275 = vsub.f32 1.0, %v6274
        %v6276 = vmul.f32 %v6273, %v6275
        %v6277 = vadd.f32 %v6273, %v6276
        %vm6278 = vweird.f32 %v6045
        %vm6279 = vweird.f32 %v6273
        %vm6280 = vmor %vm6278, %vm6279
        %v6281 = vsel %vm6280, %v6273, %v6277
        %v6282 = vand.u32 2147483647, %v6045
        %vm6283 = vcmp.eq.f32.partialorder %v6282, 8.507059e+37
        %v6284 = vand.u32 %v6045, 2147483648
        %v6285 = vor.u32 1.1754944e-38, %v6284
        %v6286 = vsel %vm6283, %v6285, %v6281
        %v6287 = vmul.f32 1.0, %v6286
        %v6288 = vrcp.pop %v6046
        %v6289 = vmul.f32 %v6046, %v6288
        %v6290 = vsub.f32 1.0, %v6289
        %v6291 = vmul.f32 %v6288, %v6290
        %v6292 = vadd.f32 %v6288, %v6291
        %vm6293 = vweird.f32 %v6046
        %vm6294 = vweird.f32 %v6288
        %vm6295 = vmor %vm6293, %vm6294
        %v6296 = vsel %vm6295, %v6288, %v6292
        %v6297 = vand.u32 2147483647, %v6046
        %vm6298 = vcmp.eq.f32.partialorder %v6297, 8.507059e+37
        %v6299 = vand.u32 %v6046, 2147483648
        %v6300 = vor.u32 1.1754944e-38, %v6299
        %v6301 = vsel %vm6298, %v6300, %v6296
        %v6302 = vmul.f32 1.0, %v6301
        %v6303 = vrcp.pop %v6047
        %v6304 = vmul.f32 %v6047, %v6303
        %v6305 = vsub.f32 1.0, %v6304
        %v6306 = vmul.f32 %v6303, %v6305
        %v6307 = vadd.f32 %v6303, %v6306
        %vm6308 = vweird.f32 %v6047
        %vm6309 = vweird.f32 %v6303
        %vm6310 = vmor %vm6308, %vm6309
        %v6311 = vsel %vm6310, %v6303, %v6307
        %v6312 = vand.u32 2147483647, %v6047
        %vm6313 = vcmp.eq.f32.partialorder %v6312, 8.507059e+37
        %v6314 = vand.u32 %v6047, 2147483648
        %v6315 = vor.u32 1.1754944e-38, %v6314
        %v6316 = vsel %vm6313, %v6315, %v6311
        %v6317 = vmul.f32 1.0, %v6316
        %v6318 = vrcp.pop %v6048
        %v6319 = vmul.f32 %v6048, %v6318
        %v6320 = vsub.f32 1.0, %v6319
        %v6321 = vmul.f32 %v6318, %v6320
        %v6322 = vadd.f32 %v6318, %v6321
        %vm6323 = vweird.f32 %v6048
        %vm6324 = vweird.f32 %v6318
        %vm6325 = vmor %vm6323, %vm6324
        %v6326 = vsel %vm6325, %v6318, %v6322
        %v6327 = vand.u32 2147483647, %v6048
        %vm6328 = vcmp.eq.f32.partialorder %v6327, 8.507059e+37
        %v6329 = vand.u32 %v6048, 2147483648
        %v6330 = vor.u32 1.1754944e-38, %v6329
        %v6331 = vsel %vm6328, %v6330, %v6326
        %v6332 = vmul.f32 1.0, %v6331
        %v6333 = vrcp.pop %v6049
        %v6334 = vmul.f32 %v6049, %v6333
        %v6335 = vsub.f32 1.0, %v6334
        %v6336 = vmul.f32 %v6333, %v6335
        %v6337 = vadd.f32 %v6333, %v6336
        %vm6338 = vweird.f32 %v6049
        %vm6339 = vweird.f32 %v6333
        %vm6340 = vmor %vm6338, %vm6339
        %v6341 = vsel %vm6340, %v6333, %v6337
        %v6342 = vand.u32 2147483647, %v6049
        %vm6343 = vcmp.eq.f32.partialorder %v6342, 8.507059e+37
        %v6344 = vand.u32 %v6049, 2147483648
        %v6345 = vor.u32 1.1754944e-38, %v6344
        %v6346 = vsel %vm6343, %v6345, %v6341
        %v6347 = vmul.f32 1.0, %v6346
        %v6348 = vrcp.pop %v6050
        %v6349 = vmul.f32 %v6050, %v6348
        %v6350 = vsub.f32 1.0, %v6349
        %v6351 = vmul.f32 %v6348, %v6350
        %v6352 = vadd.f32 %v6348, %v6351
        %vm6353 = vweird.f32 %v6050
        %vm6354 = vweird.f32 %v6348
        %vm6355 = vmor %vm6353, %vm6354
        %v6356 = vsel %vm6355, %v6348, %v6352
        %v6357 = vand.u32 2147483647, %v6050
        %vm6358 = vcmp.eq.f32.partialorder %v6357, 8.507059e+37
        %v6359 = vand.u32 %v6050, 2147483648
        %v6360 = vor.u32 1.1754944e-38, %v6359
        %v6361 = vsel %vm6358, %v6360, %v6356
        %v6362 = vmul.f32 1.0, %v6361
        %v6363 = vrcp.pop %v6051
        %v6364 = vmul.f32 %v6051, %v6363
        %v6365 = vsub.f32 1.0, %v6364
        %v6366 = vmul.f32 %v6363, %v6365
        %v6367 = vadd.f32 %v6363, %v6366
        %vm6368 = vweird.f32 %v6051
        %vm6369 = vweird.f32 %v6363
        %vm6370 = vmor %vm6368, %vm6369
        %v6371 = vsel %vm6370, %v6363, %v6367
        %v6372 = vand.u32 2147483647, %v6051
        %vm6373 = vcmp.eq.f32.partialorder %v6372, 8.507059e+37
        %v6374 = vand.u32 %v6051, 2147483648
        %v6375 = vor.u32 1.1754944e-38, %v6374
        %v6376 = vsel %vm6373, %v6375, %v6371
        %v6377 = vmul.f32 1.0, %v6376
        %v6378 = vrcp.pop %v6052
        %v6379 = vmul.f32 %v6052, %v6378
        %v6380 = vsub.f32 1.0, %v6379
        %v6381 = vmul.f32 %v6378, %v6380
        %v6382 = vadd.f32 %v6378, %v6381
        %vm6383 = vweird.f32 %v6052
        %vm6384 = vweird.f32 %v6378
        %vm6385 = vmor %vm6383, %vm6384
        %v6386 = vsel %vm6385, %v6378, %v6382
        %v6387 = vand.u32 2147483647, %v6052
        %vm6388 = vcmp.eq.f32.partialorder %v6387, 8.507059e+37
        %v6389 = vand.u32 %v6052, 2147483648
        %v6390 = vor.u32 1.1754944e-38, %v6389
        %v6391 = vsel %vm6388, %v6390, %v6386
        %v6392 = vmul.f32 1.0, %v6391
        %v6393 = vrcp.pop %v6053
        %v6394 = vmul.f32 %v6053, %v6393
        %v6395 = vsub.f32 1.0, %v6394
        %v6396 = vmul.f32 %v6393, %v6395
        %v6397 = vadd.f32 %v6393, %v6396
        %vm6398 = vweird.f32 %v6053
        %vm6399 = vweird.f32 %v6393
        %vm6400 = vmor %vm6398, %vm6399
        %v6401 = vsel %vm6400, %v6393, %v6397
        %v6402 = vand.u32 2147483647, %v6053
        %vm6403 = vcmp.eq.f32.partialorder %v6402, 8.507059e+37
        %v6404 = vand.u32 %v6053, 2147483648
        %v6405 = vor.u32 1.1754944e-38, %v6404
        %v6406 = vsel %vm6403, %v6405, %v6401
        %v6407 = vmul.f32 1.0, %v6406
        %v6408 = vrcp.pop %v6054
        %v6409 = vmul.f32 %v6054, %v6408
        %v6410 = vsub.f32 1.0, %v6409
        %v6411 = vmul.f32 %v6408, %v6410
        %v6412 = vadd.f32 %v6408, %v6411
        %vm6413 = vweird.f32 %v6054
        %vm6414 = vweird.f32 %v6408
        %vm6415 = vmor %vm6413, %vm6414
        %v6416 = vsel %vm6415, %v6408, %v6412
        %v6417 = vand.u32 2147483647, %v6054
        %vm6418 = vcmp.eq.f32.partialorder %v6417, 8.507059e+37
        %v6419 = vand.u32 %v6054, 2147483648
        %v6420 = vor.u32 1.1754944e-38, %v6419
        %v6421 = vsel %vm6418, %v6420, %v6416
        %v6422 = vmul.f32 1.0, %v6421
        %v6423 = vrcp.pop %v6055
        %v6424 = vmul.f32 %v6055, %v6423
        %v6425 = vsub.f32 1.0, %v6424
        %v6426 = vmul.f32 %v6423, %v6425
        %v6427 = vadd.f32 %v6423, %v6426
        %vm6428 = vweird.f32 %v6055
        %vm6429 = vweird.f32 %v6423
        %vm6430 = vmor %vm6428, %vm6429
        %v6431 = vsel %vm6430, %v6423, %v6427
        %v6432 = vand.u32 2147483647, %v6055
        %vm6433 = vcmp.eq.f32.partialorder %v6432, 8.507059e+37
        %v6434 = vand.u32 %v6055, 2147483648
        %v6435 = vor.u32 1.1754944e-38, %v6434
        %v6436 = vsel %vm6433, %v6435, %v6431
        %v6437 = vmul.f32 1.0, %v6436
        %v6438 = vrcp.pop %v6056
        %v6439 = vmul.f32 %v6056, %v6438
        %v6440 = vsub.f32 1.0, %v6439
        %v6441 = vmul.f32 %v6438, %v6440
        %v6442 = vadd.f32 %v6438, %v6441
        %vm6443 = vweird.f32 %v6056
        %vm6444 = vweird.f32 %v6438
        %vm6445 = vmor %vm6443, %vm6444
        %v6446 = vsel %vm6445, %v6438, %v6442
        %v6447 = vand.u32 2147483647, %v6056
        %vm6448 = vcmp.eq.f32.partialorder %v6447, 8.507059e+37
        %v6449 = vand.u32 %v6056, 2147483648
        %v6450 = vor.u32 1.1754944e-38, %v6449
        %v6451 = vsel %vm6448, %v6450, %v6446
        %v6452 = vmul.f32 1.0, %v6451
        %v6453 = vrcp.pop %v6057
        %v6454 = vmul.f32 %v6057, %v6453
        %v6455 = vsub.f32 1.0, %v6454
        %v6456 = vmul.f32 %v6453, %v6455
        %v6457 = vadd.f32 %v6453, %v6456
        %vm6458 = vweird.f32 %v6057
        %vm6459 = vweird.f32 %v6453
        %vm6460 = vmor %vm6458, %vm6459
        %v6461 = vsel %vm6460, %v6453, %v6457
        %v6462 = vand.u32 2147483647, %v6057
        %vm6463 = vcmp.eq.f32.partialorder %v6462, 8.507059e+37
        %v6464 = vand.u32 %v6057, 2147483648
        %v6465 = vor.u32 1.1754944e-38, %v6464
        %v6466 = vsel %vm6463, %v6465, %v6461
        %v6467 = vmul.f32 1.0, %v6466
        %v6468 = vrcp.pop %v6058
        %v6469 = vmul.f32 %v6058, %v6468
        %v6470 = vsub.f32 1.0, %v6469
        %v6471 = vmul.f32 %v6468, %v6470
        %v6472 = vadd.f32 %v6468, %v6471
        %vm6473 = vweird.f32 %v6058
        %vm6474 = vweird.f32 %v6468
        %vm6475 = vmor %vm6473, %vm6474
        %v6476 = vsel %vm6475, %v6468, %v6472
        %v6477 = vand.u32 2147483647, %v6058
        %vm6478 = vcmp.eq.f32.partialorder %v6477, 8.507059e+37
        %v6479 = vand.u32 %v6058, 2147483648
        %v6480 = vor.u32 1.1754944e-38, %v6479
        %v6481 = vsel %vm6478, %v6480, %v6476
        %v6482 = vmul.f32 1.0, %v6481
        %v6483 = vrcp.pop %v6059
        %v6484 = vmul.f32 %v6059, %v6483
        %v6485 = vsub.f32 1.0, %v6484
        %v6486 = vmul.f32 %v6483, %v6485
        %v6487 = vadd.f32 %v6483, %v6486
        %vm6488 = vweird.f32 %v6059
        %vm6489 = vweird.f32 %v6483
        %vm6490 = vmor %vm6488, %vm6489
        %v6491 = vsel %vm6490, %v6483, %v6487
        %v6492 = vand.u32 2147483647, %v6059
        %vm6493 = vcmp.eq.f32.partialorder %v6492, 8.507059e+37
        %v6494 = vand.u32 %v6059, 2147483648
        %v6495 = vor.u32 1.1754944e-38, %v6494
        %v6496 = vsel %vm6493, %v6495, %v6491
        %v6497 = vmul.f32 1.0, %v6496
        %v6498 = vrcp.pop %v6060
        %v6499 = vmul.f32 %v6060, %v6498
        %v6500 = vsub.f32 1.0, %v6499
        %v6501 = vmul.f32 %v6498, %v6500
        %v6502 = vadd.f32 %v6498, %v6501
        %vm6503 = vweird.f32 %v6060
        %vm6504 = vweird.f32 %v6498
        %vm6505 = vmor %vm6503, %vm6504
        %v6506 = vsel %vm6505, %v6498, %v6502
        %v6507 = vand.u32 2147483647, %v6060
        %vm6508 = vcmp.eq.f32.partialorder %v6507, 8.507059e+37
        %v6509 = vand.u32 %v6060, 2147483648
        %v6510 = vor.u32 1.1754944e-38, %v6509
        %v6511 = vsel %vm6508, %v6510, %v6506
        %v6512 = vmul.f32 1.0, %v6511
        %v6513 = vrcp.pop %v6061
        %v6514 = vmul.f32 %v6061, %v6513
        %v6515 = vsub.f32 1.0, %v6514
        %v6516 = vmul.f32 %v6513, %v6515
        %v6517 = vadd.f32 %v6513, %v6516
        %vm6518 = vweird.f32 %v6061
        %vm6519 = vweird.f32 %v6513
        %vm6520 = vmor %vm6518, %vm6519
        %v6521 = vsel %vm6520, %v6513, %v6517
        %v6522 = vand.u32 2147483647, %v6061
        %vm6523 = vcmp.eq.f32.partialorder %v6522, 8.507059e+37
        %v6524 = vand.u32 %v6061, 2147483648
        %v6525 = vor.u32 1.1754944e-38, %v6524
        %v6526 = vsel %vm6523, %v6525, %v6521
        %v6527 = vmul.f32 1.0, %v6526
        %v6528 = vrcp.pop %v6062
        %v6529 = vmul.f32 %v6062, %v6528
        %v6530 = vsub.f32 1.0, %v6529
        %v6531 = vmul.f32 %v6528, %v6530
        %v6532 = vadd.f32 %v6528, %v6531
        %vm6533 = vweird.f32 %v6062
        %vm6534 = vweird.f32 %v6528
        %vm6535 = vmor %vm6533, %vm6534
        %v6536 = vsel %vm6535, %v6528, %v6532
        %v6537 = vand.u32 2147483647, %v6062
        %vm6538 = vcmp.eq.f32.partialorder %v6537, 8.507059e+37
        %v6539 = vand.u32 %v6062, 2147483648
        %v6540 = vor.u32 1.1754944e-38, %v6539
        %v6541 = vsel %vm6538, %v6540, %v6536
        %v6542 = vmul.f32 1.0, %v6541
        %v6543 = vmul.f32 %v5903, %v6077
        %v6544 = vmul.f32 %v5904, %v6092
        %v6545 = vmul.f32 %v5905, %v6107
        %v6546 = vmul.f32 %v5906, %v6122
        %v6547 = vmul.f32 %v5907, %v6137
        %v6548 = vmul.f32 %v5908, %v6152
        %v6549 = vmul.f32 %v5909, %v6167
        %v6550 = vmul.f32 %v5910, %v6182
        %v6551 = vmul.f32 %v5911, %v6197
        %v6552 = vmul.f32 %v5912, %v6212
        %v6553 = vmul.f32 %v5913, %v6227
        %v6554 = vmul.f32 %v5914, %v6242
        %v6555 = vmul.f32 %v5915, %v6257
        %v6556 = vmul.f32 %v5916, %v6272
        %v6557 = vmul.f32 %v5917, %v6287
        %v6558 = vmul.f32 %v5918, %v6302
        %v6559 = vmul.f32 %v5919, %v6317
        %v6560 = vmul.f32 %v5920, %v6332
        %v6561 = vmul.f32 %v5921, %v6347
        %v6562 = vmul.f32 %v5922, %v6362
        %v6563 = vmul.f32 %v5923, %v6377
        %v6564 = vmul.f32 %v5924, %v6392
        %v6565 = vmul.f32 %v5925, %v6407
        %v6566 = vmul.f32 %v5926, %v6422
        %v6567 = vmul.f32 %v5927, %v6437
        %v6568 = vmul.f32 %v5928, %v6452
        %v6569 = vmul.f32 %v5929, %v6467
        %v6570 = vmul.f32 %v5930, %v6482
        %v6571 = vmul.f32 %v5931, %v6497
        %v6572 = vmul.f32 %v5932, %v6512
        %v6573 = vmul.f32 %v5933, %v6527
        %v6574 = vmul.f32 %v5934, %v6542
        %v6575 = vpack.c.bf16 %v6543, %v6543
        %v6576 = vpack.c.bf16 %v6544, %v6544
        %v6577 = vpack.c.bf16 %v6545, %v6545
        %v6578 = vpack.c.bf16 %v6546, %v6546
        %v6579 = vpack.c.bf16 %v6547, %v6547
        %v6580 = vpack.c.bf16 %v6548, %v6548
        %v6581 = vpack.c.bf16 %v6549, %v6549
        %v6582 = vpack.c.bf16 %v6550, %v6550
        %v6583 = vpack.c.bf16 %v6551, %v6551
        %v6584 = vpack.c.bf16 %v6552, %v6552
        %v6585 = vpack.c.bf16 %v6553, %v6553
        %v6586 = vpack.c.bf16 %v6554, %v6554
        %v6587 = vpack.c.bf16 %v6555, %v6555
        %v6588 = vpack.c.bf16 %v6556, %v6556
        %v6589 = vpack.c.bf16 %v6557, %v6557
        %v6590 = vpack.c.bf16 %v6558, %v6558
        %v6591 = vpack.c.bf16 %v6559, %v6559
        %v6592 = vpack.c.bf16 %v6560, %v6560
        %v6593 = vpack.c.bf16 %v6561, %v6561
        %v6594 = vpack.c.bf16 %v6562, %v6562
        %v6595 = vpack.c.bf16 %v6563, %v6563
        %v6596 = vpack.c.bf16 %v6564, %v6564
        %v6597 = vpack.c.bf16 %v6565, %v6565
        %v6598 = vpack.c.bf16 %v6566, %v6566
        %v6599 = vpack.c.bf16 %v6567, %v6567
        %v6600 = vpack.c.bf16 %v6568, %v6568
        %v6601 = vpack.c.bf16 %v6569, %v6569
        %v6602 = vpack.c.bf16 %v6570, %v6570
        %v6603 = vpack.c.bf16 %v6571, %v6571
        %v6604 = vpack.c.bf16 %v6572, %v6572
        %v6605 = vpack.c.bf16 %v6573, %v6573
        %v6606 = vpack.c.bf16 %v6574, %v6574
        %vm6607 = vcmask 257024
        %6608 = vst.msk [vmem:[%s193] sm:$0xf] %vm6607, %v6575
        %6609 = vst.msk [vmem:[%s193 + $0x4] sm:$0xf] %vm6607, %v6576
        %6610 = vst.msk [vmem:[%s193 + $0x8] sm:$0xf] %vm6607, %v6577
        %6611 = vst.msk [vmem:[%s193 + $0xc] sm:$0xf] %vm6607, %v6578
        %6612 = vst.msk [vmem:[%s193 + $0x10] sm:$0xf] %vm6607, %v6579
        %6613 = vst.msk [vmem:[%s193 + $0x14] sm:$0xf] %vm6607, %v6580
        %6614 = vst.msk [vmem:[%s193 + $0x18] sm:$0xf] %vm6607, %v6581
        %6615 = vst.msk [vmem:[%s193 + $0x1c] sm:$0xf] %vm6607, %v6582
        %6616 = vst.msk [vmem:[%s193 + $0x20] sm:$0xf] %vm6607, %v6583
        %6617 = vst.msk [vmem:[%s193 + $0x24] sm:$0xf] %vm6607, %v6584
        %6618 = vst.msk [vmem:[%s193 + $0x28] sm:$0xf] %vm6607, %v6585
        %6619 = vst.msk [vmem:[%s193 + $0x2c] sm:$0xf] %vm6607, %v6586
        %6620 = vst.msk [vmem:[%s193 + $0x30] sm:$0xf] %vm6607, %v6587
        %6621 = vst.msk [vmem:[%s193 + $0x34] sm:$0xf] %vm6607, %v6588
        %6622 = vst.msk [vmem:[%s193 + $0x38] sm:$0xf] %vm6607, %v6589
        %6623 = vst.msk [vmem:[%s193 + $0x3c] sm:$0xf] %vm6607, %v6590
        %6624 = vst.msk [vmem:[%s193 + $0x40] sm:$0xf] %vm6607, %v6591
        %6625 = vst.msk [vmem:[%s193 + $0x44] sm:$0xf] %vm6607, %v6592
        %6626 = vst.msk [vmem:[%s193 + $0x48] sm:$0xf] %vm6607, %v6593
        %6627 = vst.msk [vmem:[%s193 + $0x4c] sm:$0xf] %vm6607, %v6594
        %6628 = vst.msk [vmem:[%s193 + $0x50] sm:$0xf] %vm6607, %v6595
        %6629 = vst.msk [vmem:[%s193 + $0x54] sm:$0xf] %vm6607, %v6596
        %6630 = vst.msk [vmem:[%s193 + $0x58] sm:$0xf] %vm6607, %v6597
        %6631 = vst.msk [vmem:[%s193 + $0x5c] sm:$0xf] %vm6607, %v6598
        %6632 = vst.msk [vmem:[%s193 + $0x60] sm:$0xf] %vm6607, %v6599
        %6633 = vst.msk [vmem:[%s193 + $0x64] sm:$0xf] %vm6607, %v6600
        %6634 = vst.msk [vmem:[%s193 + $0x68] sm:$0xf] %vm6607, %v6601
        %6635 = vst.msk [vmem:[%s193 + $0x6c] sm:$0xf] %vm6607, %v6602
        %6636 = vst.msk [vmem:[%s193 + $0x70] sm:$0xf] %vm6607, %v6603
        %6637 = vst.msk [vmem:[%s193 + $0x74] sm:$0xf] %vm6607, %v6604
        %6638 = vst.msk [vmem:[%s193 + $0x78] sm:$0xf] %vm6607, %v6605
        %6639 = vst.msk [vmem:[%s193 + $0x7c] sm:$0xf] %vm6607, %v6606
        %s6640 = sand.u32 %s115, 1
        %s6641 = scalar_lea.sflag [#allocation3], %s6640
        %s6642 = sand.u32 %s115, 1
        %s6643 = smul.addr %s6642, 128
        %s6644 = scalar_lea.vmem [#allocation2], %s6643
        // Predicated region
        $region37: #{tpu_custom_call.1} parent=35 // pred_check
          %p6645 = pneg %p125
        $region38: #{tpu_custom_call.1} parent=35 // pred_check_branch
          %6647 = sbr.rel (%p6645) target = $region40
        $region39: #{tpu_custom_call.1} parent=35 // pred_region
          %6649 = vsyncadd %s6641, 0
          %s6650 = smul.addr %s18, 32
          %s6651 = smul.addr %s6650, 4
          %s6652 = scalar_lea.hbm %s4, %s6651
          %s6653 = sshll.u32 %s6644, 4
          %s6654 = int_to_ptr.vmem [resolvable:$true] %s6653
          %s6655 = sshll.u32 %s6652, 4
          %s6656 = int_to_ptr.hbm [resolvable:$true] %s6655
          %6661 = dma.vmem_to_hbm [thread:$0]  %s6654, 2048, %s6656, %s6641, 64, 64, 4
        $region40: #{tpu_custom_call.1} parent=35 // pred_fallthru
          _
      $region36: #{tpu_custom_call.1} parent=5 // pred_fallthru
        _
      %p6662 = scmp.le.s32.totalorder 2, %s13
      // Predicated region
      $region41: #{tpu_custom_call.1} parent=5 // pred_check
        %p6663 = pneg %p6662
      $region42: #{tpu_custom_call.1} parent=5 // pred_check_branch
        %6665 = sbr.rel (%p6663) target = $region44
      $region43: #{tpu_custom_call.1} parent=5 // pred_region
        %s6666 = ssub.s32 %s13, 2
        // Predicated region
        $region45: #{tpu_custom_call.1} parent=43 // pred_check
          %p6667 = pneg %p131
        $region46: #{tpu_custom_call.1} parent=43 // pred_check_branch
          %6669 = sbr.rel (%p6667) target = $region48
        $region47: #{tpu_custom_call.1} parent=43 // pred_region
          %s6670 = sand.u32 %s116, 1
          %s6671 = scalar_lea.sflag [#allocation3], %s6670
          %s6672 = sand.u32 %s116, 1
          %s6673 = smul.addr %s6672, 128
          %s6674 = scalar_lea.vmem [#allocation2], %s6673
          %6676 = dma.done %s6671, 2048
        $region48: #{tpu_custom_call.1} parent=43 // pred_fallthru
          _
      $region44: #{tpu_custom_call.1} parent=5 // pred_fallthru
        _
    $region6: #{tpu_custom_call.1} parent=1 // loop_footer
      %s17 = sadd.s32 1, %s13
    $region7: #{tpu_custom_call.1} parent=1 // loop_footer_branch
      %12 = sbr.rel target = $region3
    $region8: #{tpu_custom_call.1} parent=1 // loop_exit
      _
    %6677 = vsyncpa [#allocation3], 1
    %s6678 = scalar_lea.sflag [#allocation3], 1
    %6679 = vsyncpa %s6678, 1

</llo_original>
